<compile_context>
chip_gen: v7x
topology: tpu7x:2x2x1
jax: 0.10.0
libtpu: 0.0.40
codegen_flags: <defaults>
</compile_context>

<pallas_src>
import functools
import math

import jax
import jax.numpy as jnp
from jax import lax
from jax.experimental import pallas as pl
from jax.experimental.pallas import tpu as pltpu

MXU_DTYPE = jnp.bfloat16     # MXU operand / inter-layer activation dtype
_FC_PAD = 128                # lane-dense padded width of the final fc output


# ---------------------------------------------------------------------------
# Small helpers
# ---------------------------------------------------------------------------

def _round_up(x, m):
    return ((x + m - 1) // m) * m


def _full_spec(shape):
    """Whole-array-resident BlockSpec (same block for every grid step)."""
    nd = len(shape)
    return pl.BlockSpec(shape, lambda *_: (0,) * nd)


def _vmem_capacity_bytes():
    """Trace-time VMEM capacity query with a conservative (v7x) fallback."""
    try:
        info = pltpu.get_tpu_info()
        cap = int(getattr(info, "vmem_capacity_bytes", 0))
        if cap > 0:
            return cap
    except Exception:
        pass
    return 64 << 20


def _pick_t_block(T, batch_pad, hidden, din_pad, budget):
    """Largest time block whose per-grid-step VMEM footprint fits `budget`.

    T is padded up to a multiple of the chosen block, so any T works (no
    whole-sequence fallback that could blow VMEM for long / prime T).
    """
    # dominant per-timestep VMEM bytes inside one grid step: double-buffered
    # activation blocks, f32 gate scratch, bf16 outputs, fc scratch + output.
    per_t = batch_pad * (16 * din_pad + 80 * hidden + 1024)
    t_max = max(int(budget // per_t), 1)
    t_block = min(T, t_max)
    if t_block < T:
        # blocked path: keep bf16 output blocks sublane-tileable (rows % 16)
        if (t_block * batch_pad) % 16:
            t_block = max(2, t_block - (t_block % 2))
    nblk = -(-T // t_block)
    return t_block, nblk, nblk * t_block


def _compiler_params(semantics, vmem_limit):
    return pltpu.CompilerParams(dimension_semantics=semantics,
                                vmem_limit_bytes=int(vmem_limit))


# ---------------------------------------------------------------------------
# Fused per-layer kernel: input->gate projection + bidirectional recurrence
# (+ optional fc epilogue for the last layer when nblk == 1)
# ---------------------------------------------------------------------------

def _fused_layer_kernel(*refs, batch, hidden, t_block, nblk, t_real,
                        two_part, shared, last_fc, mask_bwd, unroll):
    H = hidden

    # ---- unpack refs (inputs..., outputs..., scratch...) -------------------
    n_act = (2 if two_part else 1) * (1 if shared else 2)
    n_wih = 4 if two_part else 2
    idx = 0
    acts = refs[idx:idx + n_act]; idx += n_act
    wih = refs[idx:idx + n_wih]; idx += n_wih
    b_f_ref, b_b_ref = refs[idx:idx + 2]; idx += 2
    whh_f_ref, whh_b_ref = refs[idx:idx + 2]; idx += 2
    if last_fc:
        wfc_f_ref, wfc_b_ref, bfc_ref = refs[idx:idx + 3]; idx += 3
        out_fc_ref = refs[idx]; idx += 1
    else:
        out_f_ref, out_b_ref = refs[idx:idx + 2]; idx += 2
    gf_scr, gb_scr = refs[idx:idx + 2]; idx += 2
    hst_f, cst_f, hst_b, cst_b = refs[idx:idx + 4]; idx += 4
    if last_fc:
        hf_scr, hb_scr = refs[idx:idx + 2]; idx += 2

    # ---- zero recurrent state at the first time block ----------------------
    @pl.when(pl.program_id(0) == 0)
    def _():
        hst_f[...] = jnp.zeros_like(hst_f)
        cst_f[...] = jnp.zeros_like(cst_f)
        hst_b[...] = jnp.zeros_like(hst_b)
        cst_b[...] = jnp.zeros_like(cst_b)

    # ---- dense input->gate projections for both chains (MXU GEMMs) ---------
    dt = whh_f_ref.dtype
    if two_part:
        if shared:
            hfa = acts[0][...].astype(dt)
            hba = acts[1][...].astype(dt)
            hf_f = hf_b = hfa
            hb_f = hb_b = hba
        else:
            hf_f = acts[0][...].astype(dt)
            hb_f = acts[1][...].astype(dt)
            hf_b = acts[2][...].astype(dt)
            hb_b = acts[3][...].astype(dt)
        w_ft, w_fb, w_bt, w_bb = [w[...] for w in wih]
        gf = (jnp.dot(hf_f, w_ft, preferred_element_type=jnp.float32)
              + jnp.dot(hb_f, w_fb, preferred_element_type=jnp.float32)
              + b_f_ref[...])
        gb = (jnp.dot(hf_b, w_bt, preferred_element_type=jnp.float32)
              + jnp.dot(hb_b, w_bb, preferred_element_type=jnp.float32)
              + b_b_ref[...])
    else:
        if shared:
            xf = xb = acts[0][...].astype(dt)
        else:
            xf = acts[0][...].astype(dt)
            xb = acts[1][...].astype(dt)
        gf = jnp.dot(xf, wih[0][...], preferred_element_type=jnp.float32) + b_f_ref[...]
        gb = jnp.dot(xb, wih[1][...], preferred_element_type=jnp.float32) + b_b_ref[...]
    gf_scr[...] = gf          # gate pre-activations stay in VMEM (never to HBM)
    gb_scr[...] = gb

    # ---- fused fwd+bwd recurrence with loop-carried (vreg) state -----------
    whh_f = whh_f_ref[...]    # hoisted constant weight reads
    whh_b = whh_b_ref[...]
    blk_b = nblk - 1 - pl.program_id(0)   # bwd chain's block index (time order)

    def cell(pre, c_prev):
        # one full-width sigmoid pass; tanh only on the g slot
        sg = jax.nn.sigmoid(pre)
        i = sg[:, 0 * H:1 * H]
        f = sg[:, 1 * H:2 * H]
        o = sg[:, 3 * H:4 * H]
        g = jnp.tanh(pre[:, 2 * H:3 * H])
        c_new = f * c_prev + i * g
        h_new = o * jnp.tanh(c_new)
        return h_new, c_new

    def step(t, carry):
        h_f, c_f, h_b, c_b = carry
        tb = t_block - 1 - t
        rf = pl.multiple_of(t * batch, batch)
        rb = pl.multiple_of(tb * batch, batch)
        # the two chains are independent -> their latencies overlap
        pre_f = gf_scr[pl.ds(rf, batch), :] + jnp.dot(
            h_f.astype(whh_f.dtype), whh_f, preferred_element_type=jnp.float32)
        pre_b = gb_scr[pl.ds(rb, batch), :] + jnp.dot(
            h_b.astype(whh_b.dtype), whh_b, preferred_element_type=jnp.float32)
        hf_new, cf_new = cell(pre_f, c_f)
        hb_new, cb_new = cell(pre_b, c_b)
        if mask_bwd:
            # padded (t >= t_real) steps must not update the backward chain
            valid = (blk_b * t_block + tb) < t_real
            hb_new = jnp.where(valid, hb_new, h_b)
            cb_new = jnp.where(valid, cb_new, c_b)
        if last_fc:
            hf_scr[pl.ds(rf, batch), :] = hf_new
            hb_scr[pl.ds(rb, batch), :] = hb_new
        else:
            out_f_ref[pl.ds(rf, batch), :] = hf_new.astype(out_f_ref.dtype)
            out_b_ref[pl.ds(rb, batch), :] = hb_new.astype(out_b_ref.dtype)
        return hf_new, cf_new, hb_new, cb_new

    carry0 = (hst_f[...], cst_f[...], hst_b[...], cst_b[...])
    h_f, c_f, h_b, c_b = lax.fori_loop(0, t_block, step, carry0, unroll=unroll)
    hst_f[...] = h_f
    cst_f[...] = c_f
    hst_b[...] = h_b
    cst_b[...] = c_b

    # ---- fused fc epilogue (last layer, whole sequence resident) -----------
    if last_fc:
        hf_all = hf_scr[...].astype(wfc_f_ref.dtype)
        hb_all = hb_scr[...].astype(wfc_f_ref.dtype)
        out_fc_ref[...] = (
            jnp.dot(hf_all, wfc_f_ref[...], preferred_element_type=jnp.float32)
            + jnp.dot(hb_all, wfc_b_ref[...], preferred_element_type=jnp.float32)
            + bfc_ref[...])


def _run_layer(acts, w_ih, b_f, b_b, whh_f, whh_b, fc_w, *,
               batch, hidden, t_block, nblk, t_real, two_part, last_fc,
               vmem_limit):
    H = hidden
    G = 4 * H
    rows = t_block * batch
    total_rows = nblk * rows
    shared = (nblk == 1)
    mask_bwd = (nblk * t_block != t_real)

    fwd_map = lambda i: (i, 0)
    bwd_map = lambda i: (nblk - 1 - i, 0)

    operands, in_specs = [], []
    for a in acts:                                     # fwd-chain blocks
        operands.append(a)
        in_specs.append(pl.BlockSpec((rows, a.shape[1]), fwd_map))
    if not shared:                                     # bwd-chain blocks
        for a in acts:
            operands.append(a)
            in_specs.append(pl.BlockSpec((rows, a.shape[1]), bwd_map))
    for w in list(w_ih) + [b_f, b_b, whh_f, whh_b]:
        operands.append(w)
        in_specs.append(_full_spec(w.shape))
    if last_fc:
        for w in fc_w:
            operands.append(w)
            in_specs.append(_full_spec(w.shape))

    if last_fc:
        out_shape = jax.ShapeDtypeStruct((total_rows, _FC_PAD), jnp.float32)
        out_specs = pl.BlockSpec((rows, _FC_PAD), fwd_map)
    else:
        out_shape = (jax.ShapeDtypeStruct((total_rows, H), MXU_DTYPE),
                     jax.ShapeDtypeStruct((total_rows, H), MXU_DTYPE))
        out_specs = (pl.BlockSpec((rows, H), fwd_map),
                     pl.BlockSpec((rows, H), bwd_map))

    scratch = [pltpu.VMEM((rows, G), jnp.float32),     # gf (gate pre-acts)
               pltpu.VMEM((rows, G), jnp.float32),     # gb
               pltpu.VMEM((batch, H), jnp.float32),    # h_fwd
               pltpu.VMEM((batch, H), jnp.float32),    # c_fwd
               pltpu.VMEM((batch, H), jnp.float32),    # h_bwd
               pltpu.VMEM((batch, H), jnp.float32)]    # c_bwd
    if last_fc:
        scratch += [pltpu.VMEM((rows, H), jnp.float32),
                    pltpu.VMEM((rows, H), jnp.float32)]

    unroll = t_block if t_block <= 16 else 8
    kernel = functools.partial(
        _fused_layer_kernel, batch=batch, hidden=H, t_block=t_block,
        nblk=nblk, t_real=t_real, two_part=two_part, shared=shared,
        last_fc=last_fc, mask_bwd=mask_bwd, unroll=unroll)

    return pl.pallas_call(
        kernel,
        out_shape=out_shape,
        grid_spec=pltpu.PrefetchScalarGridSpec(
            num_scalar_prefetch=0,
            grid=(nblk,),
            in_specs=in_specs,
            out_specs=out_specs,
            scratch_shapes=scratch),
        compiler_params=_compiler_params(("arbitrary",), vmem_limit),
    )(*operands)


# ---------------------------------------------------------------------------
# Fallback fc kernel (only used when the sequence does not fit one time block)
# ---------------------------------------------------------------------------

def _fc_kernel(hf_ref, hb_ref, wf_ref, wb_ref, b_ref, o_ref):
    hf = hf_ref[...].astype(wf_ref.dtype)
    hb = hb_ref[...].astype(wf_ref.dtype)
    o_ref[...] = (jnp.dot(hf, wf_ref[...], preferred_element_type=jnp.float32)
                  + jnp.dot(hb, wb_ref[...], preferred_element_type=jnp.float32)
                  + b_ref[...])


def _bidir_fc(hf, hb, w_f, w_b, b, *, rows_block, vmem_limit):
    total, H = hf.shape
    nblk = total // rows_block
    return pl.pallas_call(
        _fc_kernel,
        out_shape=jax.ShapeDtypeStruct((total, _FC_PAD), jnp.float32),
        grid_spec=pltpu.PrefetchScalarGridSpec(
            num_scalar_prefetch=0,
            grid=(nblk,),
            in_specs=[pl.BlockSpec((rows_block, H), lambda i: (i, 0)),
                      pl.BlockSpec((rows_block, H), lambda i: (i, 0)),
                      _full_spec(w_f.shape), _full_spec(w_b.shape),
                      _full_spec(b.shape)],
            out_specs=pl.BlockSpec((rows_block, _FC_PAD), lambda i: (i, 0))),
        compiler_params=_compiler_params(("parallel",), vmem_limit),
    )(hf, hb, w_f, w_b, b)


# ---------------------------------------------------------------------------
# Parameter construction (PyTorch-default uniform init, pre-transposed/split)
# ---------------------------------------------------------------------------

def init_params(key, total_vf_dim, d_model, n_layers):
    bound = 1.0 / math.sqrt(d_model)
    din_pad = _round_up(max(total_vf_dim, 1), 128)

    def u(k, shape):
        return jax.random.uniform(k, shape, jnp.float32, -bound, bound)

    layers = []
    for layer in range(n_layers):
        in_dim = total_vf_dim if layer == 0 else 2 * d_model
        dirs = {}
        for dname in ("fwd", "bwd"):
            key, k1, k2, k3, k4 = jax.random.split(key, 5)
            w_ih = u(k1, (4 * d_model, in_dim))          # PyTorch layout
            w_hh = u(k2, (4 * d_model, d_model))
            b_ih = u(k3, (4 * d_model,))
            b_hh = u(k4, (4 * d_model,))
            w_ih_t = w_ih.T                              # (in_dim, 4H)
            d = {"whh": w_hh.T.astype(MXU_DTYPE),        # (H, 4H)
                 "b": (b_ih + b_hh)[None, :]}            # (1, 4H) f32
            if layer == 0:
                w_pad = jnp.zeros((din_pad, 4 * d_model), jnp.float32)
                w_pad = w_pad.at[:in_dim].set(w_ih_t)
                d["w_ih"] = w_pad.astype(MXU_DTYPE)      # (Din_pad, 4H)
            else:                                        # split at H boundary
                d["w_top"] = w_ih_t[:d_model].astype(MXU_DTYPE)   # * h_fwd_prev
                d["w_bot"] = w_ih_t[d_model:].astype(MXU_DTYPE)   # * h_bwd_prev
            dirs[dname] = d
        layers.append(dirs)

    # bifc: Linear(2*d_model, 2), padded to 128 output lanes (sliced later)
    fc_in = 2 * d_model
    fb = 1.0 / math.sqrt(fc_in)
    key, kw, kb = jax.random.split(key, 3)
    fc_w = jax.random.uniform(kw, (2, fc_in), jnp.float32, -fb, fb)
    fc_b = jax.random.uniform(kb, (2,), jnp.float32, -fb, fb)
    w_t = fc_w.T                                         # (2H, 2)
    wf = jnp.zeros((d_model, _FC_PAD), jnp.float32).at[:, :2].set(w_t[:d_model])
    wb = jnp.zeros((d_model, _FC_PAD), jnp.float32).at[:, :2].set(w_t[d_model:])
    bp = jnp.zeros((1, _FC_PAD), jnp.float32).at[0, :2].set(fc_b)
    fc = {"w_f": wf.astype(MXU_DTYPE), "w_b": wb.astype(MXU_DTYPE), "b": bp}

    return {"lstm": layers, "fc": fc}


# ---------------------------------------------------------------------------
# Full forward pass (regModel='bilstm', eval mode)
# ---------------------------------------------------------------------------

def video_regression_forward(params, feature_semantic_list, feature_scene_offset,
                             feature_motion, feature_emotion):
    feats = [f.astype(jnp.float32) for f in feature_semantic_list]
    feats.append(feature_scene_offset[..., None].astype(jnp.float32))
    feats.append(feature_motion[..., None].astype(jnp.float32))
    feats.append(feature_emotion.astype(jnp.float32))
    vf = jnp.concatenate(feats, axis=-1)                 # (B, T, Din)

    x = jnp.transpose(vf, (1, 0, 2))                     # (T, B, Din) time-major
    # F.dropout(..., training=False) is the identity in eval mode.

    T, B, Din = x.shape
    H = params["lstm"][0]["fwd"]["whh"].shape[0]
    din_pad = params["lstm"][0]["fwd"]["w_ih"].shape[0]
    B_pad = _round_up(B, 8)

    cap = _vmem_capacity_bytes()
    vmem_limit = int(min(max(cap // 2 - (8 << 20), 16 << 20), 48 << 20))
    t_block, nblk, T_pad = _pick_t_block(T, B_pad, H, din_pad,
                                         budget=vmem_limit // 3)

    # Zero-pad: batch to a sublane multiple, features to a lane multiple, time
    # to a multiple of the time block.  Padded batch rows / time steps are
    # independent of the real ones (backward-chain padding is masked in-kernel).
    xp = jnp.pad(x, ((0, T_pad - T), (0, B_pad - B), (0, din_pad - Din)))
    x2d = xp.reshape(T_pad * B_pad, din_pad)

    n_layers = len(params["lstm"])
    hf = hb = None
    out_pad = None
    for li, layer in enumerate(params["lstm"]):
        last_fc = (li == n_layers - 1) and (nblk == 1)
        if li == 0:
            acts = [x2d]
            wih = [layer["fwd"]["w_ih"], layer["bwd"]["w_ih"]]
        else:
            acts = [hf, hb]
            wih = [layer["fwd"]["w_top"], layer["fwd"]["w_bot"],
                   layer["bwd"]["w_top"], layer["bwd"]["w_bot"]]
        fc_w = ((params["fc"]["w_f"], params["fc"]["w_b"], params["fc"]["b"])
                if last_fc else None)
        outs = _run_layer(acts, wih, layer["fwd"]["b"], layer["bwd"]["b"],
                          layer["fwd"]["whh"], layer["bwd"]["whh"], fc_w,
                          batch=B_pad, hidden=H, t_block=t_block, nblk=nblk,
                          t_real=T, two_part=(li > 0), last_fc=last_fc,
                          vmem_limit=vmem_limit)
        if last_fc:
            out_pad = outs
        else:
            hf, hb = outs

    if out_pad is None:
        # Blocked (nblk > 1) path: the last layer emitted bf16 hidden states;
        # run the (tiny) fc kernel separately.
        out_pad = _bidir_fc(hf, hb, params["fc"]["w_f"], params["fc"]["w_b"],
                            params["fc"]["b"], rows_block=t_block * B_pad,
                            vmem_limit=vmem_limit)

    out = out_pad.reshape(T_pad, B_pad, _FC_PAD)[:T, :B, :2]
    return jnp.transpose(out, (1, 0, 2))                 # (B, T, 2)


# ---------------------------------------------------------------------------
# Demo
# ---------------------------------------------------------------------------

if __name__ == "__main__":
    batch, seq = 2, 8
    d_model, n_layers = 64, 2
    semantic_dims = (10, 12)
    emotion_dim = 6
    total_vf_dim = sum(semantic_dims) + 1 + 1 + emotion_dim   # 30

    key = jax.random.PRNGKey(0)
    key, *fkeys = jax.random.split(key, 6)
    feature_semantic_list = [
        jax.random.normal(fkeys[0], (batch, seq, semantic_dims[0]), jnp.float32),
        jax.random.normal(fkeys[1], (batch, seq, semantic_dims[1]), jnp.float32),
    ]
    feature_scene_offset = jax.random.uniform(fkeys[2], (batch, seq), jnp.float32)
    feature_motion = jax.random.uniform(fkeys[3], (batch, seq), jnp.float32)
    feature_emotion = jax.random.normal(fkeys[4], (batch, seq, emotion_dim),
                                        jnp.float32)

    params = init_params(key, total_vf_dim, d_model, n_layers)

    fwd = jax.jit(video_regression_forward)
    out = fwd(params, feature_semantic_list, feature_scene_offset,
              feature_motion, feature_emotion)
    out = jax.block_until_ready(out)

    assert out.shape == (batch, seq, 2), out.shape
    assert out.dtype == jnp.float32
    print("KERNEL_OK")
</pallas_src>

<mosaic_0001>
module attributes {stable_mosaic.version = 11 : i64} {
  func.func @_fused_layer_kernel(%arg0: i32, %arg1: memref<64x128xf32, #tpu.memory_space<vmem>>, %arg2: memref<128x256xbf16, #tpu.memory_space<vmem>>, %arg3: memref<128x256xbf16, #tpu.memory_space<vmem>>, %arg4: memref<1x256xf32, #tpu.memory_space<vmem>>, %arg5: memref<1x256xf32, #tpu.memory_space<vmem>>, %arg6: memref<64x256xbf16, #tpu.memory_space<vmem>>, %arg7: memref<64x256xbf16, #tpu.memory_space<vmem>>, %arg8: memref<64x64xbf16, #tpu.memory_space<vmem>>, %arg9: memref<64x64xbf16, #tpu.memory_space<vmem>>, %arg10: memref<64x256xf32, #tpu.memory_space<vmem>>, %arg11: memref<64x256xf32, #tpu.memory_space<vmem>>, %arg12: memref<8x64xf32, #tpu.memory_space<vmem>>, %arg13: memref<8x64xf32, #tpu.memory_space<vmem>>, %arg14: memref<8x64xf32, #tpu.memory_space<vmem>>, %arg15: memref<8x64xf32, #tpu.memory_space<vmem>>) attributes {dimension_semantics = [#tpu.dimension_semantics<arbitrary>], iteration_bounds = array<i64: 1>, scalar_prefetch = 0 : i64, scratch_operands = 6 : i64, tpu.core_type = #tpu.core_type<tc>, window_params = [{transform_indices = @transform_0, window_bounds = array<i64: 64, 128>}, {pipeline_mode = #tpu.pipeline_mode<synchronous>, transform_indices = @transform_1, window_bounds = array<i64: 128, 256>}, {pipeline_mode = #tpu.pipeline_mode<synchronous>, transform_indices = @transform_2, window_bounds = array<i64: 128, 256>}, {pipeline_mode = #tpu.pipeline_mode<synchronous>, transform_indices = @transform_3, window_bounds = array<i64: 1, 256>}, {pipeline_mode = #tpu.pipeline_mode<synchronous>, transform_indices = @transform_4, window_bounds = array<i64: 1, 256>}, {pipeline_mode = #tpu.pipeline_mode<synchronous>, transform_indices = @transform_5, window_bounds = array<i64: 64, 256>}, {pipeline_mode = #tpu.pipeline_mode<synchronous>, transform_indices = @transform_6, window_bounds = array<i64: 64, 256>}, {transform_indices = @transform_7, window_bounds = array<i64: 64, 64>}, {transform_indices = @transform_8, window_bounds = array<i64: 64, 64>}]} {
    %c0_i32 = arith.constant 0 : i32
    %0 = arith.cmpi eq, %arg0, %c0_i32 : i32
    %1 = arith.extui %0 : i1 to i32
    %c0_i32_0 = arith.constant 0 : i32
    %2 = arith.cmpi ne, %1, %c0_i32_0 : i32
    scf.if %2 {
      %cst_124 = arith.constant 0.000000e+00 : f32
      %435 = vector.broadcast %cst_124 : f32 to vector<8x64xf32>
      %c0_125 = arith.constant 0 : index
      %c0_126 = arith.constant 0 : index
      %436 = vector.load %arg12[%c0_125, %c0_126] : memref<8x64xf32, #tpu.memory_space<vmem>>, vector<8x64xf32>
      tpu.vector_store %arg12[%c0_125, %c0_126], %435 {strides = array<i32>} : memref<8x64xf32, #tpu.memory_space<vmem>>, vector<8x64xf32>,
      %cst_127 = arith.constant 0.000000e+00 : f32
      %437 = vector.broadcast %cst_127 : f32 to vector<8x64xf32>
      %c0_128 = arith.constant 0 : index
      %c0_129 = arith.constant 0 : index
      %438 = vector.load %arg13[%c0_128, %c0_129] : memref<8x64xf32, #tpu.memory_space<vmem>>, vector<8x64xf32>
      tpu.vector_store %arg13[%c0_128, %c0_129], %437 {strides = array<i32>} : memref<8x64xf32, #tpu.memory_space<vmem>>, vector<8x64xf32>,
      %cst_130 = arith.constant 0.000000e+00 : f32
      %439 = vector.broadcast %cst_130 : f32 to vector<8x64xf32>
      %c0_131 = arith.constant 0 : index
      %c0_132 = arith.constant 0 : index
      %440 = vector.load %arg14[%c0_131, %c0_132] : memref<8x64xf32, #tpu.memory_space<vmem>>, vector<8x64xf32>
      tpu.vector_store %arg14[%c0_131, %c0_132], %439 {strides = array<i32>} : memref<8x64xf32, #tpu.memory_space<vmem>>, vector<8x64xf32>,
      %cst_133 = arith.constant 0.000000e+00 : f32
      %441 = vector.broadcast %cst_133 : f32 to vector<8x64xf32>
      %c0_134 = arith.constant 0 : index
      %c0_135 = arith.constant 0 : index
      %442 = vector.load %arg15[%c0_134, %c0_135] : memref<8x64xf32, #tpu.memory_space<vmem>>, vector<8x64xf32>
      tpu.vector_store %arg15[%c0_134, %c0_135], %441 {strides = array<i32>} : memref<8x64xf32, #tpu.memory_space<vmem>>, vector<8x64xf32>,
    } else {
    }
    %c0 = arith.constant 0 : index
    %c0_1 = arith.constant 0 : index
    %3 = vector.load %arg1[%c0, %c0_1] : memref<64x128xf32, #tpu.memory_space<vmem>>, vector<64x128xf32>
    %4 = arith.truncf %3 : vector<64x128xf32> to vector<64x128xbf16>
    %c0_2 = arith.constant 0 : index
    %c0_3 = arith.constant 0 : index
    %5 = vector.load %arg2[%c0_2, %c0_3] : memref<128x256xbf16, #tpu.memory_space<vmem>>, vector<128x256xbf16>
    %cst = arith.constant dense<0.000000e+00> : vector<64x256xf32>
    %6 = tpu.matmul %4, %5, %cst {dimension_numbers = #tpu.dot_dimension_numbers<[1], [0], [0], [1], [0, 0, 1, 1], [], []>} : vector<64x128xbf16>, vector<128x256xbf16>, vector<64x256xf32> -> vector<64x256xf32>
    %c0_4 = arith.constant 0 : index
    %c0_5 = arith.constant 0 : index
    %7 = vector.load %arg4[%c0_4, %c0_5] : memref<1x256xf32, #tpu.memory_space<vmem>>, vector<1x256xf32>
    %8 = vector.broadcast %7 : vector<1x256xf32> to vector<64x256xf32>
    %9 = arith.addf %6, %8 : vector<64x256xf32>
    %c0_6 = arith.constant 0 : index
    %c0_7 = arith.constant 0 : index
    %10 = vector.load %arg3[%c0_6, %c0_7] : memref<128x256xbf16, #tpu.memory_space<vmem>>, vector<128x256xbf16>
    %cst_8 = arith.constant dense<0.000000e+00> : vector<64x256xf32>
    %11 = tpu.matmul %4, %10, %cst_8 {dimension_numbers = #tpu.dot_dimension_numbers<[1], [0], [0], [1], [0, 0, 1, 1], [], []>} : vector<64x128xbf16>, vector<128x256xbf16>, vector<64x256xf32> -> vector<64x256xf32>
    %c0_9 = arith.constant 0 : index
    %c0_10 = arith.constant 0 : index
    %12 = vector.load %arg5[%c0_9, %c0_10] : memref<1x256xf32, #tpu.memory_space<vmem>>, vector<1x256xf32>
    %13 = vector.broadcast %12 : vector<1x256xf32> to vector<64x256xf32>
    %14 = arith.addf %11, %13 : vector<64x256xf32>
    %c0_11 = arith.constant 0 : index
    %c0_12 = arith.constant 0 : index
    %15 = vector.load %arg10[%c0_11, %c0_12] : memref<64x256xf32, #tpu.memory_space<vmem>>, vector<64x256xf32>
    tpu.vector_store %arg10[%c0_11, %c0_12], %9 {strides = array<i32>} : memref<64x256xf32, #tpu.memory_space<vmem>>, vector<64x256xf32>,
    %c0_13 = arith.constant 0 : index
    %c0_14 = arith.constant 0 : index
    %16 = vector.load %arg11[%c0_13, %c0_14] : memref<64x256xf32, #tpu.memory_space<vmem>>, vector<64x256xf32>
    tpu.vector_store %arg11[%c0_13, %c0_14], %14 {strides = array<i32>} : memref<64x256xf32, #tpu.memory_space<vmem>>, vector<64x256xf32>,
    %c0_15 = arith.constant 0 : index
    %c0_16 = arith.constant 0 : index
    %17 = vector.load %arg6[%c0_15, %c0_16] : memref<64x256xbf16, #tpu.memory_space<vmem>>, vector<64x256xbf16>
    %c0_17 = arith.constant 0 : index
    %c0_18 = arith.constant 0 : index
    %18 = vector.load %arg7[%c0_17, %c0_18] : memref<64x256xbf16, #tpu.memory_space<vmem>>, vector<64x256xbf16>
    %c0_19 = arith.constant 0 : index
    %c0_20 = arith.constant 0 : index
    %19 = vector.load %arg12[%c0_19, %c0_20] : memref<8x64xf32, #tpu.memory_space<vmem>>, vector<8x64xf32>
    %c0_21 = arith.constant 0 : index
    %c0_22 = arith.constant 0 : index
    %20 = vector.load %arg13[%c0_21, %c0_22] : memref<8x64xf32, #tpu.memory_space<vmem>>, vector<8x64xf32>
    %c0_23 = arith.constant 0 : index
    %c0_24 = arith.constant 0 : index
    %21 = vector.load %arg14[%c0_23, %c0_24] : memref<8x64xf32, #tpu.memory_space<vmem>>, vector<8x64xf32>
    %c0_25 = arith.constant 0 : index
    %c0_26 = arith.constant 0 : index
    %22 = vector.load %arg15[%c0_25, %c0_26] : memref<8x64xf32, #tpu.memory_space<vmem>>, vector<8x64xf32>
    %c0_i32_27 = arith.constant 0 : i32
    %c7_i32 = arith.constant 7 : i32
    %23 = arith.subi %c7_i32, %c0_i32_27 : i32
    %c8_i32 = arith.constant 8 : i32
    %24 = arith.muli %c0_i32_27, %c8_i32 : i32
    %25 = tpu.assume_multiple %24, 8 : i32
    %c8_i32_28 = arith.constant 8 : i32
    %26 = arith.muli %23, %c8_i32_28 : i32
    %27 = tpu.assume_multiple %26, 8 : i32
    %28 = arith.index_cast %25 : i32 to index
    %c0_29 = arith.constant 0 : index
    %29 = vector.load %arg10[%28, %c0_29] : memref<64x256xf32, #tpu.memory_space<vmem>>, vector<8x256xf32>
    %30 = arith.truncf %19 : vector<8x64xf32> to vector<8x64xbf16>
    %cst_30 = arith.constant dense<0.000000e+00> : vector<8x256xf32>
    %31 = tpu.matmul %30, %17, %cst_30 {dimension_numbers = #tpu.dot_dimension_numbers<[1], [0], [0], [1], [0, 0, 1, 1], [], []>} : vector<8x64xbf16>, vector<64x256xbf16>, vector<8x256xf32> -> vector<8x256xf32>
    %32 = arith.addf %29, %31 : vector<8x256xf32>
    %33 = arith.index_cast %27 : i32 to index
    %c0_31 = arith.constant 0 : index
    %34 = vector.load %arg11[%33, %c0_31] : memref<64x256xf32, #tpu.memory_space<vmem>>, vector<8x256xf32>
    %35 = arith.truncf %21 : vector<8x64xf32> to vector<8x64xbf16>
    %cst_32 = arith.constant dense<0.000000e+00> : vector<8x256xf32>
    %36 = tpu.matmul %35, %18, %cst_32 {dimension_numbers = #tpu.dot_dimension_numbers<[1], [0], [0], [1], [0, 0, 1, 1], [], []>} : vector<8x64xbf16>, vector<64x256xbf16>, vector<8x256xf32> -> vector<8x256xf32>
    %37 = arith.addf %34, %36 : vector<8x256xf32>
    %38 = arith.negf %32 : vector<8x256xf32>
    %39 = math.exp %38 : vector<8x256xf32>
    %cst_33 = arith.constant 1.000000e+00 : f32
    %40 = vector.broadcast %cst_33 : f32 to vector<8x256xf32>
    %41 = arith.addf %40, %39 : vector<8x256xf32>
    %42 = arith.divf %40, %41 : vector<8x256xf32>
    %43 = vector.extract_strided_slice %42 {offsets = [0, 0], sizes = [8, 64], strides = [1, 1]} : vector<8x256xf32> to vector<8x64xf32>
    %44 = vector.extract_strided_slice %42 {offsets = [0, 64], sizes = [8, 64], strides = [1, 1]} : vector<8x256xf32> to vector<8x64xf32>
    %45 = vector.extract_strided_slice %42 {offsets = [0, 192], sizes = [8, 64], strides = [1, 1]} : vector<8x256xf32> to vector<8x64xf32>
    %46 = vector.extract_strided_slice %32 {offsets = [0, 128], sizes = [8, 64], strides = [1, 1]} : vector<8x256xf32> to vector<8x64xf32>
    %47 = math.tanh %46 : vector<8x64xf32>
    %48 = arith.mulf %44, %20 : vector<8x64xf32>
    %49 = arith.mulf %43, %47 : vector<8x64xf32>
    %50 = arith.addf %48, %49 : vector<8x64xf32>
    %51 = math.tanh %50 : vector<8x64xf32>
    %52 = arith.mulf %45, %51 : vector<8x64xf32>
    %53 = arith.negf %37 : vector<8x256xf32>
    %54 = math.exp %53 : vector<8x256xf32>
    %cst_34 = arith.constant 1.000000e+00 : f32
    %55 = vector.broadcast %cst_34 : f32 to vector<8x256xf32>
    %56 = arith.addf %55, %54 : vector<8x256xf32>
    %57 = arith.divf %55, %56 : vector<8x256xf32>
    %58 = vector.extract_strided_slice %57 {offsets = [0, 0], sizes = [8, 64], strides = [1, 1]} : vector<8x256xf32> to vector<8x64xf32>
    %59 = vector.extract_strided_slice %57 {offsets = [0, 64], sizes = [8, 64], strides = [1, 1]} : vector<8x256xf32> to vector<8x64xf32>
    %60 = vector.extract_strided_slice %57 {offsets = [0, 192], sizes = [8, 64], strides = [1, 1]} : vector<8x256xf32> to vector<8x64xf32>
    %61 = vector.extract_strided_slice %37 {offsets = [0, 128], sizes = [8, 64], strides = [1, 1]} : vector<8x256xf32> to vector<8x64xf32>
    %62 = math.tanh %61 : vector<8x64xf32>
    %63 = arith.mulf %59, %22 : vector<8x64xf32>
    %64 = arith.mulf %58, %62 : vector<8x64xf32>
    %65 = arith.addf %63, %64 : vector<8x64xf32>
    %66 = math.tanh %65 : vector<8x64xf32>
    %67 = arith.mulf %60, %66 : vector<8x64xf32>
    %68 = arith.truncf %52 : vector<8x64xf32> to vector<8x64xbf16>
    %69 = arith.index_cast %25 : i32 to index
    %c0_35 = arith.constant 0 : index
    %70 = vector.load %arg8[%69, %c0_35] : memref<64x64xbf16, #tpu.memory_space<vmem>>, vector<8x64xbf16>
    tpu.vector_store %arg8[%69, %c0_35], %68 {strides = array<i32>} : memref<64x64xbf16, #tpu.memory_space<vmem>>, vector<8x64xbf16>,
    %71 = arith.truncf %67 : vector<8x64xf32> to vector<8x64xbf16>
    %72 = arith.index_cast %27 : i32 to index
    %c0_36 = arith.constant 0 : index
    %73 = vector.load %arg9[%72, %c0_36] : memref<64x64xbf16, #tpu.memory_space<vmem>>, vector<8x64xbf16>
    tpu.vector_store %arg9[%72, %c0_36], %71 {strides = array<i32>} : memref<64x64xbf16, #tpu.memory_space<vmem>>, vector<8x64xbf16>,
    %c1_i32 = arith.constant 1 : i32
    %c7_i32_37 = arith.constant 7 : i32
    %74 = arith.subi %c7_i32_37, %c1_i32 : i32
    %c8_i32_38 = arith.constant 8 : i32
    %75 = arith.muli %c1_i32, %c8_i32_38 : i32
    %76 = tpu.assume_multiple %75, 8 : i32
    %c8_i32_39 = arith.constant 8 : i32
    %77 = arith.muli %74, %c8_i32_39 : i32
    %78 = tpu.assume_multiple %77, 8 : i32
    %79 = arith.index_cast %76 : i32 to index
    %c0_40 = arith.constant 0 : index
    %80 = vector.load %arg10[%79, %c0_40] : memref<64x256xf32, #tpu.memory_space<vmem>>, vector<8x256xf32>
    %81 = arith.truncf %52 : vector<8x64xf32> to vector<8x64xbf16>
    %cst_41 = arith.constant dense<0.000000e+00> : vector<8x256xf32>
    %82 = tpu.matmul %81, %17, %cst_41 {dimension_numbers = #tpu.dot_dimension_numbers<[1], [0], [0], [1], [0, 0, 1, 1], [], []>} : vector<8x64xbf16>, vector<64x256xbf16>, vector<8x256xf32> -> vector<8x256xf32>
    %83 = arith.addf %80, %82 : vector<8x256xf32>
    %84 = arith.index_cast %78 : i32 to index
    %c0_42 = arith.constant 0 : index
    %85 = vector.load %arg11[%84, %c0_42] : memref<64x256xf32, #tpu.memory_space<vmem>>, vector<8x256xf32>
    %86 = arith.truncf %67 : vector<8x64xf32> to vector<8x64xbf16>
    %cst_43 = arith.constant dense<0.000000e+00> : vector<8x256xf32>
    %87 = tpu.matmul %86, %18, %cst_43 {dimension_numbers = #tpu.dot_dimension_numbers<[1], [0], [0], [1], [0, 0, 1, 1], [], []>} : vector<8x64xbf16>, vector<64x256xbf16>, vector<8x256xf32> -> vector<8x256xf32>
    %88 = arith.addf %85, %87 : vector<8x256xf32>
    %89 = arith.negf %83 : vector<8x256xf32>
    %90 = math.exp %89 : vector<8x256xf32>
    %cst_44 = arith.constant 1.000000e+00 : f32
    %91 = vector.broadcast %cst_44 : f32 to vector<8x256xf32>
    %92 = arith.addf %91, %90 : vector<8x256xf32>
    %93 = arith.divf %91, %92 : vector<8x256xf32>
    %94 = vector.extract_strided_slice %93 {offsets = [0, 0], sizes = [8, 64], strides = [1, 1]} : vector<8x256xf32> to vector<8x64xf32>
    %95 = vector.extract_strided_slice %93 {offsets = [0, 64], sizes = [8, 64], strides = [1, 1]} : vector<8x256xf32> to vector<8x64xf32>
    %96 = vector.extract_strided_slice %93 {offsets = [0, 192], sizes = [8, 64], strides = [1, 1]} : vector<8x256xf32> to vector<8x64xf32>
    %97 = vector.extract_strided_slice %83 {offsets = [0, 128], sizes = [8, 64], strides = [1, 1]} : vector<8x256xf32> to vector<8x64xf32>
    %98 = math.tanh %97 : vector<8x64xf32>
    %99 = arith.mulf %95, %50 : vector<8x64xf32>
    %100 = arith.mulf %94, %98 : vector<8x64xf32>
    %101 = arith.addf %99, %100 : vector<8x64xf32>
    %102 = math.tanh %101 : vector<8x64xf32>
    %103 = arith.mulf %96, %102 : vector<8x64xf32>
    %104 = arith.negf %88 : vector<8x256xf32>
    %105 = math.exp %104 : vector<8x256xf32>
    %cst_45 = arith.constant 1.000000e+00 : f32
    %106 = vector.broadcast %cst_45 : f32 to vector<8x256xf32>
    %107 = arith.addf %106, %105 : vector<8x256xf32>
    %108 = arith.divf %106, %107 : vector<8x256xf32>
    %109 = vector.extract_strided_slice %108 {offsets = [0, 0], sizes = [8, 64], strides = [1, 1]} : vector<8x256xf32> to vector<8x64xf32>
    %110 = vector.extract_strided_slice %108 {offsets = [0, 64], sizes = [8, 64], strides = [1, 1]} : vector<8x256xf32> to vector<8x64xf32>
    %111 = vector.extract_strided_slice %108 {offsets = [0, 192], sizes = [8, 64], strides = [1, 1]} : vector<8x256xf32> to vector<8x64xf32>
    %112 = vector.extract_strided_slice %88 {offsets = [0, 128], sizes = [8, 64], strides = [1, 1]} : vector<8x256xf32> to vector<8x64xf32>
    %113 = math.tanh %112 : vector<8x64xf32>
    %114 = arith.mulf %110, %65 : vector<8x64xf32>
    %115 = arith.mulf %109, %113 : vector<8x64xf32>
    %116 = arith.addf %114, %115 : vector<8x64xf32>
    %117 = math.tanh %116 : vector<8x64xf32>
    %118 = arith.mulf %111, %117 : vector<8x64xf32>
    %119 = arith.truncf %103 : vector<8x64xf32> to vector<8x64xbf16>
    %120 = arith.index_cast %76 : i32 to index
    %c0_46 = arith.constant 0 : index
    %121 = vector.load %arg8[%120, %c0_46] : memref<64x64xbf16, #tpu.memory_space<vmem>>, vector<8x64xbf16>
    tpu.vector_store %arg8[%120, %c0_46], %119 {strides = array<i32>} : memref<64x64xbf16, #tpu.memory_space<vmem>>, vector<8x64xbf16>,
    %122 = arith.truncf %118 : vector<8x64xf32> to vector<8x64xbf16>
    %123 = arith.index_cast %78 : i32 to index
    %c0_47 = arith.constant 0 : index
    %124 = vector.load %arg9[%123, %c0_47] : memref<64x64xbf16, #tpu.memory_space<vmem>>, vector<8x64xbf16>
    tpu.vector_store %arg9[%123, %c0_47], %122 {strides = array<i32>} : memref<64x64xbf16, #tpu.memory_space<vmem>>, vector<8x64xbf16>,
    %c2_i32 = arith.constant 2 : i32
    %c7_i32_48 = arith.constant 7 : i32
    %125 = arith.subi %c7_i32_48, %c2_i32 : i32
    %c8_i32_49 = arith.constant 8 : i32
    %126 = arith.muli %c2_i32, %c8_i32_49 : i32
    %127 = tpu.assume_multiple %126, 8 : i32
    %c8_i32_50 = arith.constant 8 : i32
    %128 = arith.muli %125, %c8_i32_50 : i32
    %129 = tpu.assume_multiple %128, 8 : i32
    %130 = arith.index_cast %127 : i32 to index
    %c0_51 = arith.constant 0 : index
    %131 = vector.load %arg10[%130, %c0_51] : memref<64x256xf32, #tpu.memory_space<vmem>>, vector<8x256xf32>
    %132 = arith.truncf %103 : vector<8x64xf32> to vector<8x64xbf16>
    %cst_52 = arith.constant dense<0.000000e+00> : vector<8x256xf32>
    %133 = tpu.matmul %132, %17, %cst_52 {dimension_numbers = #tpu.dot_dimension_numbers<[1], [0], [0], [1], [0, 0, 1, 1], [], []>} : vector<8x64xbf16>, vector<64x256xbf16>, vector<8x256xf32> -> vector<8x256xf32>
    %134 = arith.addf %131, %133 : vector<8x256xf32>
    %135 = arith.index_cast %129 : i32 to index
    %c0_53 = arith.constant 0 : index
    %136 = vector.load %arg11[%135, %c0_53] : memref<64x256xf32, #tpu.memory_space<vmem>>, vector<8x256xf32>
    %137 = arith.truncf %118 : vector<8x64xf32> to vector<8x64xbf16>
    %cst_54 = arith.constant dense<0.000000e+00> : vector<8x256xf32>
    %138 = tpu.matmul %137, %18, %cst_54 {dimension_numbers = #tpu.dot_dimension_numbers<[1], [0], [0], [1], [0, 0, 1, 1], [], []>} : vector<8x64xbf16>, vector<64x256xbf16>, vector<8x256xf32> -> vector<8x256xf32>
    %139 = arith.addf %136, %138 : vector<8x256xf32>
    %140 = arith.negf %134 : vector<8x256xf32>
    %141 = math.exp %140 : vector<8x256xf32>
    %cst_55 = arith.constant 1.000000e+00 : f32
    %142 = vector.broadcast %cst_55 : f32 to vector<8x256xf32>
    %143 = arith.addf %142, %141 : vector<8x256xf32>
    %144 = arith.divf %142, %143 : vector<8x256xf32>
    %145 = vector.extract_strided_slice %144 {offsets = [0, 0], sizes = [8, 64], strides = [1, 1]} : vector<8x256xf32> to vector<8x64xf32>
    %146 = vector.extract_strided_slice %144 {offsets = [0, 64], sizes = [8, 64], strides = [1, 1]} : vector<8x256xf32> to vector<8x64xf32>
    %147 = vector.extract_strided_slice %144 {offsets = [0, 192], sizes = [8, 64], strides = [1, 1]} : vector<8x256xf32> to vector<8x64xf32>
    %148 = vector.extract_strided_slice %134 {offsets = [0, 128], sizes = [8, 64], strides = [1, 1]} : vector<8x256xf32> to vector<8x64xf32>
    %149 = math.tanh %148 : vector<8x64xf32>
    %150 = arith.mulf %146, %101 : vector<8x64xf32>
    %151 = arith.mulf %145, %149 : vector<8x64xf32>
    %152 = arith.addf %150, %151 : vector<8x64xf32>
    %153 = math.tanh %152 : vector<8x64xf32>
    %154 = arith.mulf %147, %153 : vector<8x64xf32>
    %155 = arith.negf %139 : vector<8x256xf32>
    %156 = math.exp %155 : vector<8x256xf32>
    %cst_56 = arith.constant 1.000000e+00 : f32
    %157 = vector.broadcast %cst_56 : f32 to vector<8x256xf32>
    %158 = arith.addf %157, %156 : vector<8x256xf32>
    %159 = arith.divf %157, %158 : vector<8x256xf32>
    %160 = vector.extract_strided_slice %159 {offsets = [0, 0], sizes = [8, 64], strides = [1, 1]} : vector<8x256xf32> to vector<8x64xf32>
    %161 = vector.extract_strided_slice %159 {offsets = [0, 64], sizes = [8, 64], strides = [1, 1]} : vector<8x256xf32> to vector<8x64xf32>
    %162 = vector.extract_strided_slice %159 {offsets = [0, 192], sizes = [8, 64], strides = [1, 1]} : vector<8x256xf32> to vector<8x64xf32>
    %163 = vector.extract_strided_slice %139 {offsets = [0, 128], sizes = [8, 64], strides = [1, 1]} : vector<8x256xf32> to vector<8x64xf32>
    %164 = math.tanh %163 : vector<8x64xf32>
    %165 = arith.mulf %161, %116 : vector<8x64xf32>
    %166 = arith.mulf %160, %164 : vector<8x64xf32>
    %167 = arith.addf %165, %166 : vector<8x64xf32>
    %168 = math.tanh %167 : vector<8x64xf32>
    %169 = arith.mulf %162, %168 : vector<8x64xf32>
    %170 = arith.truncf %154 : vector<8x64xf32> to vector<8x64xbf16>
    %171 = arith.index_cast %127 : i32 to index
    %c0_57 = arith.constant 0 : index
    %172 = vector.load %arg8[%171, %c0_57] : memref<64x64xbf16, #tpu.memory_space<vmem>>, vector<8x64xbf16>
    tpu.vector_store %arg8[%171, %c0_57], %170 {strides = array<i32>} : memref<64x64xbf16, #tpu.memory_space<vmem>>, vector<8x64xbf16>,
    %173 = arith.truncf %169 : vector<8x64xf32> to vector<8x64xbf16>
    %174 = arith.index_cast %129 : i32 to index
    %c0_58 = arith.constant 0 : index
    %175 = vector.load %arg9[%174, %c0_58] : memref<64x64xbf16, #tpu.memory_space<vmem>>, vector<8x64xbf16>
    tpu.vector_store %arg9[%174, %c0_58], %173 {strides = array<i32>} : memref<64x64xbf16, #tpu.memory_space<vmem>>, vector<8x64xbf16>,
    %c3_i32 = arith.constant 3 : i32
    %c7_i32_59 = arith.constant 7 : i32
    %176 = arith.subi %c7_i32_59, %c3_i32 : i32
    %c8_i32_60 = arith.constant 8 : i32
    %177 = arith.muli %c3_i32, %c8_i32_60 : i32
    %178 = tpu.assume_multiple %177, 8 : i32
    %c8_i32_61 = arith.constant 8 : i32
    %179 = arith.muli %176, %c8_i32_61 : i32
    %180 = tpu.assume_multiple %179, 8 : i32
    %181 = arith.index_cast %178 : i32 to index
    %c0_62 = arith.constant 0 : index
    %182 = vector.load %arg10[%181, %c0_62] : memref<64x256xf32, #tpu.memory_space<vmem>>, vector<8x256xf32>
    %183 = arith.truncf %154 : vector<8x64xf32> to vector<8x64xbf16>
    %cst_63 = arith.constant dense<0.000000e+00> : vector<8x256xf32>
    %184 = tpu.matmul %183, %17, %cst_63 {dimension_numbers = #tpu.dot_dimension_numbers<[1], [0], [0], [1], [0, 0, 1, 1], [], []>} : vector<8x64xbf16>, vector<64x256xbf16>, vector<8x256xf32> -> vector<8x256xf32>
    %185 = arith.addf %182, %184 : vector<8x256xf32>
    %186 = arith.index_cast %180 : i32 to index
    %c0_64 = arith.constant 0 : index
    %187 = vector.load %arg11[%186, %c0_64] : memref<64x256xf32, #tpu.memory_space<vmem>>, vector<8x256xf32>
    %188 = arith.truncf %169 : vector<8x64xf32> to vector<8x64xbf16>
    %cst_65 = arith.constant dense<0.000000e+00> : vector<8x256xf32>
    %189 = tpu.matmul %188, %18, %cst_65 {dimension_numbers = #tpu.dot_dimension_numbers<[1], [0], [0], [1], [0, 0, 1, 1], [], []>} : vector<8x64xbf16>, vector<64x256xbf16>, vector<8x256xf32> -> vector<8x256xf32>
    %190 = arith.addf %187, %189 : vector<8x256xf32>
    %191 = arith.negf %185 : vector<8x256xf32>
    %192 = math.exp %191 : vector<8x256xf32>
    %cst_66 = arith.constant 1.000000e+00 : f32
    %193 = vector.broadcast %cst_66 : f32 to vector<8x256xf32>
    %194 = arith.addf %193, %192 : vector<8x256xf32>
    %195 = arith.divf %193, %194 : vector<8x256xf32>
    %196 = vector.extract_strided_slice %195 {offsets = [0, 0], sizes = [8, 64], strides = [1, 1]} : vector<8x256xf32> to vector<8x64xf32>
    %197 = vector.extract_strided_slice %195 {offsets = [0, 64], sizes = [8, 64], strides = [1, 1]} : vector<8x256xf32> to vector<8x64xf32>
    %198 = vector.extract_strided_slice %195 {offsets = [0, 192], sizes = [8, 64], strides = [1, 1]} : vector<8x256xf32> to vector<8x64xf32>
    %199 = vector.extract_strided_slice %185 {offsets = [0, 128], sizes = [8, 64], strides = [1, 1]} : vector<8x256xf32> to vector<8x64xf32>
    %200 = math.tanh %199 : vector<8x64xf32>
    %201 = arith.mulf %197, %152 : vector<8x64xf32>
    %202 = arith.mulf %196, %200 : vector<8x64xf32>
    %203 = arith.addf %201, %202 : vector<8x64xf32>
    %204 = math.tanh %203 : vector<8x64xf32>
    %205 = arith.mulf %198, %204 : vector<8x64xf32>
    %206 = arith.negf %190 : vector<8x256xf32>
    %207 = math.exp %206 : vector<8x256xf32>
    %cst_67 = arith.constant 1.000000e+00 : f32
    %208 = vector.broadcast %cst_67 : f32 to vector<8x256xf32>
    %209 = arith.addf %208, %207 : vector<8x256xf32>
    %210 = arith.divf %208, %209 : vector<8x256xf32>
    %211 = vector.extract_strided_slice %210 {offsets = [0, 0], sizes = [8, 64], strides = [1, 1]} : vector<8x256xf32> to vector<8x64xf32>
    %212 = vector.extract_strided_slice %210 {offsets = [0, 64], sizes = [8, 64], strides = [1, 1]} : vector<8x256xf32> to vector<8x64xf32>
    %213 = vector.extract_strided_slice %210 {offsets = [0, 192], sizes = [8, 64], strides = [1, 1]} : vector<8x256xf32> to vector<8x64xf32>
    %214 = vector.extract_strided_slice %190 {offsets = [0, 128], sizes = [8, 64], strides = [1, 1]} : vector<8x256xf32> to vector<8x64xf32>
    %215 = math.tanh %214 : vector<8x64xf32>
    %216 = arith.mulf %212, %167 : vector<8x64xf32>
    %217 = arith.mulf %211, %215 : vector<8x64xf32>
    %218 = arith.addf %216, %217 : vector<8x64xf32>
    %219 = math.tanh %218 : vector<8x64xf32>
    %220 = arith.mulf %213, %219 : vector<8x64xf32>
    %221 = arith.truncf %205 : vector<8x64xf32> to vector<8x64xbf16>
    %222 = arith.index_cast %178 : i32 to index
    %c0_68 = arith.constant 0 : index
    %223 = vector.load %arg8[%222, %c0_68] : memref<64x64xbf16, #tpu.memory_space<vmem>>, vector<8x64xbf16>
    tpu.vector_store %arg8[%222, %c0_68], %221 {strides = array<i32>} : memref<64x64xbf16, #tpu.memory_space<vmem>>, vector<8x64xbf16>,
    %224 = arith.truncf %220 : vector<8x64xf32> to vector<8x64xbf16>
    %225 = arith.index_cast %180 : i32 to index
    %c0_69 = arith.constant 0 : index
    %226 = vector.load %arg9[%225, %c0_69] : memref<64x64xbf16, #tpu.memory_space<vmem>>, vector<8x64xbf16>
    tpu.vector_store %arg9[%225, %c0_69], %224 {strides = array<i32>} : memref<64x64xbf16, #tpu.memory_space<vmem>>, vector<8x64xbf16>,
    %c4_i32 = arith.constant 4 : i32
    %c7_i32_70 = arith.constant 7 : i32
    %227 = arith.subi %c7_i32_70, %c4_i32 : i32
    %c8_i32_71 = arith.constant 8 : i32
    %228 = arith.muli %c4_i32, %c8_i32_71 : i32
    %229 = tpu.assume_multiple %228, 8 : i32
    %c8_i32_72 = arith.constant 8 : i32
    %230 = arith.muli %227, %c8_i32_72 : i32
    %231 = tpu.assume_multiple %230, 8 : i32
    %232 = arith.index_cast %229 : i32 to index
    %c0_73 = arith.constant 0 : index
    %233 = vector.load %arg10[%232, %c0_73] : memref<64x256xf32, #tpu.memory_space<vmem>>, vector<8x256xf32>
    %234 = arith.truncf %205 : vector<8x64xf32> to vector<8x64xbf16>
    %cst_74 = arith.constant dense<0.000000e+00> : vector<8x256xf32>
    %235 = tpu.matmul %234, %17, %cst_74 {dimension_numbers = #tpu.dot_dimension_numbers<[1], [0], [0], [1], [0, 0, 1, 1], [], []>} : vector<8x64xbf16>, vector<64x256xbf16>, vector<8x256xf32> -> vector<8x256xf32>
    %236 = arith.addf %233, %235 : vector<8x256xf32>
    %237 = arith.index_cast %231 : i32 to index
    %c0_75 = arith.constant 0 : index
    %238 = vector.load %arg11[%237, %c0_75] : memref<64x256xf32, #tpu.memory_space<vmem>>, vector<8x256xf32>
    %239 = arith.truncf %220 : vector<8x64xf32> to vector<8x64xbf16>
    %cst_76 = arith.constant dense<0.000000e+00> : vector<8x256xf32>
    %240 = tpu.matmul %239, %18, %cst_76 {dimension_numbers = #tpu.dot_dimension_numbers<[1], [0], [0], [1], [0, 0, 1, 1], [], []>} : vector<8x64xbf16>, vector<64x256xbf16>, vector<8x256xf32> -> vector<8x256xf32>
    %241 = arith.addf %238, %240 : vector<8x256xf32>
    %242 = arith.negf %236 : vector<8x256xf32>
    %243 = math.exp %242 : vector<8x256xf32>
    %cst_77 = arith.constant 1.000000e+00 : f32
    %244 = vector.broadcast %cst_77 : f32 to vector<8x256xf32>
    %245 = arith.addf %244, %243 : vector<8x256xf32>
    %246 = arith.divf %244, %245 : vector<8x256xf32>
    %247 = vector.extract_strided_slice %246 {offsets = [0, 0], sizes = [8, 64], strides = [1, 1]} : vector<8x256xf32> to vector<8x64xf32>
    %248 = vector.extract_strided_slice %246 {offsets = [0, 64], sizes = [8, 64], strides = [1, 1]} : vector<8x256xf32> to vector<8x64xf32>
    %249 = vector.extract_strided_slice %246 {offsets = [0, 192], sizes = [8, 64], strides = [1, 1]} : vector<8x256xf32> to vector<8x64xf32>
    %250 = vector.extract_strided_slice %236 {offsets = [0, 128], sizes = [8, 64], strides = [1, 1]} : vector<8x256xf32> to vector<8x64xf32>
    %251 = math.tanh %250 : vector<8x64xf32>
    %252 = arith.mulf %248, %203 : vector<8x64xf32>
    %253 = arith.mulf %247, %251 : vector<8x64xf32>
    %254 = arith.addf %252, %253 : vector<8x64xf32>
    %255 = math.tanh %254 : vector<8x64xf32>
    %256 = arith.mulf %249, %255 : vector<8x64xf32>
    %257 = arith.negf %241 : vector<8x256xf32>
    %258 = math.exp %257 : vector<8x256xf32>
    %cst_78 = arith.constant 1.000000e+00 : f32
    %259 = vector.broadcast %cst_78 : f32 to vector<8x256xf32>
    %260 = arith.addf %259, %258 : vector<8x256xf32>
    %261 = arith.divf %259, %260 : vector<8x256xf32>
    %262 = vector.extract_strided_slice %261 {offsets = [0, 0], sizes = [8, 64], strides = [1, 1]} : vector<8x256xf32> to vector<8x64xf32>
    %263 = vector.extract_strided_slice %261 {offsets = [0, 64], sizes = [8, 64], strides = [1, 1]} : vector<8x256xf32> to vector<8x64xf32>
    %264 = vector.extract_strided_slice %261 {offsets = [0, 192], sizes = [8, 64], strides = [1, 1]} : vector<8x256xf32> to vector<8x64xf32>
    %265 = vector.extract_strided_slice %241 {offsets = [0, 128], sizes = [8, 64], strides = [1, 1]} : vector<8x256xf32> to vector<8x64xf32>
    %266 = math.tanh %265 : vector<8x64xf32>
    %267 = arith.mulf %263, %218 : vector<8x64xf32>
    %268 = arith.mulf %262, %266 : vector<8x64xf32>
    %269 = arith.addf %267, %268 : vector<8x64xf32>
    %270 = math.tanh %269 : vector<8x64xf32>
    %271 = arith.mulf %264, %270 : vector<8x64xf32>
    %272 = arith.truncf %256 : vector<8x64xf32> to vector<8x64xbf16>
    %273 = arith.index_cast %229 : i32 to index
    %c0_79 = arith.constant 0 : index
    %274 = vector.load %arg8[%273, %c0_79] : memref<64x64xbf16, #tpu.memory_space<vmem>>, vector<8x64xbf16>
    tpu.vector_store %arg8[%273, %c0_79], %272 {strides = array<i32>} : memref<64x64xbf16, #tpu.memory_space<vmem>>, vector<8x64xbf16>,
    %275 = arith.truncf %271 : vector<8x64xf32> to vector<8x64xbf16>
    %276 = arith.index_cast %231 : i32 to index
    %c0_80 = arith.constant 0 : index
    %277 = vector.load %arg9[%276, %c0_80] : memref<64x64xbf16, #tpu.memory_space<vmem>>, vector<8x64xbf16>
    tpu.vector_store %arg9[%276, %c0_80], %275 {strides = array<i32>} : memref<64x64xbf16, #tpu.memory_space<vmem>>, vector<8x64xbf16>,
    %c5_i32 = arith.constant 5 : i32
    %c7_i32_81 = arith.constant 7 : i32
    %278 = arith.subi %c7_i32_81, %c5_i32 : i32
    %c8_i32_82 = arith.constant 8 : i32
    %279 = arith.muli %c5_i32, %c8_i32_82 : i32
    %280 = tpu.assume_multiple %279, 8 : i32
    %c8_i32_83 = arith.constant 8 : i32
    %281 = arith.muli %278, %c8_i32_83 : i32
    %282 = tpu.assume_multiple %281, 8 : i32
    %283 = arith.index_cast %280 : i32 to index
    %c0_84 = arith.constant 0 : index
    %284 = vector.load %arg10[%283, %c0_84] : memref<64x256xf32, #tpu.memory_space<vmem>>, vector<8x256xf32>
    %285 = arith.truncf %256 : vector<8x64xf32> to vector<8x64xbf16>
    %cst_85 = arith.constant dense<0.000000e+00> : vector<8x256xf32>
    %286 = tpu.matmul %285, %17, %cst_85 {dimension_numbers = #tpu.dot_dimension_numbers<[1], [0], [0], [1], [0, 0, 1, 1], [], []>} : vector<8x64xbf16>, vector<64x256xbf16>, vector<8x256xf32> -> vector<8x256xf32>
    %287 = arith.addf %284, %286 : vector<8x256xf32>
    %288 = arith.index_cast %282 : i32 to index
    %c0_86 = arith.constant 0 : index
    %289 = vector.load %arg11[%288, %c0_86] : memref<64x256xf32, #tpu.memory_space<vmem>>, vector<8x256xf32>
    %290 = arith.truncf %271 : vector<8x64xf32> to vector<8x64xbf16>
    %cst_87 = arith.constant dense<0.000000e+00> : vector<8x256xf32>
    %291 = tpu.matmul %290, %18, %cst_87 {dimension_numbers = #tpu.dot_dimension_numbers<[1], [0], [0], [1], [0, 0, 1, 1], [], []>} : vector<8x64xbf16>, vector<64x256xbf16>, vector<8x256xf32> -> vector<8x256xf32>
    %292 = arith.addf %289, %291 : vector<8x256xf32>
    %293 = arith.negf %287 : vector<8x256xf32>
    %294 = math.exp %293 : vector<8x256xf32>
    %cst_88 = arith.constant 1.000000e+00 : f32
    %295 = vector.broadcast %cst_88 : f32 to vector<8x256xf32>
    %296 = arith.addf %295, %294 : vector<8x256xf32>
    %297 = arith.divf %295, %296 : vector<8x256xf32>
    %298 = vector.extract_strided_slice %297 {offsets = [0, 0], sizes = [8, 64], strides = [1, 1]} : vector<8x256xf32> to vector<8x64xf32>
    %299 = vector.extract_strided_slice %297 {offsets = [0, 64], sizes = [8, 64], strides = [1, 1]} : vector<8x256xf32> to vector<8x64xf32>
    %300 = vector.extract_strided_slice %297 {offsets = [0, 192], sizes = [8, 64], strides = [1, 1]} : vector<8x256xf32> to vector<8x64xf32>
    %301 = vector.extract_strided_slice %287 {offsets = [0, 128], sizes = [8, 64], strides = [1, 1]} : vector<8x256xf32> to vector<8x64xf32>
    %302 = math.tanh %301 : vector<8x64xf32>
    %303 = arith.mulf %299, %254 : vector<8x64xf32>
    %304 = arith.mulf %298, %302 : vector<8x64xf32>
    %305 = arith.addf %303, %304 : vector<8x64xf32>
    %306 = math.tanh %305 : vector<8x64xf32>
    %307 = arith.mulf %300, %306 : vector<8x64xf32>
    %308 = arith.negf %292 : vector<8x256xf32>
    %309 = math.exp %308 : vector<8x256xf32>
    %cst_89 = arith.constant 1.000000e+00 : f32
    %310 = vector.broadcast %cst_89 : f32 to vector<8x256xf32>
    %311 = arith.addf %310, %309 : vector<8x256xf32>
    %312 = arith.divf %310, %311 : vector<8x256xf32>
    %313 = vector.extract_strided_slice %312 {offsets = [0, 0], sizes = [8, 64], strides = [1, 1]} : vector<8x256xf32> to vector<8x64xf32>
    %314 = vector.extract_strided_slice %312 {offsets = [0, 64], sizes = [8, 64], strides = [1, 1]} : vector<8x256xf32> to vector<8x64xf32>
    %315 = vector.extract_strided_slice %312 {offsets = [0, 192], sizes = [8, 64], strides = [1, 1]} : vector<8x256xf32> to vector<8x64xf32>
    %316 = vector.extract_strided_slice %292 {offsets = [0, 128], sizes = [8, 64], strides = [1, 1]} : vector<8x256xf32> to vector<8x64xf32>
    %317 = math.tanh %316 : vector<8x64xf32>
    %318 = arith.mulf %314, %269 : vector<8x64xf32>
    %319 = arith.mulf %313, %317 : vector<8x64xf32>
    %320 = arith.addf %318, %319 : vector<8x64xf32>
    %321 = math.tanh %320 : vector<8x64xf32>
    %322 = arith.mulf %315, %321 : vector<8x64xf32>
    %323 = arith.truncf %307 : vector<8x64xf32> to vector<8x64xbf16>
    %324 = arith.index_cast %280 : i32 to index
    %c0_90 = arith.constant 0 : index
    %325 = vector.load %arg8[%324, %c0_90] : memref<64x64xbf16, #tpu.memory_space<vmem>>, vector<8x64xbf16>
    tpu.vector_store %arg8[%324, %c0_90], %323 {strides = array<i32>} : memref<64x64xbf16, #tpu.memory_space<vmem>>, vector<8x64xbf16>,
    %326 = arith.truncf %322 : vector<8x64xf32> to vector<8x64xbf16>
    %327 = arith.index_cast %282 : i32 to index
    %c0_91 = arith.constant 0 : index
    %328 = vector.load %arg9[%327, %c0_91] : memref<64x64xbf16, #tpu.memory_space<vmem>>, vector<8x64xbf16>
    tpu.vector_store %arg9[%327, %c0_91], %326 {strides = array<i32>} : memref<64x64xbf16, #tpu.memory_space<vmem>>, vector<8x64xbf16>,
    %c6_i32 = arith.constant 6 : i32
    %c7_i32_92 = arith.constant 7 : i32
    %329 = arith.subi %c7_i32_92, %c6_i32 : i32
    %c8_i32_93 = arith.constant 8 : i32
    %330 = arith.muli %c6_i32, %c8_i32_93 : i32
    %331 = tpu.assume_multiple %330, 8 : i32
    %c8_i32_94 = arith.constant 8 : i32
    %332 = arith.muli %329, %c8_i32_94 : i32
    %333 = tpu.assume_multiple %332, 8 : i32
    %334 = arith.index_cast %331 : i32 to index
    %c0_95 = arith.constant 0 : index
    %335 = vector.load %arg10[%334, %c0_95] : memref<64x256xf32, #tpu.memory_space<vmem>>, vector<8x256xf32>
    %336 = arith.truncf %307 : vector<8x64xf32> to vector<8x64xbf16>
    %cst_96 = arith.constant dense<0.000000e+00> : vector<8x256xf32>
    %337 = tpu.matmul %336, %17, %cst_96 {dimension_numbers = #tpu.dot_dimension_numbers<[1], [0], [0], [1], [0, 0, 1, 1], [], []>} : vector<8x64xbf16>, vector<64x256xbf16>, vector<8x256xf32> -> vector<8x256xf32>
    %338 = arith.addf %335, %337 : vector<8x256xf32>
    %339 = arith.index_cast %333 : i32 to index
    %c0_97 = arith.constant 0 : index
    %340 = vector.load %arg11[%339, %c0_97] : memref<64x256xf32, #tpu.memory_space<vmem>>, vector<8x256xf32>
    %341 = arith.truncf %322 : vector<8x64xf32> to vector<8x64xbf16>
    %cst_98 = arith.constant dense<0.000000e+00> : vector<8x256xf32>
    %342 = tpu.matmul %341, %18, %cst_98 {dimension_numbers = #tpu.dot_dimension_numbers<[1], [0], [0], [1], [0, 0, 1, 1], [], []>} : vector<8x64xbf16>, vector<64x256xbf16>, vector<8x256xf32> -> vector<8x256xf32>
    %343 = arith.addf %340, %342 : vector<8x256xf32>
    %344 = arith.negf %338 : vector<8x256xf32>
    %345 = math.exp %344 : vector<8x256xf32>
    %cst_99 = arith.constant 1.000000e+00 : f32
    %346 = vector.broadcast %cst_99 : f32 to vector<8x256xf32>
    %347 = arith.addf %346, %345 : vector<8x256xf32>
    %348 = arith.divf %346, %347 : vector<8x256xf32>
    %349 = vector.extract_strided_slice %348 {offsets = [0, 0], sizes = [8, 64], strides = [1, 1]} : vector<8x256xf32> to vector<8x64xf32>
    %350 = vector.extract_strided_slice %348 {offsets = [0, 64], sizes = [8, 64], strides = [1, 1]} : vector<8x256xf32> to vector<8x64xf32>
    %351 = vector.extract_strided_slice %348 {offsets = [0, 192], sizes = [8, 64], strides = [1, 1]} : vector<8x256xf32> to vector<8x64xf32>
    %352 = vector.extract_strided_slice %338 {offsets = [0, 128], sizes = [8, 64], strides = [1, 1]} : vector<8x256xf32> to vector<8x64xf32>
    %353 = math.tanh %352 : vector<8x64xf32>
    %354 = arith.mulf %350, %305 : vector<8x64xf32>
    %355 = arith.mulf %349, %353 : vector<8x64xf32>
    %356 = arith.addf %354, %355 : vector<8x64xf32>
    %357 = math.tanh %356 : vector<8x64xf32>
    %358 = arith.mulf %351, %357 : vector<8x64xf32>
    %359 = arith.negf %343 : vector<8x256xf32>
    %360 = math.exp %359 : vector<8x256xf32>
    %cst_100 = arith.constant 1.000000e+00 : f32
    %361 = vector.broadcast %cst_100 : f32 to vector<8x256xf32>
    %362 = arith.addf %361, %360 : vector<8x256xf32>
    %363 = arith.divf %361, %362 : vector<8x256xf32>
    %364 = vector.extract_strided_slice %363 {offsets = [0, 0], sizes = [8, 64], strides = [1, 1]} : vector<8x256xf32> to vector<8x64xf32>
    %365 = vector.extract_strided_slice %363 {offsets = [0, 64], sizes = [8, 64], strides = [1, 1]} : vector<8x256xf32> to vector<8x64xf32>
    %366 = vector.extract_strided_slice %363 {offsets = [0, 192], sizes = [8, 64], strides = [1, 1]} : vector<8x256xf32> to vector<8x64xf32>
    %367 = vector.extract_strided_slice %343 {offsets = [0, 128], sizes = [8, 64], strides = [1, 1]} : vector<8x256xf32> to vector<8x64xf32>
    %368 = math.tanh %367 : vector<8x64xf32>
    %369 = arith.mulf %365, %320 : vector<8x64xf32>
    %370 = arith.mulf %364, %368 : vector<8x64xf32>
    %371 = arith.addf %369, %370 : vector<8x64xf32>
    %372 = math.tanh %371 : vector<8x64xf32>
    %373 = arith.mulf %366, %372 : vector<8x64xf32>
    %374 = arith.truncf %358 : vector<8x64xf32> to vector<8x64xbf16>
    %375 = arith.index_cast %331 : i32 to index
    %c0_101 = arith.constant 0 : index
    %376 = vector.load %arg8[%375, %c0_101] : memref<64x64xbf16, #tpu.memory_space<vmem>>, vector<8x64xbf16>
    tpu.vector_store %arg8[%375, %c0_101], %374 {strides = array<i32>} : memref<64x64xbf16, #tpu.memory_space<vmem>>, vector<8x64xbf16>,
    %377 = arith.truncf %373 : vector<8x64xf32> to vector<8x64xbf16>
    %378 = arith.index_cast %333 : i32 to index
    %c0_102 = arith.constant 0 : index
    %379 = vector.load %arg9[%378, %c0_102] : memref<64x64xbf16, #tpu.memory_space<vmem>>, vector<8x64xbf16>
    tpu.vector_store %arg9[%378, %c0_102], %377 {strides = array<i32>} : memref<64x64xbf16, #tpu.memory_space<vmem>>, vector<8x64xbf16>,
    %c7_i32_103 = arith.constant 7 : i32
    %c7_i32_104 = arith.constant 7 : i32
    %380 = arith.subi %c7_i32_104, %c7_i32_103 : i32
    %c8_i32_105 = arith.constant 8 : i32
    %381 = arith.muli %c7_i32_103, %c8_i32_105 : i32
    %382 = tpu.assume_multiple %381, 8 : i32
    %c8_i32_106 = arith.constant 8 : i32
    %383 = arith.muli %380, %c8_i32_106 : i32
    %384 = tpu.assume_multiple %383, 8 : i32
    %385 = arith.index_cast %382 : i32 to index
    %c0_107 = arith.constant 0 : index
    %386 = vector.load %arg10[%385, %c0_107] : memref<64x256xf32, #tpu.memory_space<vmem>>, vector<8x256xf32>
    %387 = arith.truncf %358 : vector<8x64xf32> to vector<8x64xbf16>
    %cst_108 = arith.constant dense<0.000000e+00> : vector<8x256xf32>
    %388 = tpu.matmul %387, %17, %cst_108 {dimension_numbers = #tpu.dot_dimension_numbers<[1], [0], [0], [1], [0, 0, 1, 1], [], []>} : vector<8x64xbf16>, vector<64x256xbf16>, vector<8x256xf32> -> vector<8x256xf32>
    %389 = arith.addf %386, %388 : vector<8x256xf32>
    %390 = arith.index_cast %384 : i32 to index
    %c0_109 = arith.constant 0 : index
    %391 = vector.load %arg11[%390, %c0_109] : memref<64x256xf32, #tpu.memory_space<vmem>>, vector<8x256xf32>
    %392 = arith.truncf %373 : vector<8x64xf32> to vector<8x64xbf16>
    %cst_110 = arith.constant dense<0.000000e+00> : vector<8x256xf32>
    %393 = tpu.matmul %392, %18, %cst_110 {dimension_numbers = #tpu.dot_dimension_numbers<[1], [0], [0], [1], [0, 0, 1, 1], [], []>} : vector<8x64xbf16>, vector<64x256xbf16>, vector<8x256xf32> -> vector<8x256xf32>
    %394 = arith.addf %391, %393 : vector<8x256xf32>
    %395 = arith.negf %389 : vector<8x256xf32>
    %396 = math.exp %395 : vector<8x256xf32>
    %cst_111 = arith.constant 1.000000e+00 : f32
    %397 = vector.broadcast %cst_111 : f32 to vector<8x256xf32>
    %398 = arith.addf %397, %396 : vector<8x256xf32>
    %399 = arith.divf %397, %398 : vector<8x256xf32>
    %400 = vector.extract_strided_slice %399 {offsets = [0, 0], sizes = [8, 64], strides = [1, 1]} : vector<8x256xf32> to vector<8x64xf32>
    %401 = vector.extract_strided_slice %399 {offsets = [0, 64], sizes = [8, 64], strides = [1, 1]} : vector<8x256xf32> to vector<8x64xf32>
    %402 = vector.extract_strided_slice %399 {offsets = [0, 192], sizes = [8, 64], strides = [1, 1]} : vector<8x256xf32> to vector<8x64xf32>
    %403 = vector.extract_strided_slice %389 {offsets = [0, 128], sizes = [8, 64], strides = [1, 1]} : vector<8x256xf32> to vector<8x64xf32>
    %404 = math.tanh %403 : vector<8x64xf32>
    %405 = arith.mulf %401, %356 : vector<8x64xf32>
    %406 = arith.mulf %400, %404 : vector<8x64xf32>
    %407 = arith.addf %405, %406 : vector<8x64xf32>
    %408 = math.tanh %407 : vector<8x64xf32>
    %409 = arith.mulf %402, %408 : vector<8x64xf32>
    %410 = arith.negf %394 : vector<8x256xf32>
    %411 = math.exp %410 : vector<8x256xf32>
    %cst_112 = arith.constant 1.000000e+00 : f32
    %412 = vector.broadcast %cst_112 : f32 to vector<8x256xf32>
    %413 = arith.addf %412, %411 : vector<8x256xf32>
    %414 = arith.divf %412, %413 : vector<8x256xf32>
    %415 = vector.extract_strided_slice %414 {offsets = [0, 0], sizes = [8, 64], strides = [1, 1]} : vector<8x256xf32> to vector<8x64xf32>
    %416 = vector.extract_strided_slice %414 {offsets = [0, 64], sizes = [8, 64], strides = [1, 1]} : vector<8x256xf32> to vector<8x64xf32>
    %417 = vector.extract_strided_slice %414 {offsets = [0, 192], sizes = [8, 64], strides = [1, 1]} : vector<8x256xf32> to vector<8x64xf32>
    %418 = vector.extract_strided_slice %394 {offsets = [0, 128], sizes = [8, 64], strides = [1, 1]} : vector<8x256xf32> to vector<8x64xf32>
    %419 = math.tanh %418 : vector<8x64xf32>
    %420 = arith.mulf %416, %371 : vector<8x64xf32>
    %421 = arith.mulf %415, %419 : vector<8x64xf32>
    %422 = arith.addf %420, %421 : vector<8x64xf32>
    %423 = math.tanh %422 : vector<8x64xf32>
    %424 = arith.mulf %417, %423 : vector<8x64xf32>
    %425 = arith.truncf %409 : vector<8x64xf32> to vector<8x64xbf16>
    %426 = arith.index_cast %382 : i32 to index
    %c0_113 = arith.constant 0 : index
    %427 = vector.load %arg8[%426, %c0_113] : memref<64x64xbf16, #tpu.memory_space<vmem>>, vector<8x64xbf16>
    tpu.vector_store %arg8[%426, %c0_113], %425 {strides = array<i32>} : memref<64x64xbf16, #tpu.memory_space<vmem>>, vector<8x64xbf16>,
    %428 = arith.truncf %424 : vector<8x64xf32> to vector<8x64xbf16>
    %429 = arith.index_cast %384 : i32 to index
    %c0_114 = arith.constant 0 : index
    %430 = vector.load %arg9[%429, %c0_114] : memref<64x64xbf16, #tpu.memory_space<vmem>>, vector<8x64xbf16>
    tpu.vector_store %arg9[%429, %c0_114], %428 {strides = array<i32>} : memref<64x64xbf16, #tpu.memory_space<vmem>>, vector<8x64xbf16>,
    %c8_i32_115 = arith.constant 8 : i32
    %c0_116 = arith.constant 0 : index
    %c0_117 = arith.constant 0 : index
    %431 = vector.load %arg12[%c0_116, %c0_117] : memref<8x64xf32, #tpu.memory_space<vmem>>, vector<8x64xf32>
    tpu.vector_store %arg12[%c0_116, %c0_117], %409 {strides = array<i32>} : memref<8x64xf32, #tpu.memory_space<vmem>>, vector<8x64xf32>,
    %c0_118 = arith.constant 0 : index
    %c0_119 = arith.constant 0 : index
    %432 = vector.load %arg13[%c0_118, %c0_119] : memref<8x64xf32, #tpu.memory_space<vmem>>, vector<8x64xf32>
    tpu.vector_store %arg13[%c0_118, %c0_119], %407 {strides = array<i32>} : memref<8x64xf32, #tpu.memory_space<vmem>>, vector<8x64xf32>,
    %c0_120 = arith.constant 0 : index
    %c0_121 = arith.constant 0 : index
    %433 = vector.load %arg14[%c0_120, %c0_121] : memref<8x64xf32, #tpu.memory_space<vmem>>, vector<8x64xf32>
    tpu.vector_store %arg14[%c0_120, %c0_121], %424 {strides = array<i32>} : memref<8x64xf32, #tpu.memory_space<vmem>>, vector<8x64xf32>,
    %c0_122 = arith.constant 0 : index
    %c0_123 = arith.constant 0 : index
    %434 = vector.load %arg15[%c0_122, %c0_123] : memref<8x64xf32, #tpu.memory_space<vmem>>, vector<8x64xf32>
    tpu.vector_store %arg15[%c0_122, %c0_123], %422 {strides = array<i32>} : memref<8x64xf32, #tpu.memory_space<vmem>>, vector<8x64xf32>,
    return
  }
  func.func @transform_0(%arg0: i32) -> (i32, i32) {
    %c0_i32 = arith.constant 0 : i32
    %c0_i32_0 = arith.constant 0 : i32
    return %arg0, %c0_i32 : i32, i32
  }
  func.func @transform_1(%arg0: i32) -> (i32, i32) {
    %c0_i32 = arith.constant 0 : i32
    %c0_i32_0 = arith.constant 0 : i32
    %c0_i32_1 = arith.constant 0 : i32
    return %c0_i32, %c0_i32_0 : i32, i32
  }
  func.func @transform_2(%arg0: i32) -> (i32, i32) {
    %c0_i32 = arith.constant 0 : i32
    %c0_i32_0 = arith.constant 0 : i32
    %c0_i32_1 = arith.constant 0 : i32
    return %c0_i32, %c0_i32_0 : i32, i32
  }
  func.func @transform_3(%arg0: i32) -> (i32, i32) {
    %c0_i32 = arith.constant 0 : i32
    %c0_i32_0 = arith.constant 0 : i32
    %c0_i32_1 = arith.constant 0 : i32
    return %c0_i32, %c0_i32_0 : i32, i32
  }
  func.func @transform_4(%arg0: i32) -> (i32, i32) {
    %c0_i32 = arith.constant 0 : i32
    %c0_i32_0 = arith.constant 0 : i32
    %c0_i32_1 = arith.constant 0 : i32
    return %c0_i32, %c0_i32_0 : i32, i32
  }
  func.func @transform_5(%arg0: i32) -> (i32, i32) {
    %c0_i32 = arith.constant 0 : i32
    %c0_i32_0 = arith.constant 0 : i32
    %c0_i32_1 = arith.constant 0 : i32
    return %c0_i32, %c0_i32_0 : i32, i32
  }
  func.func @transform_6(%arg0: i32) -> (i32, i32) {
    %c0_i32 = arith.constant 0 : i32
    %c0_i32_0 = arith.constant 0 : i32
    %c0_i32_1 = arith.constant 0 : i32
    return %c0_i32, %c0_i32_0 : i32, i32
  }
  func.func @transform_7(%arg0: i32) -> (i32, i32) {
    %c0_i32 = arith.constant 0 : i32
    %c0_i32_0 = arith.constant 0 : i32
    return %arg0, %c0_i32 : i32, i32
  }
  func.func @transform_8(%arg0: i32) -> (i32, i32) {
    %c0_i32 = arith.constant 0 : i32
    %0 = arith.subi %c0_i32, %arg0 : i32
    %c0_i32_0 = arith.constant 0 : i32
    %c0_i32_1 = arith.constant 0 : i32
    return %0, %c0_i32_0 : i32, i32
  }
}

module attributes {stable_mosaic.version = 11 : i64} {
  func.func @_fused_layer_kernel(%arg0: i32, %arg1: memref<64x64xbf16, #tpu.memory_space<vmem>>, %arg2: memref<64x64xbf16, #tpu.memory_space<vmem>>, %arg3: memref<64x256xbf16, #tpu.memory_space<vmem>>, %arg4: memref<64x256xbf16, #tpu.memory_space<vmem>>, %arg5: memref<64x256xbf16, #tpu.memory_space<vmem>>, %arg6: memref<64x256xbf16, #tpu.memory_space<vmem>>, %arg7: memref<1x256xf32, #tpu.memory_space<vmem>>, %arg8: memref<1x256xf32, #tpu.memory_space<vmem>>, %arg9: memref<64x256xbf16, #tpu.memory_space<vmem>>, %arg10: memref<64x256xbf16, #tpu.memory_space<vmem>>, %arg11: memref<64x128xbf16, #tpu.memory_space<vmem>>, %arg12: memref<64x128xbf16, #tpu.memory_space<vmem>>, %arg13: memref<1x128xf32, #tpu.memory_space<vmem>>, %arg14: memref<64x128xf32, #tpu.memory_space<vmem>>, %arg15: memref<64x256xf32, #tpu.memory_space<vmem>>, %arg16: memref<64x256xf32, #tpu.memory_space<vmem>>, %arg17: memref<8x64xf32, #tpu.memory_space<vmem>>, %arg18: memref<8x64xf32, #tpu.memory_space<vmem>>, %arg19: memref<8x64xf32, #tpu.memory_space<vmem>>, %arg20: memref<8x64xf32, #tpu.memory_space<vmem>>, %arg21: memref<64x64xf32, #tpu.memory_space<vmem>>, %arg22: memref<64x64xf32, #tpu.memory_space<vmem>>) attributes {dimension_semantics = [#tpu.dimension_semantics<arbitrary>], iteration_bounds = array<i64: 1>, scalar_prefetch = 0 : i64, scratch_operands = 8 : i64, tpu.core_type = #tpu.core_type<tc>, window_params = [{transform_indices = @transform_0, window_bounds = array<i64: 64, 64>}, {transform_indices = @transform_1, window_bounds = array<i64: 64, 64>}, {pipeline_mode = #tpu.pipeline_mode<synchronous>, transform_indices = @transform_2, window_bounds = array<i64: 64, 256>}, {pipeline_mode = #tpu.pipeline_mode<synchronous>, transform_indices = @transform_3, window_bounds = array<i64: 64, 256>}, {pipeline_mode = #tpu.pipeline_mode<synchronous>, transform_indices = @transform_4, window_bounds = array<i64: 64, 256>}, {pipeline_mode = #tpu.pipeline_mode<synchronous>, transform_indices = @transform_5, window_bounds = array<i64: 64, 256>}, {pipeline_mode = #tpu.pipeline_mode<synchronous>, transform_indices = @transform_6, window_bounds = array<i64: 1, 256>}, {pipeline_mode = #tpu.pipeline_mode<synchronous>, transform_indices = @transform_7, window_bounds = array<i64: 1, 256>}, {pipeline_mode = #tpu.pipeline_mode<synchronous>, transform_indices = @transform_8, window_bounds = array<i64: 64, 256>}, {pipeline_mode = #tpu.pipeline_mode<synchronous>, transform_indices = @transform_9, window_bounds = array<i64: 64, 256>}, {pipeline_mode = #tpu.pipeline_mode<synchronous>, transform_indices = @transform_10, window_bounds = array<i64: 64, 128>}, {pipeline_mode = #tpu.pipeline_mode<synchronous>, transform_indices = @transform_11, window_bounds = array<i64: 64, 128>}, {pipeline_mode = #tpu.pipeline_mode<synchronous>, transform_indices = @transform_12, window_bounds = array<i64: 1, 128>}, {transform_indices = @transform_13, window_bounds = array<i64: 64, 128>}]} {
    %c0_i32 = arith.constant 0 : i32
    %0 = arith.cmpi eq, %arg0, %c0_i32 : i32
    %1 = arith.extui %0 : i1 to i32
    %c0_i32_0 = arith.constant 0 : i32
    %2 = arith.cmpi ne, %1, %c0_i32_0 : i32
    scf.if %2 {
      %cst_146 = arith.constant 0.000000e+00 : f32
      %438 = vector.broadcast %cst_146 : f32 to vector<8x64xf32>
      %c0_147 = arith.constant 0 : index
      %c0_148 = arith.constant 0 : index
      %439 = vector.load %arg17[%c0_147, %c0_148] : memref<8x64xf32, #tpu.memory_space<vmem>>, vector<8x64xf32>
      tpu.vector_store %arg17[%c0_147, %c0_148], %438 {strides = array<i32>} : memref<8x64xf32, #tpu.memory_space<vmem>>, vector<8x64xf32>,
      %cst_149 = arith.constant 0.000000e+00 : f32
      %440 = vector.broadcast %cst_149 : f32 to vector<8x64xf32>
      %c0_150 = arith.constant 0 : index
      %c0_151 = arith.constant 0 : index
      %441 = vector.load %arg18[%c0_150, %c0_151] : memref<8x64xf32, #tpu.memory_space<vmem>>, vector<8x64xf32>
      tpu.vector_store %arg18[%c0_150, %c0_151], %440 {strides = array<i32>} : memref<8x64xf32, #tpu.memory_space<vmem>>, vector<8x64xf32>,
      %cst_152 = arith.constant 0.000000e+00 : f32
      %442 = vector.broadcast %cst_152 : f32 to vector<8x64xf32>
      %c0_153 = arith.constant 0 : index
      %c0_154 = arith.constant 0 : index
      %443 = vector.load %arg19[%c0_153, %c0_154] : memref<8x64xf32, #tpu.memory_space<vmem>>, vector<8x64xf32>
      tpu.vector_store %arg19[%c0_153, %c0_154], %442 {strides = array<i32>} : memref<8x64xf32, #tpu.memory_space<vmem>>, vector<8x64xf32>,
      %cst_155 = arith.constant 0.000000e+00 : f32
      %444 = vector.broadcast %cst_155 : f32 to vector<8x64xf32>
      %c0_156 = arith.constant 0 : index
      %c0_157 = arith.constant 0 : index
      %445 = vector.load %arg20[%c0_156, %c0_157] : memref<8x64xf32, #tpu.memory_space<vmem>>, vector<8x64xf32>
      tpu.vector_store %arg20[%c0_156, %c0_157], %444 {strides = array<i32>} : memref<8x64xf32, #tpu.memory_space<vmem>>, vector<8x64xf32>,
    } else {
    }
    %c0 = arith.constant 0 : index
    %c0_1 = arith.constant 0 : index
    %3 = vector.load %arg1[%c0, %c0_1] : memref<64x64xbf16, #tpu.memory_space<vmem>>, vector<64x64xbf16>
    %c0_2 = arith.constant 0 : index
    %c0_3 = arith.constant 0 : index
    %4 = vector.load %arg2[%c0_2, %c0_3] : memref<64x64xbf16, #tpu.memory_space<vmem>>, vector<64x64xbf16>
    %c0_4 = arith.constant 0 : index
    %c0_5 = arith.constant 0 : index
    %5 = vector.load %arg3[%c0_4, %c0_5] : memref<64x256xbf16, #tpu.memory_space<vmem>>, vector<64x256xbf16>
    %c0_6 = arith.constant 0 : index
    %c0_7 = arith.constant 0 : index
    %6 = vector.load %arg4[%c0_6, %c0_7] : memref<64x256xbf16, #tpu.memory_space<vmem>>, vector<64x256xbf16>
    %c0_8 = arith.constant 0 : index
    %c0_9 = arith.constant 0 : index
    %7 = vector.load %arg5[%c0_8, %c0_9] : memref<64x256xbf16, #tpu.memory_space<vmem>>, vector<64x256xbf16>
    %c0_10 = arith.constant 0 : index
    %c0_11 = arith.constant 0 : index
    %8 = vector.load %arg6[%c0_10, %c0_11] : memref<64x256xbf16, #tpu.memory_space<vmem>>, vector<64x256xbf16>
    %cst = arith.constant dense<0.000000e+00> : vector<64x256xf32>
    %9 = tpu.matmul %3, %5, %cst {dimension_numbers = #tpu.dot_dimension_numbers<[1], [0], [0], [1], [0, 0, 1, 1], [], []>} : vector<64x64xbf16>, vector<64x256xbf16>, vector<64x256xf32> -> vector<64x256xf32>
    %cst_12 = arith.constant dense<0.000000e+00> : vector<64x256xf32>
    %10 = tpu.matmul %4, %6, %cst_12 {dimension_numbers = #tpu.dot_dimension_numbers<[1], [0], [0], [1], [0, 0, 1, 1], [], []>} : vector<64x64xbf16>, vector<64x256xbf16>, vector<64x256xf32> -> vector<64x256xf32>
    %11 = arith.addf %9, %10 : vector<64x256xf32>
    %c0_13 = arith.constant 0 : index
    %c0_14 = arith.constant 0 : index
    %12 = vector.load %arg7[%c0_13, %c0_14] : memref<1x256xf32, #tpu.memory_space<vmem>>, vector<1x256xf32>
    %13 = vector.broadcast %12 : vector<1x256xf32> to vector<64x256xf32>
    %14 = arith.addf %11, %13 : vector<64x256xf32>
    %cst_15 = arith.constant dense<0.000000e+00> : vector<64x256xf32>
    %15 = tpu.matmul %3, %7, %cst_15 {dimension_numbers = #tpu.dot_dimension_numbers<[1], [0], [0], [1], [0, 0, 1, 1], [], []>} : vector<64x64xbf16>, vector<64x256xbf16>, vector<64x256xf32> -> vector<64x256xf32>
    %cst_16 = arith.constant dense<0.000000e+00> : vector<64x256xf32>
    %16 = tpu.matmul %4, %8, %cst_16 {dimension_numbers = #tpu.dot_dimension_numbers<[1], [0], [0], [1], [0, 0, 1, 1], [], []>} : vector<64x64xbf16>, vector<64x256xbf16>, vector<64x256xf32> -> vector<64x256xf32>
    %17 = arith.addf %15, %16 : vector<64x256xf32>
    %c0_17 = arith.constant 0 : index
    %c0_18 = arith.constant 0 : index
    %18 = vector.load %arg8[%c0_17, %c0_18] : memref<1x256xf32, #tpu.memory_space<vmem>>, vector<1x256xf32>
    %19 = vector.broadcast %18 : vector<1x256xf32> to vector<64x256xf32>
    %20 = arith.addf %17, %19 : vector<64x256xf32>
    %c0_19 = arith.constant 0 : index
    %c0_20 = arith.constant 0 : index
    %21 = vector.load %arg15[%c0_19, %c0_20] : memref<64x256xf32, #tpu.memory_space<vmem>>, vector<64x256xf32>
    tpu.vector_store %arg15[%c0_19, %c0_20], %14 {strides = array<i32>} : memref<64x256xf32, #tpu.memory_space<vmem>>, vector<64x256xf32>,
    %c0_21 = arith.constant 0 : index
    %c0_22 = arith.constant 0 : index
    %22 = vector.load %arg16[%c0_21, %c0_22] : memref<64x256xf32, #tpu.memory_space<vmem>>, vector<64x256xf32>
    tpu.vector_store %arg16[%c0_21, %c0_22], %20 {strides = array<i32>} : memref<64x256xf32, #tpu.memory_space<vmem>>, vector<64x256xf32>,
    %c0_23 = arith.constant 0 : index
    %c0_24 = arith.constant 0 : index
    %23 = vector.load %arg9[%c0_23, %c0_24] : memref<64x256xbf16, #tpu.memory_space<vmem>>, vector<64x256xbf16>
    %c0_25 = arith.constant 0 : index
    %c0_26 = arith.constant 0 : index
    %24 = vector.load %arg10[%c0_25, %c0_26] : memref<64x256xbf16, #tpu.memory_space<vmem>>, vector<64x256xbf16>
    %c0_27 = arith.constant 0 : index
    %c0_28 = arith.constant 0 : index
    %25 = vector.load %arg17[%c0_27, %c0_28] : memref<8x64xf32, #tpu.memory_space<vmem>>, vector<8x64xf32>
    %c0_29 = arith.constant 0 : index
    %c0_30 = arith.constant 0 : index
    %26 = vector.load %arg18[%c0_29, %c0_30] : memref<8x64xf32, #tpu.memory_space<vmem>>, vector<8x64xf32>
    %c0_31 = arith.constant 0 : index
    %c0_32 = arith.constant 0 : index
    %27 = vector.load %arg19[%c0_31, %c0_32] : memref<8x64xf32, #tpu.memory_space<vmem>>, vector<8x64xf32>
    %c0_33 = arith.constant 0 : index
    %c0_34 = arith.constant 0 : index
    %28 = vector.load %arg20[%c0_33, %c0_34] : memref<8x64xf32, #tpu.memory_space<vmem>>, vector<8x64xf32>
    %c0_i32_35 = arith.constant 0 : i32
    %c7_i32 = arith.constant 7 : i32
    %29 = arith.subi %c7_i32, %c0_i32_35 : i32
    %c8_i32 = arith.constant 8 : i32
    %30 = arith.muli %c0_i32_35, %c8_i32 : i32
    %31 = tpu.assume_multiple %30, 8 : i32
    %c8_i32_36 = arith.constant 8 : i32
    %32 = arith.muli %29, %c8_i32_36 : i32
    %33 = tpu.assume_multiple %32, 8 : i32
    %34 = arith.index_cast %31 : i32 to index
    %c0_37 = arith.constant 0 : index
    %35 = vector.load %arg15[%34, %c0_37] : memref<64x256xf32, #tpu.memory_space<vmem>>, vector<8x256xf32>
    %36 = arith.truncf %25 : vector<8x64xf32> to vector<8x64xbf16>
    %cst_38 = arith.constant dense<0.000000e+00> : vector<8x256xf32>
    %37 = tpu.matmul %36, %23, %cst_38 {dimension_numbers = #tpu.dot_dimension_numbers<[1], [0], [0], [1], [0, 0, 1, 1], [], []>} : vector<8x64xbf16>, vector<64x256xbf16>, vector<8x256xf32> -> vector<8x256xf32>
    %38 = arith.addf %35, %37 : vector<8x256xf32>
    %39 = arith.index_cast %33 : i32 to index
    %c0_39 = arith.constant 0 : index
    %40 = vector.load %arg16[%39, %c0_39] : memref<64x256xf32, #tpu.memory_space<vmem>>, vector<8x256xf32>
    %41 = arith.truncf %27 : vector<8x64xf32> to vector<8x64xbf16>
    %cst_40 = arith.constant dense<0.000000e+00> : vector<8x256xf32>
    %42 = tpu.matmul %41, %24, %cst_40 {dimension_numbers = #tpu.dot_dimension_numbers<[1], [0], [0], [1], [0, 0, 1, 1], [], []>} : vector<8x64xbf16>, vector<64x256xbf16>, vector<8x256xf32> -> vector<8x256xf32>
    %43 = arith.addf %40, %42 : vector<8x256xf32>
    %44 = arith.negf %38 : vector<8x256xf32>
    %45 = math.exp %44 : vector<8x256xf32>
    %cst_41 = arith.constant 1.000000e+00 : f32
    %46 = vector.broadcast %cst_41 : f32 to vector<8x256xf32>
    %47 = arith.addf %46, %45 : vector<8x256xf32>
    %48 = arith.divf %46, %47 : vector<8x256xf32>
    %49 = vector.extract_strided_slice %48 {offsets = [0, 0], sizes = [8, 64], strides = [1, 1]} : vector<8x256xf32> to vector<8x64xf32>
    %50 = vector.extract_strided_slice %48 {offsets = [0, 64], sizes = [8, 64], strides = [1, 1]} : vector<8x256xf32> to vector<8x64xf32>
    %51 = vector.extract_strided_slice %48 {offsets = [0, 192], sizes = [8, 64], strides = [1, 1]} : vector<8x256xf32> to vector<8x64xf32>
    %52 = vector.extract_strided_slice %38 {offsets = [0, 128], sizes = [8, 64], strides = [1, 1]} : vector<8x256xf32> to vector<8x64xf32>
    %53 = math.tanh %52 : vector<8x64xf32>
    %54 = arith.mulf %50, %26 : vector<8x64xf32>
    %55 = arith.mulf %49, %53 : vector<8x64xf32>
    %56 = arith.addf %54, %55 : vector<8x64xf32>
    %57 = math.tanh %56 : vector<8x64xf32>
    %58 = arith.mulf %51, %57 : vector<8x64xf32>
    %59 = arith.negf %43 : vector<8x256xf32>
    %60 = math.exp %59 : vector<8x256xf32>
    %cst_42 = arith.constant 1.000000e+00 : f32
    %61 = vector.broadcast %cst_42 : f32 to vector<8x256xf32>
    %62 = arith.addf %61, %60 : vector<8x256xf32>
    %63 = arith.divf %61, %62 : vector<8x256xf32>
    %64 = vector.extract_strided_slice %63 {offsets = [0, 0], sizes = [8, 64], strides = [1, 1]} : vector<8x256xf32> to vector<8x64xf32>
    %65 = vector.extract_strided_slice %63 {offsets = [0, 64], sizes = [8, 64], strides = [1, 1]} : vector<8x256xf32> to vector<8x64xf32>
    %66 = vector.extract_strided_slice %63 {offsets = [0, 192], sizes = [8, 64], strides = [1, 1]} : vector<8x256xf32> to vector<8x64xf32>
    %67 = vector.extract_strided_slice %43 {offsets = [0, 128], sizes = [8, 64], strides = [1, 1]} : vector<8x256xf32> to vector<8x64xf32>
    %68 = math.tanh %67 : vector<8x64xf32>
    %69 = arith.mulf %65, %28 : vector<8x64xf32>
    %70 = arith.mulf %64, %68 : vector<8x64xf32>
    %71 = arith.addf %69, %70 : vector<8x64xf32>
    %72 = math.tanh %71 : vector<8x64xf32>
    %73 = arith.mulf %66, %72 : vector<8x64xf32>
    %74 = arith.index_cast %31 : i32 to index
    %c0_43 = arith.constant 0 : index
    %75 = vector.load %arg21[%74, %c0_43] : memref<64x64xf32, #tpu.memory_space<vmem>>, vector<8x64xf32>
    tpu.vector_store %arg21[%74, %c0_43], %58 {strides = array<i32>} : memref<64x64xf32, #tpu.memory_space<vmem>>, vector<8x64xf32>,
    %76 = arith.index_cast %33 : i32 to index
    %c0_44 = arith.constant 0 : index
    %77 = vector.load %arg22[%76, %c0_44] : memref<64x64xf32, #tpu.memory_space<vmem>>, vector<8x64xf32>
    tpu.vector_store %arg22[%76, %c0_44], %73 {strides = array<i32>} : memref<64x64xf32, #tpu.memory_space<vmem>>, vector<8x64xf32>,
    %c1_i32 = arith.constant 1 : i32
    %c7_i32_45 = arith.constant 7 : i32
    %78 = arith.subi %c7_i32_45, %c1_i32 : i32
    %c8_i32_46 = arith.constant 8 : i32
    %79 = arith.muli %c1_i32, %c8_i32_46 : i32
    %80 = tpu.assume_multiple %79, 8 : i32
    %c8_i32_47 = arith.constant 8 : i32
    %81 = arith.muli %78, %c8_i32_47 : i32
    %82 = tpu.assume_multiple %81, 8 : i32
    %83 = arith.index_cast %80 : i32 to index
    %c0_48 = arith.constant 0 : index
    %84 = vector.load %arg15[%83, %c0_48] : memref<64x256xf32, #tpu.memory_space<vmem>>, vector<8x256xf32>
    %85 = arith.truncf %58 : vector<8x64xf32> to vector<8x64xbf16>
    %cst_49 = arith.constant dense<0.000000e+00> : vector<8x256xf32>
    %86 = tpu.matmul %85, %23, %cst_49 {dimension_numbers = #tpu.dot_dimension_numbers<[1], [0], [0], [1], [0, 0, 1, 1], [], []>} : vector<8x64xbf16>, vector<64x256xbf16>, vector<8x256xf32> -> vector<8x256xf32>
    %87 = arith.addf %84, %86 : vector<8x256xf32>
    %88 = arith.index_cast %82 : i32 to index
    %c0_50 = arith.constant 0 : index
    %89 = vector.load %arg16[%88, %c0_50] : memref<64x256xf32, #tpu.memory_space<vmem>>, vector<8x256xf32>
    %90 = arith.truncf %73 : vector<8x64xf32> to vector<8x64xbf16>
    %cst_51 = arith.constant dense<0.000000e+00> : vector<8x256xf32>
    %91 = tpu.matmul %90, %24, %cst_51 {dimension_numbers = #tpu.dot_dimension_numbers<[1], [0], [0], [1], [0, 0, 1, 1], [], []>} : vector<8x64xbf16>, vector<64x256xbf16>, vector<8x256xf32> -> vector<8x256xf32>
    %92 = arith.addf %89, %91 : vector<8x256xf32>
    %93 = arith.negf %87 : vector<8x256xf32>
    %94 = math.exp %93 : vector<8x256xf32>
    %cst_52 = arith.constant 1.000000e+00 : f32
    %95 = vector.broadcast %cst_52 : f32 to vector<8x256xf32>
    %96 = arith.addf %95, %94 : vector<8x256xf32>
    %97 = arith.divf %95, %96 : vector<8x256xf32>
    %98 = vector.extract_strided_slice %97 {offsets = [0, 0], sizes = [8, 64], strides = [1, 1]} : vector<8x256xf32> to vector<8x64xf32>
    %99 = vector.extract_strided_slice %97 {offsets = [0, 64], sizes = [8, 64], strides = [1, 1]} : vector<8x256xf32> to vector<8x64xf32>
    %100 = vector.extract_strided_slice %97 {offsets = [0, 192], sizes = [8, 64], strides = [1, 1]} : vector<8x256xf32> to vector<8x64xf32>
    %101 = vector.extract_strided_slice %87 {offsets = [0, 128], sizes = [8, 64], strides = [1, 1]} : vector<8x256xf32> to vector<8x64xf32>
    %102 = math.tanh %101 : vector<8x64xf32>
    %103 = arith.mulf %99, %56 : vector<8x64xf32>
    %104 = arith.mulf %98, %102 : vector<8x64xf32>
    %105 = arith.addf %103, %104 : vector<8x64xf32>
    %106 = math.tanh %105 : vector<8x64xf32>
    %107 = arith.mulf %100, %106 : vector<8x64xf32>
    %108 = arith.negf %92 : vector<8x256xf32>
    %109 = math.exp %108 : vector<8x256xf32>
    %cst_53 = arith.constant 1.000000e+00 : f32
    %110 = vector.broadcast %cst_53 : f32 to vector<8x256xf32>
    %111 = arith.addf %110, %109 : vector<8x256xf32>
    %112 = arith.divf %110, %111 : vector<8x256xf32>
    %113 = vector.extract_strided_slice %112 {offsets = [0, 0], sizes = [8, 64], strides = [1, 1]} : vector<8x256xf32> to vector<8x64xf32>
    %114 = vector.extract_strided_slice %112 {offsets = [0, 64], sizes = [8, 64], strides = [1, 1]} : vector<8x256xf32> to vector<8x64xf32>
    %115 = vector.extract_strided_slice %112 {offsets = [0, 192], sizes = [8, 64], strides = [1, 1]} : vector<8x256xf32> to vector<8x64xf32>
    %116 = vector.extract_strided_slice %92 {offsets = [0, 128], sizes = [8, 64], strides = [1, 1]} : vector<8x256xf32> to vector<8x64xf32>
    %117 = math.tanh %116 : vector<8x64xf32>
    %118 = arith.mulf %114, %71 : vector<8x64xf32>
    %119 = arith.mulf %113, %117 : vector<8x64xf32>
    %120 = arith.addf %118, %119 : vector<8x64xf32>
    %121 = math.tanh %120 : vector<8x64xf32>
    %122 = arith.mulf %115, %121 : vector<8x64xf32>
    %123 = arith.index_cast %80 : i32 to index
    %c0_54 = arith.constant 0 : index
    %124 = vector.load %arg21[%123, %c0_54] : memref<64x64xf32, #tpu.memory_space<vmem>>, vector<8x64xf32>
    tpu.vector_store %arg21[%123, %c0_54], %107 {strides = array<i32>} : memref<64x64xf32, #tpu.memory_space<vmem>>, vector<8x64xf32>,
    %125 = arith.index_cast %82 : i32 to index
    %c0_55 = arith.constant 0 : index
    %126 = vector.load %arg22[%125, %c0_55] : memref<64x64xf32, #tpu.memory_space<vmem>>, vector<8x64xf32>
    tpu.vector_store %arg22[%125, %c0_55], %122 {strides = array<i32>} : memref<64x64xf32, #tpu.memory_space<vmem>>, vector<8x64xf32>,
    %c2_i32 = arith.constant 2 : i32
    %c7_i32_56 = arith.constant 7 : i32
    %127 = arith.subi %c7_i32_56, %c2_i32 : i32
    %c8_i32_57 = arith.constant 8 : i32
    %128 = arith.muli %c2_i32, %c8_i32_57 : i32
    %129 = tpu.assume_multiple %128, 8 : i32
    %c8_i32_58 = arith.constant 8 : i32
    %130 = arith.muli %127, %c8_i32_58 : i32
    %131 = tpu.assume_multiple %130, 8 : i32
    %132 = arith.index_cast %129 : i32 to index
    %c0_59 = arith.constant 0 : index
    %133 = vector.load %arg15[%132, %c0_59] : memref<64x256xf32, #tpu.memory_space<vmem>>, vector<8x256xf32>
    %134 = arith.truncf %107 : vector<8x64xf32> to vector<8x64xbf16>
    %cst_60 = arith.constant dense<0.000000e+00> : vector<8x256xf32>
    %135 = tpu.matmul %134, %23, %cst_60 {dimension_numbers = #tpu.dot_dimension_numbers<[1], [0], [0], [1], [0, 0, 1, 1], [], []>} : vector<8x64xbf16>, vector<64x256xbf16>, vector<8x256xf32> -> vector<8x256xf32>
    %136 = arith.addf %133, %135 : vector<8x256xf32>
    %137 = arith.index_cast %131 : i32 to index
    %c0_61 = arith.constant 0 : index
    %138 = vector.load %arg16[%137, %c0_61] : memref<64x256xf32, #tpu.memory_space<vmem>>, vector<8x256xf32>
    %139 = arith.truncf %122 : vector<8x64xf32> to vector<8x64xbf16>
    %cst_62 = arith.constant dense<0.000000e+00> : vector<8x256xf32>
    %140 = tpu.matmul %139, %24, %cst_62 {dimension_numbers = #tpu.dot_dimension_numbers<[1], [0], [0], [1], [0, 0, 1, 1], [], []>} : vector<8x64xbf16>, vector<64x256xbf16>, vector<8x256xf32> -> vector<8x256xf32>
    %141 = arith.addf %138, %140 : vector<8x256xf32>
    %142 = arith.negf %136 : vector<8x256xf32>
    %143 = math.exp %142 : vector<8x256xf32>
    %cst_63 = arith.constant 1.000000e+00 : f32
    %144 = vector.broadcast %cst_63 : f32 to vector<8x256xf32>
    %145 = arith.addf %144, %143 : vector<8x256xf32>
    %146 = arith.divf %144, %145 : vector<8x256xf32>
    %147 = vector.extract_strided_slice %146 {offsets = [0, 0], sizes = [8, 64], strides = [1, 1]} : vector<8x256xf32> to vector<8x64xf32>
    %148 = vector.extract_strided_slice %146 {offsets = [0, 64], sizes = [8, 64], strides = [1, 1]} : vector<8x256xf32> to vector<8x64xf32>
    %149 = vector.extract_strided_slice %146 {offsets = [0, 192], sizes = [8, 64], strides = [1, 1]} : vector<8x256xf32> to vector<8x64xf32>
    %150 = vector.extract_strided_slice %136 {offsets = [0, 128], sizes = [8, 64], strides = [1, 1]} : vector<8x256xf32> to vector<8x64xf32>
    %151 = math.tanh %150 : vector<8x64xf32>
    %152 = arith.mulf %148, %105 : vector<8x64xf32>
    %153 = arith.mulf %147, %151 : vector<8x64xf32>
    %154 = arith.addf %152, %153 : vector<8x64xf32>
    %155 = math.tanh %154 : vector<8x64xf32>
    %156 = arith.mulf %149, %155 : vector<8x64xf32>
    %157 = arith.negf %141 : vector<8x256xf32>
    %158 = math.exp %157 : vector<8x256xf32>
    %cst_64 = arith.constant 1.000000e+00 : f32
    %159 = vector.broadcast %cst_64 : f32 to vector<8x256xf32>
    %160 = arith.addf %159, %158 : vector<8x256xf32>
    %161 = arith.divf %159, %160 : vector<8x256xf32>
    %162 = vector.extract_strided_slice %161 {offsets = [0, 0], sizes = [8, 64], strides = [1, 1]} : vector<8x256xf32> to vector<8x64xf32>
    %163 = vector.extract_strided_slice %161 {offsets = [0, 64], sizes = [8, 64], strides = [1, 1]} : vector<8x256xf32> to vector<8x64xf32>
    %164 = vector.extract_strided_slice %161 {offsets = [0, 192], sizes = [8, 64], strides = [1, 1]} : vector<8x256xf32> to vector<8x64xf32>
    %165 = vector.extract_strided_slice %141 {offsets = [0, 128], sizes = [8, 64], strides = [1, 1]} : vector<8x256xf32> to vector<8x64xf32>
    %166 = math.tanh %165 : vector<8x64xf32>
    %167 = arith.mulf %163, %120 : vector<8x64xf32>
    %168 = arith.mulf %162, %166 : vector<8x64xf32>
    %169 = arith.addf %167, %168 : vector<8x64xf32>
    %170 = math.tanh %169 : vector<8x64xf32>
    %171 = arith.mulf %164, %170 : vector<8x64xf32>
    %172 = arith.index_cast %129 : i32 to index
    %c0_65 = arith.constant 0 : index
    %173 = vector.load %arg21[%172, %c0_65] : memref<64x64xf32, #tpu.memory_space<vmem>>, vector<8x64xf32>
    tpu.vector_store %arg21[%172, %c0_65], %156 {strides = array<i32>} : memref<64x64xf32, #tpu.memory_space<vmem>>, vector<8x64xf32>,
    %174 = arith.index_cast %131 : i32 to index
    %c0_66 = arith.constant 0 : index
    %175 = vector.load %arg22[%174, %c0_66] : memref<64x64xf32, #tpu.memory_space<vmem>>, vector<8x64xf32>
    tpu.vector_store %arg22[%174, %c0_66], %171 {strides = array<i32>} : memref<64x64xf32, #tpu.memory_space<vmem>>, vector<8x64xf32>,
    %c3_i32 = arith.constant 3 : i32
    %c7_i32_67 = arith.constant 7 : i32
    %176 = arith.subi %c7_i32_67, %c3_i32 : i32
    %c8_i32_68 = arith.constant 8 : i32
    %177 = arith.muli %c3_i32, %c8_i32_68 : i32
    %178 = tpu.assume_multiple %177, 8 : i32
    %c8_i32_69 = arith.constant 8 : i32
    %179 = arith.muli %176, %c8_i32_69 : i32
    %180 = tpu.assume_multiple %179, 8 : i32
    %181 = arith.index_cast %178 : i32 to index
    %c0_70 = arith.constant 0 : index
    %182 = vector.load %arg15[%181, %c0_70] : memref<64x256xf32, #tpu.memory_space<vmem>>, vector<8x256xf32>
    %183 = arith.truncf %156 : vector<8x64xf32> to vector<8x64xbf16>
    %cst_71 = arith.constant dense<0.000000e+00> : vector<8x256xf32>
    %184 = tpu.matmul %183, %23, %cst_71 {dimension_numbers = #tpu.dot_dimension_numbers<[1], [0], [0], [1], [0, 0, 1, 1], [], []>} : vector<8x64xbf16>, vector<64x256xbf16>, vector<8x256xf32> -> vector<8x256xf32>
    %185 = arith.addf %182, %184 : vector<8x256xf32>
    %186 = arith.index_cast %180 : i32 to index
    %c0_72 = arith.constant 0 : index
    %187 = vector.load %arg16[%186, %c0_72] : memref<64x256xf32, #tpu.memory_space<vmem>>, vector<8x256xf32>
    %188 = arith.truncf %171 : vector<8x64xf32> to vector<8x64xbf16>
    %cst_73 = arith.constant dense<0.000000e+00> : vector<8x256xf32>
    %189 = tpu.matmul %188, %24, %cst_73 {dimension_numbers = #tpu.dot_dimension_numbers<[1], [0], [0], [1], [0, 0, 1, 1], [], []>} : vector<8x64xbf16>, vector<64x256xbf16>, vector<8x256xf32> -> vector<8x256xf32>
    %190 = arith.addf %187, %189 : vector<8x256xf32>
    %191 = arith.negf %185 : vector<8x256xf32>
    %192 = math.exp %191 : vector<8x256xf32>
    %cst_74 = arith.constant 1.000000e+00 : f32
    %193 = vector.broadcast %cst_74 : f32 to vector<8x256xf32>
    %194 = arith.addf %193, %192 : vector<8x256xf32>
    %195 = arith.divf %193, %194 : vector<8x256xf32>
    %196 = vector.extract_strided_slice %195 {offsets = [0, 0], sizes = [8, 64], strides = [1, 1]} : vector<8x256xf32> to vector<8x64xf32>
    %197 = vector.extract_strided_slice %195 {offsets = [0, 64], sizes = [8, 64], strides = [1, 1]} : vector<8x256xf32> to vector<8x64xf32>
    %198 = vector.extract_strided_slice %195 {offsets = [0, 192], sizes = [8, 64], strides = [1, 1]} : vector<8x256xf32> to vector<8x64xf32>
    %199 = vector.extract_strided_slice %185 {offsets = [0, 128], sizes = [8, 64], strides = [1, 1]} : vector<8x256xf32> to vector<8x64xf32>
    %200 = math.tanh %199 : vector<8x64xf32>
    %201 = arith.mulf %197, %154 : vector<8x64xf32>
    %202 = arith.mulf %196, %200 : vector<8x64xf32>
    %203 = arith.addf %201, %202 : vector<8x64xf32>
    %204 = math.tanh %203 : vector<8x64xf32>
    %205 = arith.mulf %198, %204 : vector<8x64xf32>
    %206 = arith.negf %190 : vector<8x256xf32>
    %207 = math.exp %206 : vector<8x256xf32>
    %cst_75 = arith.constant 1.000000e+00 : f32
    %208 = vector.broadcast %cst_75 : f32 to vector<8x256xf32>
    %209 = arith.addf %208, %207 : vector<8x256xf32>
    %210 = arith.divf %208, %209 : vector<8x256xf32>
    %211 = vector.extract_strided_slice %210 {offsets = [0, 0], sizes = [8, 64], strides = [1, 1]} : vector<8x256xf32> to vector<8x64xf32>
    %212 = vector.extract_strided_slice %210 {offsets = [0, 64], sizes = [8, 64], strides = [1, 1]} : vector<8x256xf32> to vector<8x64xf32>
    %213 = vector.extract_strided_slice %210 {offsets = [0, 192], sizes = [8, 64], strides = [1, 1]} : vector<8x256xf32> to vector<8x64xf32>
    %214 = vector.extract_strided_slice %190 {offsets = [0, 128], sizes = [8, 64], strides = [1, 1]} : vector<8x256xf32> to vector<8x64xf32>
    %215 = math.tanh %214 : vector<8x64xf32>
    %216 = arith.mulf %212, %169 : vector<8x64xf32>
    %217 = arith.mulf %211, %215 : vector<8x64xf32>
    %218 = arith.addf %216, %217 : vector<8x64xf32>
    %219 = math.tanh %218 : vector<8x64xf32>
    %220 = arith.mulf %213, %219 : vector<8x64xf32>
    %221 = arith.index_cast %178 : i32 to index
    %c0_76 = arith.constant 0 : index
    %222 = vector.load %arg21[%221, %c0_76] : memref<64x64xf32, #tpu.memory_space<vmem>>, vector<8x64xf32>
    tpu.vector_store %arg21[%221, %c0_76], %205 {strides = array<i32>} : memref<64x64xf32, #tpu.memory_space<vmem>>, vector<8x64xf32>,
    %223 = arith.index_cast %180 : i32 to index
    %c0_77 = arith.constant 0 : index
    %224 = vector.load %arg22[%223, %c0_77] : memref<64x64xf32, #tpu.memory_space<vmem>>, vector<8x64xf32>
    tpu.vector_store %arg22[%223, %c0_77], %220 {strides = array<i32>} : memref<64x64xf32, #tpu.memory_space<vmem>>, vector<8x64xf32>,
    %c4_i32 = arith.constant 4 : i32
    %c7_i32_78 = arith.constant 7 : i32
    %225 = arith.subi %c7_i32_78, %c4_i32 : i32
    %c8_i32_79 = arith.constant 8 : i32
    %226 = arith.muli %c4_i32, %c8_i32_79 : i32
    %227 = tpu.assume_multiple %226, 8 : i32
    %c8_i32_80 = arith.constant 8 : i32
    %228 = arith.muli %225, %c8_i32_80 : i32
    %229 = tpu.assume_multiple %228, 8 : i32
    %230 = arith.index_cast %227 : i32 to index
    %c0_81 = arith.constant 0 : index
    %231 = vector.load %arg15[%230, %c0_81] : memref<64x256xf32, #tpu.memory_space<vmem>>, vector<8x256xf32>
    %232 = arith.truncf %205 : vector<8x64xf32> to vector<8x64xbf16>
    %cst_82 = arith.constant dense<0.000000e+00> : vector<8x256xf32>
    %233 = tpu.matmul %232, %23, %cst_82 {dimension_numbers = #tpu.dot_dimension_numbers<[1], [0], [0], [1], [0, 0, 1, 1], [], []>} : vector<8x64xbf16>, vector<64x256xbf16>, vector<8x256xf32> -> vector<8x256xf32>
    %234 = arith.addf %231, %233 : vector<8x256xf32>
    %235 = arith.index_cast %229 : i32 to index
    %c0_83 = arith.constant 0 : index
    %236 = vector.load %arg16[%235, %c0_83] : memref<64x256xf32, #tpu.memory_space<vmem>>, vector<8x256xf32>
    %237 = arith.truncf %220 : vector<8x64xf32> to vector<8x64xbf16>
    %cst_84 = arith.constant dense<0.000000e+00> : vector<8x256xf32>
    %238 = tpu.matmul %237, %24, %cst_84 {dimension_numbers = #tpu.dot_dimension_numbers<[1], [0], [0], [1], [0, 0, 1, 1], [], []>} : vector<8x64xbf16>, vector<64x256xbf16>, vector<8x256xf32> -> vector<8x256xf32>
    %239 = arith.addf %236, %238 : vector<8x256xf32>
    %240 = arith.negf %234 : vector<8x256xf32>
    %241 = math.exp %240 : vector<8x256xf32>
    %cst_85 = arith.constant 1.000000e+00 : f32
    %242 = vector.broadcast %cst_85 : f32 to vector<8x256xf32>
    %243 = arith.addf %242, %241 : vector<8x256xf32>
    %244 = arith.divf %242, %243 : vector<8x256xf32>
    %245 = vector.extract_strided_slice %244 {offsets = [0, 0], sizes = [8, 64], strides = [1, 1]} : vector<8x256xf32> to vector<8x64xf32>
    %246 = vector.extract_strided_slice %244 {offsets = [0, 64], sizes = [8, 64], strides = [1, 1]} : vector<8x256xf32> to vector<8x64xf32>
    %247 = vector.extract_strided_slice %244 {offsets = [0, 192], sizes = [8, 64], strides = [1, 1]} : vector<8x256xf32> to vector<8x64xf32>
    %248 = vector.extract_strided_slice %234 {offsets = [0, 128], sizes = [8, 64], strides = [1, 1]} : vector<8x256xf32> to vector<8x64xf32>
    %249 = math.tanh %248 : vector<8x64xf32>
    %250 = arith.mulf %246, %203 : vector<8x64xf32>
    %251 = arith.mulf %245, %249 : vector<8x64xf32>
    %252 = arith.addf %250, %251 : vector<8x64xf32>
    %253 = math.tanh %252 : vector<8x64xf32>
    %254 = arith.mulf %247, %253 : vector<8x64xf32>
    %255 = arith.negf %239 : vector<8x256xf32>
    %256 = math.exp %255 : vector<8x256xf32>
    %cst_86 = arith.constant 1.000000e+00 : f32
    %257 = vector.broadcast %cst_86 : f32 to vector<8x256xf32>
    %258 = arith.addf %257, %256 : vector<8x256xf32>
    %259 = arith.divf %257, %258 : vector<8x256xf32>
    %260 = vector.extract_strided_slice %259 {offsets = [0, 0], sizes = [8, 64], strides = [1, 1]} : vector<8x256xf32> to vector<8x64xf32>
    %261 = vector.extract_strided_slice %259 {offsets = [0, 64], sizes = [8, 64], strides = [1, 1]} : vector<8x256xf32> to vector<8x64xf32>
    %262 = vector.extract_strided_slice %259 {offsets = [0, 192], sizes = [8, 64], strides = [1, 1]} : vector<8x256xf32> to vector<8x64xf32>
    %263 = vector.extract_strided_slice %239 {offsets = [0, 128], sizes = [8, 64], strides = [1, 1]} : vector<8x256xf32> to vector<8x64xf32>
    %264 = math.tanh %263 : vector<8x64xf32>
    %265 = arith.mulf %261, %218 : vector<8x64xf32>
    %266 = arith.mulf %260, %264 : vector<8x64xf32>
    %267 = arith.addf %265, %266 : vector<8x64xf32>
    %268 = math.tanh %267 : vector<8x64xf32>
    %269 = arith.mulf %262, %268 : vector<8x64xf32>
    %270 = arith.index_cast %227 : i32 to index
    %c0_87 = arith.constant 0 : index
    %271 = vector.load %arg21[%270, %c0_87] : memref<64x64xf32, #tpu.memory_space<vmem>>, vector<8x64xf32>
    tpu.vector_store %arg21[%270, %c0_87], %254 {strides = array<i32>} : memref<64x64xf32, #tpu.memory_space<vmem>>, vector<8x64xf32>,
    %272 = arith.index_cast %229 : i32 to index
    %c0_88 = arith.constant 0 : index
    %273 = vector.load %arg22[%272, %c0_88] : memref<64x64xf32, #tpu.memory_space<vmem>>, vector<8x64xf32>
    tpu.vector_store %arg22[%272, %c0_88], %269 {strides = array<i32>} : memref<64x64xf32, #tpu.memory_space<vmem>>, vector<8x64xf32>,
    %c5_i32 = arith.constant 5 : i32
    %c7_i32_89 = arith.constant 7 : i32
    %274 = arith.subi %c7_i32_89, %c5_i32 : i32
    %c8_i32_90 = arith.constant 8 : i32
    %275 = arith.muli %c5_i32, %c8_i32_90 : i32
    %276 = tpu.assume_multiple %275, 8 : i32
    %c8_i32_91 = arith.constant 8 : i32
    %277 = arith.muli %274, %c8_i32_91 : i32
    %278 = tpu.assume_multiple %277, 8 : i32
    %279 = arith.index_cast %276 : i32 to index
    %c0_92 = arith.constant 0 : index
    %280 = vector.load %arg15[%279, %c0_92] : memref<64x256xf32, #tpu.memory_space<vmem>>, vector<8x256xf32>
    %281 = arith.truncf %254 : vector<8x64xf32> to vector<8x64xbf16>
    %cst_93 = arith.constant dense<0.000000e+00> : vector<8x256xf32>
    %282 = tpu.matmul %281, %23, %cst_93 {dimension_numbers = #tpu.dot_dimension_numbers<[1], [0], [0], [1], [0, 0, 1, 1], [], []>} : vector<8x64xbf16>, vector<64x256xbf16>, vector<8x256xf32> -> vector<8x256xf32>
    %283 = arith.addf %280, %282 : vector<8x256xf32>
    %284 = arith.index_cast %278 : i32 to index
    %c0_94 = arith.constant 0 : index
    %285 = vector.load %arg16[%284, %c0_94] : memref<64x256xf32, #tpu.memory_space<vmem>>, vector<8x256xf32>
    %286 = arith.truncf %269 : vector<8x64xf32> to vector<8x64xbf16>
    %cst_95 = arith.constant dense<0.000000e+00> : vector<8x256xf32>
    %287 = tpu.matmul %286, %24, %cst_95 {dimension_numbers = #tpu.dot_dimension_numbers<[1], [0], [0], [1], [0, 0, 1, 1], [], []>} : vector<8x64xbf16>, vector<64x256xbf16>, vector<8x256xf32> -> vector<8x256xf32>
    %288 = arith.addf %285, %287 : vector<8x256xf32>
    %289 = arith.negf %283 : vector<8x256xf32>
    %290 = math.exp %289 : vector<8x256xf32>
    %cst_96 = arith.constant 1.000000e+00 : f32
    %291 = vector.broadcast %cst_96 : f32 to vector<8x256xf32>
    %292 = arith.addf %291, %290 : vector<8x256xf32>
    %293 = arith.divf %291, %292 : vector<8x256xf32>
    %294 = vector.extract_strided_slice %293 {offsets = [0, 0], sizes = [8, 64], strides = [1, 1]} : vector<8x256xf32> to vector<8x64xf32>
    %295 = vector.extract_strided_slice %293 {offsets = [0, 64], sizes = [8, 64], strides = [1, 1]} : vector<8x256xf32> to vector<8x64xf32>
    %296 = vector.extract_strided_slice %293 {offsets = [0, 192], sizes = [8, 64], strides = [1, 1]} : vector<8x256xf32> to vector<8x64xf32>
    %297 = vector.extract_strided_slice %283 {offsets = [0, 128], sizes = [8, 64], strides = [1, 1]} : vector<8x256xf32> to vector<8x64xf32>
    %298 = math.tanh %297 : vector<8x64xf32>
    %299 = arith.mulf %295, %252 : vector<8x64xf32>
    %300 = arith.mulf %294, %298 : vector<8x64xf32>
    %301 = arith.addf %299, %300 : vector<8x64xf32>
    %302 = math.tanh %301 : vector<8x64xf32>
    %303 = arith.mulf %296, %302 : vector<8x64xf32>
    %304 = arith.negf %288 : vector<8x256xf32>
    %305 = math.exp %304 : vector<8x256xf32>
    %cst_97 = arith.constant 1.000000e+00 : f32
    %306 = vector.broadcast %cst_97 : f32 to vector<8x256xf32>
    %307 = arith.addf %306, %305 : vector<8x256xf32>
    %308 = arith.divf %306, %307 : vector<8x256xf32>
    %309 = vector.extract_strided_slice %308 {offsets = [0, 0], sizes = [8, 64], strides = [1, 1]} : vector<8x256xf32> to vector<8x64xf32>
    %310 = vector.extract_strided_slice %308 {offsets = [0, 64], sizes = [8, 64], strides = [1, 1]} : vector<8x256xf32> to vector<8x64xf32>
    %311 = vector.extract_strided_slice %308 {offsets = [0, 192], sizes = [8, 64], strides = [1, 1]} : vector<8x256xf32> to vector<8x64xf32>
    %312 = vector.extract_strided_slice %288 {offsets = [0, 128], sizes = [8, 64], strides = [1, 1]} : vector<8x256xf32> to vector<8x64xf32>
    %313 = math.tanh %312 : vector<8x64xf32>
    %314 = arith.mulf %310, %267 : vector<8x64xf32>
    %315 = arith.mulf %309, %313 : vector<8x64xf32>
    %316 = arith.addf %314, %315 : vector<8x64xf32>
    %317 = math.tanh %316 : vector<8x64xf32>
    %318 = arith.mulf %311, %317 : vector<8x64xf32>
    %319 = arith.index_cast %276 : i32 to index
    %c0_98 = arith.constant 0 : index
    %320 = vector.load %arg21[%319, %c0_98] : memref<64x64xf32, #tpu.memory_space<vmem>>, vector<8x64xf32>
    tpu.vector_store %arg21[%319, %c0_98], %303 {strides = array<i32>} : memref<64x64xf32, #tpu.memory_space<vmem>>, vector<8x64xf32>,
    %321 = arith.index_cast %278 : i32 to index
    %c0_99 = arith.constant 0 : index
    %322 = vector.load %arg22[%321, %c0_99] : memref<64x64xf32, #tpu.memory_space<vmem>>, vector<8x64xf32>
    tpu.vector_store %arg22[%321, %c0_99], %318 {strides = array<i32>} : memref<64x64xf32, #tpu.memory_space<vmem>>, vector<8x64xf32>,
    %c6_i32 = arith.constant 6 : i32
    %c7_i32_100 = arith.constant 7 : i32
    %323 = arith.subi %c7_i32_100, %c6_i32 : i32
    %c8_i32_101 = arith.constant 8 : i32
    %324 = arith.muli %c6_i32, %c8_i32_101 : i32
    %325 = tpu.assume_multiple %324, 8 : i32
    %c8_i32_102 = arith.constant 8 : i32
    %326 = arith.muli %323, %c8_i32_102 : i32
    %327 = tpu.assume_multiple %326, 8 : i32
    %328 = arith.index_cast %325 : i32 to index
    %c0_103 = arith.constant 0 : index
    %329 = vector.load %arg15[%328, %c0_103] : memref<64x256xf32, #tpu.memory_space<vmem>>, vector<8x256xf32>
    %330 = arith.truncf %303 : vector<8x64xf32> to vector<8x64xbf16>
    %cst_104 = arith.constant dense<0.000000e+00> : vector<8x256xf32>
    %331 = tpu.matmul %330, %23, %cst_104 {dimension_numbers = #tpu.dot_dimension_numbers<[1], [0], [0], [1], [0, 0, 1, 1], [], []>} : vector<8x64xbf16>, vector<64x256xbf16>, vector<8x256xf32> -> vector<8x256xf32>
    %332 = arith.addf %329, %331 : vector<8x256xf32>
    %333 = arith.index_cast %327 : i32 to index
    %c0_105 = arith.constant 0 : index
    %334 = vector.load %arg16[%333, %c0_105] : memref<64x256xf32, #tpu.memory_space<vmem>>, vector<8x256xf32>
    %335 = arith.truncf %318 : vector<8x64xf32> to vector<8x64xbf16>
    %cst_106 = arith.constant dense<0.000000e+00> : vector<8x256xf32>
    %336 = tpu.matmul %335, %24, %cst_106 {dimension_numbers = #tpu.dot_dimension_numbers<[1], [0], [0], [1], [0, 0, 1, 1], [], []>} : vector<8x64xbf16>, vector<64x256xbf16>, vector<8x256xf32> -> vector<8x256xf32>
    %337 = arith.addf %334, %336 : vector<8x256xf32>
    %338 = arith.negf %332 : vector<8x256xf32>
    %339 = math.exp %338 : vector<8x256xf32>
    %cst_107 = arith.constant 1.000000e+00 : f32
    %340 = vector.broadcast %cst_107 : f32 to vector<8x256xf32>
    %341 = arith.addf %340, %339 : vector<8x256xf32>
    %342 = arith.divf %340, %341 : vector<8x256xf32>
    %343 = vector.extract_strided_slice %342 {offsets = [0, 0], sizes = [8, 64], strides = [1, 1]} : vector<8x256xf32> to vector<8x64xf32>
    %344 = vector.extract_strided_slice %342 {offsets = [0, 64], sizes = [8, 64], strides = [1, 1]} : vector<8x256xf32> to vector<8x64xf32>
    %345 = vector.extract_strided_slice %342 {offsets = [0, 192], sizes = [8, 64], strides = [1, 1]} : vector<8x256xf32> to vector<8x64xf32>
    %346 = vector.extract_strided_slice %332 {offsets = [0, 128], sizes = [8, 64], strides = [1, 1]} : vector<8x256xf32> to vector<8x64xf32>
    %347 = math.tanh %346 : vector<8x64xf32>
    %348 = arith.mulf %344, %301 : vector<8x64xf32>
    %349 = arith.mulf %343, %347 : vector<8x64xf32>
    %350 = arith.addf %348, %349 : vector<8x64xf32>
    %351 = math.tanh %350 : vector<8x64xf32>
    %352 = arith.mulf %345, %351 : vector<8x64xf32>
    %353 = arith.negf %337 : vector<8x256xf32>
    %354 = math.exp %353 : vector<8x256xf32>
    %cst_108 = arith.constant 1.000000e+00 : f32
    %355 = vector.broadcast %cst_108 : f32 to vector<8x256xf32>
    %356 = arith.addf %355, %354 : vector<8x256xf32>
    %357 = arith.divf %355, %356 : vector<8x256xf32>
    %358 = vector.extract_strided_slice %357 {offsets = [0, 0], sizes = [8, 64], strides = [1, 1]} : vector<8x256xf32> to vector<8x64xf32>
    %359 = vector.extract_strided_slice %357 {offsets = [0, 64], sizes = [8, 64], strides = [1, 1]} : vector<8x256xf32> to vector<8x64xf32>
    %360 = vector.extract_strided_slice %357 {offsets = [0, 192], sizes = [8, 64], strides = [1, 1]} : vector<8x256xf32> to vector<8x64xf32>
    %361 = vector.extract_strided_slice %337 {offsets = [0, 128], sizes = [8, 64], strides = [1, 1]} : vector<8x256xf32> to vector<8x64xf32>
    %362 = math.tanh %361 : vector<8x64xf32>
    %363 = arith.mulf %359, %316 : vector<8x64xf32>
    %364 = arith.mulf %358, %362 : vector<8x64xf32>
    %365 = arith.addf %363, %364 : vector<8x64xf32>
    %366 = math.tanh %365 : vector<8x64xf32>
    %367 = arith.mulf %360, %366 : vector<8x64xf32>
    %368 = arith.index_cast %325 : i32 to index
    %c0_109 = arith.constant 0 : index
    %369 = vector.load %arg21[%368, %c0_109] : memref<64x64xf32, #tpu.memory_space<vmem>>, vector<8x64xf32>
    tpu.vector_store %arg21[%368, %c0_109], %352 {strides = array<i32>} : memref<64x64xf32, #tpu.memory_space<vmem>>, vector<8x64xf32>,
    %370 = arith.index_cast %327 : i32 to index
    %c0_110 = arith.constant 0 : index
    %371 = vector.load %arg22[%370, %c0_110] : memref<64x64xf32, #tpu.memory_space<vmem>>, vector<8x64xf32>
    tpu.vector_store %arg22[%370, %c0_110], %367 {strides = array<i32>} : memref<64x64xf32, #tpu.memory_space<vmem>>, vector<8x64xf32>,
    %c7_i32_111 = arith.constant 7 : i32
    %c7_i32_112 = arith.constant 7 : i32
    %372 = arith.subi %c7_i32_112, %c7_i32_111 : i32
    %c8_i32_113 = arith.constant 8 : i32
    %373 = arith.muli %c7_i32_111, %c8_i32_113 : i32
    %374 = tpu.assume_multiple %373, 8 : i32
    %c8_i32_114 = arith.constant 8 : i32
    %375 = arith.muli %372, %c8_i32_114 : i32
    %376 = tpu.assume_multiple %375, 8 : i32
    %377 = arith.index_cast %374 : i32 to index
    %c0_115 = arith.constant 0 : index
    %378 = vector.load %arg15[%377, %c0_115] : memref<64x256xf32, #tpu.memory_space<vmem>>, vector<8x256xf32>
    %379 = arith.truncf %352 : vector<8x64xf32> to vector<8x64xbf16>
    %cst_116 = arith.constant dense<0.000000e+00> : vector<8x256xf32>
    %380 = tpu.matmul %379, %23, %cst_116 {dimension_numbers = #tpu.dot_dimension_numbers<[1], [0], [0], [1], [0, 0, 1, 1], [], []>} : vector<8x64xbf16>, vector<64x256xbf16>, vector<8x256xf32> -> vector<8x256xf32>
    %381 = arith.addf %378, %380 : vector<8x256xf32>
    %382 = arith.index_cast %376 : i32 to index
    %c0_117 = arith.constant 0 : index
    %383 = vector.load %arg16[%382, %c0_117] : memref<64x256xf32, #tpu.memory_space<vmem>>, vector<8x256xf32>
    %384 = arith.truncf %367 : vector<8x64xf32> to vector<8x64xbf16>
    %cst_118 = arith.constant dense<0.000000e+00> : vector<8x256xf32>
    %385 = tpu.matmul %384, %24, %cst_118 {dimension_numbers = #tpu.dot_dimension_numbers<[1], [0], [0], [1], [0, 0, 1, 1], [], []>} : vector<8x64xbf16>, vector<64x256xbf16>, vector<8x256xf32> -> vector<8x256xf32>
    %386 = arith.addf %383, %385 : vector<8x256xf32>
    %387 = arith.negf %381 : vector<8x256xf32>
    %388 = math.exp %387 : vector<8x256xf32>
    %cst_119 = arith.constant 1.000000e+00 : f32
    %389 = vector.broadcast %cst_119 : f32 to vector<8x256xf32>
    %390 = arith.addf %389, %388 : vector<8x256xf32>
    %391 = arith.divf %389, %390 : vector<8x256xf32>
    %392 = vector.extract_strided_slice %391 {offsets = [0, 0], sizes = [8, 64], strides = [1, 1]} : vector<8x256xf32> to vector<8x64xf32>
    %393 = vector.extract_strided_slice %391 {offsets = [0, 64], sizes = [8, 64], strides = [1, 1]} : vector<8x256xf32> to vector<8x64xf32>
    %394 = vector.extract_strided_slice %391 {offsets = [0, 192], sizes = [8, 64], strides = [1, 1]} : vector<8x256xf32> to vector<8x64xf32>
    %395 = vector.extract_strided_slice %381 {offsets = [0, 128], sizes = [8, 64], strides = [1, 1]} : vector<8x256xf32> to vector<8x64xf32>
    %396 = math.tanh %395 : vector<8x64xf32>
    %397 = arith.mulf %393, %350 : vector<8x64xf32>
    %398 = arith.mulf %392, %396 : vector<8x64xf32>
    %399 = arith.addf %397, %398 : vector<8x64xf32>
    %400 = math.tanh %399 : vector<8x64xf32>
    %401 = arith.mulf %394, %400 : vector<8x64xf32>
    %402 = arith.negf %386 : vector<8x256xf32>
    %403 = math.exp %402 : vector<8x256xf32>
    %cst_120 = arith.constant 1.000000e+00 : f32
    %404 = vector.broadcast %cst_120 : f32 to vector<8x256xf32>
    %405 = arith.addf %404, %403 : vector<8x256xf32>
    %406 = arith.divf %404, %405 : vector<8x256xf32>
    %407 = vector.extract_strided_slice %406 {offsets = [0, 0], sizes = [8, 64], strides = [1, 1]} : vector<8x256xf32> to vector<8x64xf32>
    %408 = vector.extract_strided_slice %406 {offsets = [0, 64], sizes = [8, 64], strides = [1, 1]} : vector<8x256xf32> to vector<8x64xf32>
    %409 = vector.extract_strided_slice %406 {offsets = [0, 192], sizes = [8, 64], strides = [1, 1]} : vector<8x256xf32> to vector<8x64xf32>
    %410 = vector.extract_strided_slice %386 {offsets = [0, 128], sizes = [8, 64], strides = [1, 1]} : vector<8x256xf32> to vector<8x64xf32>
    %411 = math.tanh %410 : vector<8x64xf32>
    %412 = arith.mulf %408, %365 : vector<8x64xf32>
    %413 = arith.mulf %407, %411 : vector<8x64xf32>
    %414 = arith.addf %412, %413 : vector<8x64xf32>
    %415 = math.tanh %414 : vector<8x64xf32>
    %416 = arith.mulf %409, %415 : vector<8x64xf32>
    %417 = arith.index_cast %374 : i32 to index
    %c0_121 = arith.constant 0 : index
    %418 = vector.load %arg21[%417, %c0_121] : memref<64x64xf32, #tpu.memory_space<vmem>>, vector<8x64xf32>
    tpu.vector_store %arg21[%417, %c0_121], %401 {strides = array<i32>} : memref<64x64xf32, #tpu.memory_space<vmem>>, vector<8x64xf32>,
    %419 = arith.index_cast %376 : i32 to index
    %c0_122 = arith.constant 0 : index
    %420 = vector.load %arg22[%419, %c0_122] : memref<64x64xf32, #tpu.memory_space<vmem>>, vector<8x64xf32>
    tpu.vector_store %arg22[%419, %c0_122], %416 {strides = array<i32>} : memref<64x64xf32, #tpu.memory_space<vmem>>, vector<8x64xf32>,
    %c8_i32_123 = arith.constant 8 : i32
    %c0_124 = arith.constant 0 : index
    %c0_125 = arith.constant 0 : index
    %421 = vector.load %arg17[%c0_124, %c0_125] : memref<8x64xf32, #tpu.memory_space<vmem>>, vector<8x64xf32>
    tpu.vector_store %arg17[%c0_124, %c0_125], %401 {strides = array<i32>} : memref<8x64xf32, #tpu.memory_space<vmem>>, vector<8x64xf32>,
    %c0_126 = arith.constant 0 : index
    %c0_127 = arith.constant 0 : index
    %422 = vector.load %arg18[%c0_126, %c0_127] : memref<8x64xf32, #tpu.memory_space<vmem>>, vector<8x64xf32>
    tpu.vector_store %arg18[%c0_126, %c0_127], %399 {strides = array<i32>} : memref<8x64xf32, #tpu.memory_space<vmem>>, vector<8x64xf32>,
    %c0_128 = arith.constant 0 : index
    %c0_129 = arith.constant 0 : index
    %423 = vector.load %arg19[%c0_128, %c0_129] : memref<8x64xf32, #tpu.memory_space<vmem>>, vector<8x64xf32>
    tpu.vector_store %arg19[%c0_128, %c0_129], %416 {strides = array<i32>} : memref<8x64xf32, #tpu.memory_space<vmem>>, vector<8x64xf32>,
    %c0_130 = arith.constant 0 : index
    %c0_131 = arith.constant 0 : index
    %424 = vector.load %arg20[%c0_130, %c0_131] : memref<8x64xf32, #tpu.memory_space<vmem>>, vector<8x64xf32>
    tpu.vector_store %arg20[%c0_130, %c0_131], %414 {strides = array<i32>} : memref<8x64xf32, #tpu.memory_space<vmem>>, vector<8x64xf32>,
    %c0_132 = arith.constant 0 : index
    %c0_133 = arith.constant 0 : index
    %425 = vector.load %arg21[%c0_132, %c0_133] : memref<64x64xf32, #tpu.memory_space<vmem>>, vector<64x64xf32>
    %426 = arith.truncf %425 : vector<64x64xf32> to vector<64x64xbf16>
    %c0_134 = arith.constant 0 : index
    %c0_135 = arith.constant 0 : index
    %427 = vector.load %arg22[%c0_134, %c0_135] : memref<64x64xf32, #tpu.memory_space<vmem>>, vector<64x64xf32>
    %428 = arith.truncf %427 : vector<64x64xf32> to vector<64x64xbf16>
    %c0_136 = arith.constant 0 : index
    %c0_137 = arith.constant 0 : index
    %429 = vector.load %arg11[%c0_136, %c0_137] : memref<64x128xbf16, #tpu.memory_space<vmem>>, vector<64x128xbf16>
    %cst_138 = arith.constant dense<0.000000e+00> : vector<64x128xf32>
    %430 = tpu.matmul %426, %429, %cst_138 {dimension_numbers = #tpu.dot_dimension_numbers<[1], [0], [0], [1], [0, 0, 1, 1], [], []>} : vector<64x64xbf16>, vector<64x128xbf16>, vector<64x128xf32> -> vector<64x128xf32>
    %c0_139 = arith.constant 0 : index
    %c0_140 = arith.constant 0 : index
    %431 = vector.load %arg12[%c0_139, %c0_140] : memref<64x128xbf16, #tpu.memory_space<vmem>>, vector<64x128xbf16>
    %cst_141 = arith.constant dense<0.000000e+00> : vector<64x128xf32>
    %432 = tpu.matmul %428, %431, %cst_141 {dimension_numbers = #tpu.dot_dimension_numbers<[1], [0], [0], [1], [0, 0, 1, 1], [], []>} : vector<64x64xbf16>, vector<64x128xbf16>, vector<64x128xf32> -> vector<64x128xf32>
    %433 = arith.addf %430, %432 : vector<64x128xf32>
    %c0_142 = arith.constant 0 : index
    %c0_143 = arith.constant 0 : index
    %434 = vector.load %arg13[%c0_142, %c0_143] : memref<1x128xf32, #tpu.memory_space<vmem>>, vector<1x128xf32>
    %435 = vector.broadcast %434 : vector<1x128xf32> to vector<64x128xf32>
    %436 = arith.addf %433, %435 : vector<64x128xf32>
    %c0_144 = arith.constant 0 : index
    %c0_145 = arith.constant 0 : index
    %437 = vector.load %arg14[%c0_144, %c0_145] : memref<64x128xf32, #tpu.memory_space<vmem>>, vector<64x128xf32>
    tpu.vector_store %arg14[%c0_144, %c0_145], %436 {strides = array<i32>} : memref<64x128xf32, #tpu.memory_space<vmem>>, vector<64x128xf32>,
    return
  }
  func.func @transform_0(%arg0: i32) -> (i32, i32) {
    %c0_i32 = arith.constant 0 : i32
    %c0_i32_0 = arith.constant 0 : i32
    return %arg0, %c0_i32 : i32, i32
  }
  func.func @transform_1(%arg0: i32) -> (i32, i32) {
    %c0_i32 = arith.constant 0 : i32
    %c0_i32_0 = arith.constant 0 : i32
    return %arg0, %c0_i32 : i32, i32
  }
  func.func @transform_2(%arg0: i32) -> (i32, i32) {
    %c0_i32 = arith.constant 0 : i32
    %c0_i32_0 = arith.constant 0 : i32
    %c0_i32_1 = arith.constant 0 : i32
    return %c0_i32, %c0_i32_0 : i32, i32
  }
  func.func @transform_3(%arg0: i32) -> (i32, i32) {
    %c0_i32 = arith.constant 0 : i32
    %c0_i32_0 = arith.constant 0 : i32
    %c0_i32_1 = arith.constant 0 : i32
    return %c0_i32, %c0_i32_0 : i32, i32
  }
  func.func @transform_4(%arg0: i32) -> (i32, i32) {
    %c0_i32 = arith.constant 0 : i32
    %c0_i32_0 = arith.constant 0 : i32
    %c0_i32_1 = arith.constant 0 : i32
    return %c0_i32, %c0_i32_0 : i32, i32
  }
  func.func @transform_5(%arg0: i32) -> (i32, i32) {
    %c0_i32 = arith.constant 0 : i32
    %c0_i32_0 = arith.constant 0 : i32
    %c0_i32_1 = arith.constant 0 : i32
    return %c0_i32, %c0_i32_0 : i32, i32
  }
  func.func @transform_6(%arg0: i32) -> (i32, i32) {
    %c0_i32 = arith.constant 0 : i32
    %c0_i32_0 = arith.constant 0 : i32
    %c0_i32_1 = arith.constant 0 : i32
    return %c0_i32, %c0_i32_0 : i32, i32
  }
  func.func @transform_7(%arg0: i32) -> (i32, i32) {
    %c0_i32 = arith.constant 0 : i32
    %c0_i32_0 = arith.constant 0 : i32
    %c0_i32_1 = arith.constant 0 : i32
    return %c0_i32, %c0_i32_0 : i32, i32
  }
  func.func @transform_8(%arg0: i32) -> (i32, i32) {
    %c0_i32 = arith.constant 0 : i32
    %c0_i32_0 = arith.constant 0 : i32
    %c0_i32_1 = arith.constant 0 : i32
    return %c0_i32, %c0_i32_0 : i32, i32
  }
  func.func @transform_9(%arg0: i32) -> (i32, i32) {
    %c0_i32 = arith.constant 0 : i32
    %c0_i32_0 = arith.constant 0 : i32
    %c0_i32_1 = arith.constant 0 : i32
    return %c0_i32, %c0_i32_0 : i32, i32
  }
  func.func @transform_10(%arg0: i32) -> (i32, i32) {
    %c0_i32 = arith.constant 0 : i32
    %c0_i32_0 = arith.constant 0 : i32
    %c0_i32_1 = arith.constant 0 : i32
    return %c0_i32, %c0_i32_0 : i32, i32
  }
  func.func @transform_11(%arg0: i32) -> (i32, i32) {
    %c0_i32 = arith.constant 0 : i32
    %c0_i32_0 = arith.constant 0 : i32
    %c0_i32_1 = arith.constant 0 : i32
    return %c0_i32, %c0_i32_0 : i32, i32
  }
  func.func @transform_12(%arg0: i32) -> (i32, i32) {
    %c0_i32 = arith.constant 0 : i32
    %c0_i32_0 = arith.constant 0 : i32
    %c0_i32_1 = arith.constant 0 : i32
    return %c0_i32, %c0_i32_0 : i32, i32
  }
  func.func @transform_13(%arg0: i32) -> (i32, i32) {
    %c0_i32 = arith.constant 0 : i32
    %c0_i32_0 = arith.constant 0 : i32
    return %arg0, %c0_i32 : i32, i32
  }
}

</mosaic_0001>

<llo_original>
// kernel: video_regression_forward.2
$region0: #{video_regression_forward.2}
  #allocation0 [shape = 'u32[]', space=smem, size = 0x4, offset = 0x4, fixed_abs, tag = 'smem constant byte address 0x4 - core index']
  #allocation1 [shape = 'u32[144,128]{1,0:T(1,128)}', space=vmem, size = 0x12000, scoped, tag = 'internal scratch']
  #allocation2 [shape = 'f32[64,256]{1,0:T(8,128)}', space=vmem, size = 0x10000, scoped, tag = 'scratch operand']
  #allocation3 [shape = 'f32[64,256]{1,0:T(8,128)}', space=vmem, size = 0x10000, scoped, tag = 'scratch operand']
  #allocation4 [shape = 'f32[8,64]{1,0:T(8,128)}', space=vmem, size = 0x1000, scoped, tag = 'scratch operand']
  #allocation5 [shape = 'f32[8,64]{1,0:T(8,128)}', space=vmem, size = 0x1000, scoped, tag = 'scratch operand']
  #allocation6 [shape = 'f32[8,64]{1,0:T(8,128)}', space=vmem, size = 0x1000, scoped, tag = 'scratch operand']
  #allocation7 [shape = 'f32[8,64]{1,0:T(8,128)}', space=vmem, size = 0x1000, scoped, tag = 'scratch operand']
  %s0 = inlined_call_operand.vmem [shape: f32[64,128], index: 0, kind: input, shape index: {}]
  %s1 = inlined_call_operand.vmem [shape: bf16[128,256], index: 1, kind: input, shape index: {}]
  %s2 = inlined_call_operand.vmem [shape: bf16[128,256], index: 2, kind: input, shape index: {}]
  %s3 = inlined_call_operand.vmem [shape: f32[1,256], index: 3, kind: input, shape index: {}]
  %s4 = inlined_call_operand.hbm [shape: f32[1,256], index: 4, kind: input, shape index: {}]
  %s5 = inlined_call_operand.hbm [shape: bf16[64,256], index: 5, kind: input, shape index: {}]
  %s6 = inlined_call_operand.hbm [shape: bf16[64,256], index: 6, kind: input, shape index: {}]
  %s7 = inlined_call_operand.vmem [shape: bf16[64,64], index: 7, kind: output, shape index: {0}]
  %s8 = inlined_call_operand.vmem [shape: bf16[64,64], index: 8, kind: output, shape index: {1}]
  %9 = xla_tuple %s7, %s8
  %s10 = sld [smem:[#allocation0]]
  $region62: #{video_regression_forward.2} parent=0
    _
  %s12 = ssub.s32 1, %s10
  %s13 = scalar_select 0, %s12, %s10
  $region1: #{video_regression_forward.2} parent=0
    #allocation8 [shape = 'u8[1024]{0}', space=vmem, size = 0x400, scoped, tag = 'input window, operand 4, single buffered']
    #allocation9 [shape = 's32[1]{0}', space=sflag, size = 0x4, scoped, tag = 'scoped memory for video_regression_forward.2']
    #allocation10 [shape = 'u8[32768]{0}', space=vmem, size = 0x8000, scoped, tag = 'input window, operand 5, single buffered']
    #allocation11 [shape = 's32[1]{0}', space=sflag, size = 0x4, scoped, tag = 'scoped memory for video_regression_forward.2']
    #allocation12 [shape = 'u8[32768]{0}', space=vmem, size = 0x8000, scoped, tag = 'input window, operand 6, single buffered']
    %14 = vsyncpa [#allocation9], 0
    %15 = vsyncpa [#allocation11], 0
    // Predicated region
    $region2: #{video_regression_forward.2} parent=1 // pred_check
      _
    $region3: #{video_regression_forward.2} parent=1 // pred_check_branch
      %17 = sbr.rel (0) target = $region5
    $region4: #{video_regression_forward.2} parent=1 // pred_region
      _
    $region5: #{video_regression_forward.2} parent=1 // pred_fallthru
      _
    // Predicated region
    $region6: #{video_regression_forward.2} parent=1 // pred_check
      _
    $region7: #{video_regression_forward.2} parent=1 // pred_check_branch
      %19 = sbr.rel (0) target = $region9
    $region8: #{video_regression_forward.2} parent=1 // pred_region
      _
    $region9: #{video_regression_forward.2} parent=1 // pred_fallthru
      _
    // Predicated region
    $region10: #{video_regression_forward.2} parent=1 // pred_check
      _
    $region11: #{video_regression_forward.2} parent=1 // pred_check_branch
      %21 = sbr.rel (0) target = $region13
    $region12: #{video_regression_forward.2} parent=1 // pred_region
      _
    $region13: #{video_regression_forward.2} parent=1 // pred_fallthru
      _
    // Predicated region
    $region14: #{video_regression_forward.2} parent=1 // pred_check
      _
    $region15: #{video_regression_forward.2} parent=1 // pred_check_branch
      %23 = sbr.rel (0) target = $region17
    $region16: #{video_regression_forward.2} parent=1 // pred_region
      _
    $region17: #{video_regression_forward.2} parent=1 // pred_fallthru
      _
    // Predicated region
    $region18: #{video_regression_forward.2} parent=1 // pred_check
      _
    $region19: #{video_regression_forward.2} parent=1 // pred_check_branch
      %25 = sbr.rel (0) target = $region21
    $region20: #{video_regression_forward.2} parent=1 // pred_region
      %s27 = ssub.s32 32, 32
      %28 = vsyncadd [#allocation9], %s27
      %s30 = sshll.u32 [#allocation8], 4
      %s31 = int_to_ptr.vmem [resolvable:$true] %s30
      %33 = dma.hbm_to_vmem [thread:$0]  %s4, 32, %s31, [#allocation9]
    $region21: #{video_regression_forward.2} parent=1 // pred_fallthru
      _
    // Predicated region
    $region22: #{video_regression_forward.2} parent=1 // pred_check
      _
    $region23: #{video_regression_forward.2} parent=1 // pred_check_branch
      %35 = sbr.rel (0) target = $region25
    $region24: #{video_regression_forward.2} parent=1 // pred_region
      %s37 = ssub.s32 1024, 1024
      %38 = vsyncadd [#allocation11], %s37
      %s39 = sshll.u32 [#allocation10], 4
      %s40 = int_to_ptr.vmem [resolvable:$true] %s39
      %45 = dma.hbm_to_vmem [thread:$0]  %s5, 1024, %s40, [#allocation11], 128, 128, 8
    $region25: #{video_regression_forward.2} parent=1 // pred_fallthru
      _
    // Predicated region
    $region26: #{video_regression_forward.2} parent=1 // pred_check
      _
    $region27: #{video_regression_forward.2} parent=1 // pred_check_branch
      %47 = sbr.rel (0) target = $region29
    $region28: #{video_regression_forward.2} parent=1 // pred_region
      %s49 = ssub.s32 1024, 1024
      %50 = vsyncadd [#allocation11], %s49
      %s51 = sshll.u32 [#allocation12], 4
      %s52 = int_to_ptr.vmem [resolvable:$true] %s51
      %57 = dma.hbm_to_vmem [thread:$0]  %s6, 1024, %s52, [#allocation11], 128, 128, 8
    $region29: #{video_regression_forward.2} parent=1 // pred_fallthru
      _
    // Predicated region
    $region30: #{video_regression_forward.2} parent=1 // pred_check
      _
    $region31: #{video_regression_forward.2} parent=1 // pred_check_branch
      %59 = sbr.rel (0) target = $region33
    $region32: #{video_regression_forward.2} parent=1 // pred_region
      %60 = dma.done [#allocation9], 32
    $region33: #{video_regression_forward.2} parent=1 // pred_fallthru
      _
    // Predicated region
    $region34: #{video_regression_forward.2} parent=1 // pred_check
      _
    $region35: #{video_regression_forward.2} parent=1 // pred_check_branch
      %62 = sbr.rel (0) target = $region37
    $region36: #{video_regression_forward.2} parent=1 // pred_region
      %63 = dma.done [#allocation11], 1024
    $region37: #{video_regression_forward.2} parent=1 // pred_fallthru
      _
    // Predicated region
    $region38: #{video_regression_forward.2} parent=1 // pred_check
      _
    $region39: #{video_regression_forward.2} parent=1 // pred_check_branch
      %65 = sbr.rel (0) target = $region41
    $region40: #{video_regression_forward.2} parent=1 // pred_region
      %66 = dma.done [#allocation11], 1024
    $region41: #{video_regression_forward.2} parent=1 // pred_fallthru
      _
    %s67 = ssub.s32 0, 0
    %s68 = smul.u32 8, %s67
    %p69 = scmp.lt.s32.totalorder %s68, 7
    %s70 = scalar_select %p69, %s68, 7
    %s71 = smul.addr %s70, 4
    %s72 = scalar_lea.vmem %s8, %s71
    %s73 = ssub.s32 0, 0
    %s74 = smul.u32 8, %s73
    %p75 = scmp.lt.s32.totalorder %s74, 7
    %s76 = scalar_select %p75, %s74, 7
    %s77 = smul.addr %s76, 4
    %s78 = scalar_lea.vmem %s8, %s77
    %s79 = ssub.s32 0, 0
    %s80 = smul.u32 8, %s79
    %p82 = scmp.eq.s32.totalorder 0, 0
    // Predicated region
    $region42: #{video_regression_forward.2} parent=1 // pred_check
      %p83 = pneg %p82
    $region43: #{video_regression_forward.2} parent=1 // pred_check_branch
      %85 = sbr.rel (%p83) target = $region45
    $region44: #{video_regression_forward.2} parent=1 // pred_region
      %vm86 = vcmask 523264
      %87 = vst.msk [vmem:[#allocation4] sm:$0xff] %vm86, 0.0
      %88 = vst.msk [vmem:[#allocation5] sm:$0xff] %vm86, 0.0
      %89 = vst.msk [vmem:[#allocation6] sm:$0xff] %vm86, 0.0
      %90 = vst.msk [vmem:[#allocation7] sm:$0xff] %vm86, 0.0
    $region45: #{video_regression_forward.2} parent=1 // pred_fallthru
      _
    %v91 = vld [vmem:[%s0] sm:$0xff]
    %v92 = vld [vmem:[%s0 + $0x8] sm:$0xff]
    %v93 = vld [vmem:[%s0 + $0x10] sm:$0xff]
    %v94 = vld [vmem:[%s0 + $0x18] sm:$0xff]
    %v95 = vld [vmem:[%s0 + $0x20] sm:$0xff]
    %v96 = vld [vmem:[%s0 + $0x28] sm:$0xff]
    %v97 = vld [vmem:[%s0 + $0x30] sm:$0xff]
    %v98 = vld [vmem:[%s0 + $0x38] sm:$0xff]
    %v99 = vpack.c.bf16 %v92, %v91
    %v100 = vpack.c.bf16 %v94, %v93
    %v101 = vpack.c.bf16 %v96, %v95
    %v102 = vpack.c.bf16 %v98, %v97
    %v103 = vld [vmem:[%s1] sm:$0xff]
    %v104 = vld [vmem:[%s1 + $0x8] sm:$0xff]
    %v105 = vld [vmem:[%s1 + $0x10] sm:$0xff]
    %v106 = vld [vmem:[%s1 + $0x18] sm:$0xff]
    %v107 = vld [vmem:[%s1 + $0x20] sm:$0xff]
    %v108 = vld [vmem:[%s1 + $0x28] sm:$0xff]
    %v109 = vld [vmem:[%s1 + $0x30] sm:$0xff]
    %v110 = vld [vmem:[%s1 + $0x38] sm:$0xff]
    %v111 = vld [vmem:[%s1 + $0x40] sm:$0xff]
    %v112 = vld [vmem:[%s1 + $0x48] sm:$0xff]
    %v113 = vld [vmem:[%s1 + $0x50] sm:$0xff]
    %v114 = vld [vmem:[%s1 + $0x58] sm:$0xff]
    %v115 = vld [vmem:[%s1 + $0x60] sm:$0xff]
    %v116 = vld [vmem:[%s1 + $0x68] sm:$0xff]
    %v117 = vld [vmem:[%s1 + $0x70] sm:$0xff]
    %v118 = vld [vmem:[%s1 + $0x78] sm:$0xff]
    %v119 = vld [vmem:[%s3] sm:$0x3]
    %v121 = vlaneseq
    %v122 = vshrl.u32 %v121, 7
    %v123 = vsub.s32 0, %v122
    %v124 = vrot.slane %v119, %v123
    %v125 = vlaneseq
    %v126 = vshrl.u32 %v125, 7
    %v127 = vsub.s32 1, %v126
    %v128 = vrot.slane %v119, %v127
    %v147 = vunpack.c.l.b16 %v103
    %v148 = vunpack.c.h.b16 %v103
    %v149 = vunpack.c.l.b16 %v104
    %v150 = vunpack.c.h.b16 %v104
    %v151 = vunpack.c.l.b16 %v105
    %v152 = vunpack.c.h.b16 %v105
    %v153 = vunpack.c.l.b16 %v106
    %v154 = vunpack.c.h.b16 %v106
    %v155 = vunpack.c.l.b16 %v107
    %v156 = vunpack.c.h.b16 %v107
    %v157 = vunpack.c.l.b16 %v108
    %v158 = vunpack.c.h.b16 %v108
    %v159 = vunpack.c.l.b16 %v109
    %v160 = vunpack.c.h.b16 %v109
    %v161 = vunpack.c.l.b16 %v110
    %v162 = vunpack.c.h.b16 %v110
    %v163 = vunpack.c.l.b16 %v111
    %v164 = vunpack.c.h.b16 %v111
    %v165 = vunpack.c.l.b16 %v112
    %v166 = vunpack.c.h.b16 %v112
    %v167 = vunpack.c.l.b16 %v113
    %v168 = vunpack.c.h.b16 %v113
    %v169 = vunpack.c.l.b16 %v114
    %v170 = vunpack.c.h.b16 %v114
    %v171 = vunpack.c.l.b16 %v115
    %v172 = vunpack.c.h.b16 %v115
    %v173 = vunpack.c.l.b16 %v116
    %v174 = vunpack.c.h.b16 %v116
    %v175 = vunpack.c.l.b16 %v117
    %v176 = vunpack.c.h.b16 %v117
    %v177 = vunpack.c.l.b16 %v118
    %v178 = vunpack.c.h.b16 %v118
    %v179 = vpack.c.b16 %v149, %v147
    %v180 = vpack.c.b16 %v150, %v148
    %v181 = vpack.c.b16 %v153, %v151
    %v182 = vpack.c.b16 %v154, %v152
    %v183 = vpack.c.b16 %v157, %v155
    %v184 = vpack.c.b16 %v158, %v156
    %v185 = vpack.c.b16 %v161, %v159
    %v186 = vpack.c.b16 %v162, %v160
    %v187 = vpack.c.b16 %v165, %v163
    %v188 = vpack.c.b16 %v166, %v164
    %v189 = vpack.c.b16 %v169, %v167
    %v190 = vpack.c.b16 %v170, %v168
    %v191 = vpack.c.b16 %v173, %v171
    %v192 = vpack.c.b16 %v174, %v172
    %v193 = vpack.c.b16 %v177, %v175
    %v194 = vpack.c.b16 %v178, %v176
    %211 = vmatprep.subr.bf16.mxu0 %v180
    %212 = vmatpush1.bf16.msra.mxu0 %v179
    %213 = vmatprep.subr.bf16.mxu0 %v182
    %214 = vmatpush1.bf16.msra.mxu0 %v181
    %215 = vmatprep.subr.bf16.mxu0 %v184
    %216 = vmatpush1.bf16.msra.mxu0 %v183
    %217 = vmatprep.subr.bf16.mxu0 %v186
    %218 = vmatpush1.bf16.msra.mxu0 %v185
    %219 = vmatprep.subr.bf16.mxu0 %v188
    %220 = vmatpush1.bf16.msra.mxu0 %v187
    %221 = vmatprep.subr.bf16.mxu0 %v190
    %222 = vmatpush1.bf16.msra.mxu0 %v189
    %223 = vmatprep.subr.bf16.mxu0 %v192
    %224 = vmatpush1.bf16.msra.mxu0 %v191
    %225 = vmatprep.subr.bf16.mxu0 %v194
    %226 = vmatpush1.bf16.msra.mxu0 %v193
    %227 = vmatprep.subr.bf16.mxu0 0
    %228 = vmatpush1.bf16.msra.mxu0 0
    %229 = vmatprep.subr.bf16.mxu0 0
    %230 = vmatpush1.bf16.msra.mxu0 0
    %231 = vmatprep.subr.bf16.mxu0 0
    %232 = vmatpush1.bf16.msra.mxu0 0
    %233 = vmatprep.subr.bf16.mxu0 0
    %234 = vmatpush1.bf16.msra.mxu0 0
    %235 = vmatprep.subr.bf16.mxu0 0
    %236 = vmatpush1.bf16.msra.mxu0 0
    %237 = vmatprep.subr.bf16.mxu0 0
    %238 = vmatpush1.bf16.msra.mxu0 0
    %239 = vmatprep.subr.bf16.mxu0 0
    %240 = vmatpush1.bf16.msra.mxu0 0
    %241 = vmatprep.subr.bf16.mxu0 0
    %242 = vmatpush1.bf16.msra.mxu0 0
    %243 = vmatprep.mubr.bf16.mxu0 0
    %244 = vmatmul.mubr.bf16.gmra.mrb[0].mxu0 %v99
    %v245 = vpop.f32.mrb[0].mxu0
    %v246 = vadd.f32 %v124, %v245
    %v247 = vpop.f32.mrb[0].mxu0
    %v248 = vadd.f32 %v128, %v247
    %v249 = vpop.f32.mrb[0].mxu0
    %v250 = vadd.f32 %v124, %v249
    %v251 = vpop.f32.mrb[0].mxu0
    %v252 = vadd.f32 %v128, %v251
    %253 = vmatprep.mubr.bf16.mxu0 0
    %254 = vmatmul.mubr.bf16.gmra.mrb[0].mxu0 %v100
    %v255 = vpop.f32.mrb[0].mxu0
    %v256 = vadd.f32 %v124, %v255
    %v257 = vpop.f32.mrb[0].mxu0
    %v258 = vadd.f32 %v128, %v257
    %v259 = vpop.f32.mrb[0].mxu0
    %v260 = vadd.f32 %v124, %v259
    %v261 = vpop.f32.mrb[0].mxu0
    %v262 = vadd.f32 %v128, %v261
    %263 = vmatprep.mubr.bf16.mxu0 0
    %264 = vmatmul.mubr.bf16.gmra.mrb[0].mxu0 %v101
    %v265 = vpop.f32.mrb[0].mxu0
    %v266 = vadd.f32 %v124, %v265
    %v267 = vpop.f32.mrb[0].mxu0
    %v268 = vadd.f32 %v128, %v267
    %v269 = vpop.f32.mrb[0].mxu0
    %v270 = vadd.f32 %v124, %v269
    %v271 = vpop.f32.mrb[0].mxu0
    %v272 = vadd.f32 %v128, %v271
    %273 = vmatprep.mubr.bf16.mxu0 0
    %274 = vmatmul.mubr.bf16.gmra.mrb[0].mxu0 %v102
    %v275 = vpop.f32.mrb[0].mxu0
    %v276 = vadd.f32 %v124, %v275
    %v277 = vpop.f32.mrb[0].mxu0
    %v278 = vadd.f32 %v128, %v277
    %v279 = vpop.f32.mrb[0].mxu0
    %v280 = vadd.f32 %v124, %v279
    %v281 = vpop.f32.mrb[0].mxu0
    %v282 = vadd.f32 %v128, %v281
    %283 = vdwg.mxu0
    %v284 = vld [vmem:[%s2] sm:$0xff]
    %v285 = vld [vmem:[%s2 + $0x8] sm:$0xff]
    %v286 = vld [vmem:[%s2 + $0x10] sm:$0xff]
    %v287 = vld [vmem:[%s2 + $0x18] sm:$0xff]
    %v288 = vld [vmem:[%s2 + $0x20] sm:$0xff]
    %v289 = vld [vmem:[%s2 + $0x28] sm:$0xff]
    %v290 = vld [vmem:[%s2 + $0x30] sm:$0xff]
    %v291 = vld [vmem:[%s2 + $0x38] sm:$0xff]
    %v292 = vld [vmem:[%s2 + $0x40] sm:$0xff]
    %v293 = vld [vmem:[%s2 + $0x48] sm:$0xff]
    %v294 = vld [vmem:[%s2 + $0x50] sm:$0xff]
    %v295 = vld [vmem:[%s2 + $0x58] sm:$0xff]
    %v296 = vld [vmem:[%s2 + $0x60] sm:$0xff]
    %v297 = vld [vmem:[%s2 + $0x68] sm:$0xff]
    %v298 = vld [vmem:[%s2 + $0x70] sm:$0xff]
    %v299 = vld [vmem:[%s2 + $0x78] sm:$0xff]
    %v300 = vld [vmem:[#allocation8] sm:$0x3]
    %v302 = vlaneseq
    %v303 = vshrl.u32 %v302, 7
    %v304 = vsub.s32 0, %v303
    %v305 = vrot.slane %v300, %v304
    %v306 = vlaneseq
    %v307 = vshrl.u32 %v306, 7
    %v308 = vsub.s32 1, %v307
    %v309 = vrot.slane %v300, %v308
    %v328 = vunpack.c.l.b16 %v284
    %v329 = vunpack.c.h.b16 %v284
    %v330 = vunpack.c.l.b16 %v285
    %v331 = vunpack.c.h.b16 %v285
    %v332 = vunpack.c.l.b16 %v286
    %v333 = vunpack.c.h.b16 %v286
    %v334 = vunpack.c.l.b16 %v287
    %v335 = vunpack.c.h.b16 %v287
    %v336 = vunpack.c.l.b16 %v288
    %v337 = vunpack.c.h.b16 %v288
    %v338 = vunpack.c.l.b16 %v289
    %v339 = vunpack.c.h.b16 %v289
    %v340 = vunpack.c.l.b16 %v290
    %v341 = vunpack.c.h.b16 %v290
    %v342 = vunpack.c.l.b16 %v291
    %v343 = vunpack.c.h.b16 %v291
    %v344 = vunpack.c.l.b16 %v292
    %v345 = vunpack.c.h.b16 %v292
    %v346 = vunpack.c.l.b16 %v293
    %v347 = vunpack.c.h.b16 %v293
    %v348 = vunpack.c.l.b16 %v294
    %v349 = vunpack.c.h.b16 %v294
    %v350 = vunpack.c.l.b16 %v295
    %v351 = vunpack.c.h.b16 %v295
    %v352 = vunpack.c.l.b16 %v296
    %v353 = vunpack.c.h.b16 %v296
    %v354 = vunpack.c.l.b16 %v297
    %v355 = vunpack.c.h.b16 %v297
    %v356 = vunpack.c.l.b16 %v298
    %v357 = vunpack.c.h.b16 %v298
    %v358 = vunpack.c.l.b16 %v299
    %v359 = vunpack.c.h.b16 %v299
    %v360 = vpack.c.b16 %v330, %v328
    %v361 = vpack.c.b16 %v331, %v329
    %v362 = vpack.c.b16 %v334, %v332
    %v363 = vpack.c.b16 %v335, %v333
    %v364 = vpack.c.b16 %v338, %v336
    %v365 = vpack.c.b16 %v339, %v337
    %v366 = vpack.c.b16 %v342, %v340
    %v367 = vpack.c.b16 %v343, %v341
    %v368 = vpack.c.b16 %v346, %v344
    %v369 = vpack.c.b16 %v347, %v345
    %v370 = vpack.c.b16 %v350, %v348
    %v371 = vpack.c.b16 %v351, %v349
    %v372 = vpack.c.b16 %v354, %v352
    %v373 = vpack.c.b16 %v355, %v353
    %v374 = vpack.c.b16 %v358, %v356
    %v375 = vpack.c.b16 %v359, %v357
    %392 = vmatprep.subr.bf16.mxu0 %v361
    %393 = vmatpush1.bf16.msra.mxu0 %v360
    %394 = vmatprep.subr.bf16.mxu0 %v363
    %395 = vmatpush1.bf16.msra.mxu0 %v362
    %396 = vmatprep.subr.bf16.mxu0 %v365
    %397 = vmatpush1.bf16.msra.mxu0 %v364
    %398 = vmatprep.subr.bf16.mxu0 %v367
    %399 = vmatpush1.bf16.msra.mxu0 %v366
    %400 = vmatprep.subr.bf16.mxu0 %v369
    %401 = vmatpush1.bf16.msra.mxu0 %v368
    %402 = vmatprep.subr.bf16.mxu0 %v371
    %403 = vmatpush1.bf16.msra.mxu0 %v370
    %404 = vmatprep.subr.bf16.mxu0 %v373
    %405 = vmatpush1.bf16.msra.mxu0 %v372
    %406 = vmatprep.subr.bf16.mxu0 %v375
    %407 = vmatpush1.bf16.msra.mxu0 %v374
    %408 = vmatprep.subr.bf16.mxu0 0
    %409 = vmatpush1.bf16.msra.mxu0 0
    %410 = vmatprep.subr.bf16.mxu0 0
    %411 = vmatpush1.bf16.msra.mxu0 0
    %412 = vmatprep.subr.bf16.mxu0 0
    %413 = vmatpush1.bf16.msra.mxu0 0
    %414 = vmatprep.subr.bf16.mxu0 0
    %415 = vmatpush1.bf16.msra.mxu0 0
    %416 = vmatprep.subr.bf16.mxu0 0
    %417 = vmatpush1.bf16.msra.mxu0 0
    %418 = vmatprep.subr.bf16.mxu0 0
    %419 = vmatpush1.bf16.msra.mxu0 0
    %420 = vmatprep.subr.bf16.mxu0 0
    %421 = vmatpush1.bf16.msra.mxu0 0
    %422 = vmatprep.subr.bf16.mxu0 0
    %423 = vmatpush1.bf16.msra.mxu0 0
    %424 = vmatprep.mubr.bf16.mxu0 0
    %425 = vmatmul.mubr.bf16.gmra.mrb[0].mxu0 %v99
    %v426 = vpop.f32.mrb[0].mxu0
    %v427 = vadd.f32 %v305, %v426
    %v428 = vpop.f32.mrb[0].mxu0
    %v429 = vadd.f32 %v309, %v428
    %v430 = vpop.f32.mrb[0].mxu0
    %v431 = vadd.f32 %v305, %v430
    %v432 = vpop.f32.mrb[0].mxu0
    %v433 = vadd.f32 %v309, %v432
    %434 = vmatprep.mubr.bf16.mxu0 0
    %435 = vmatmul.mubr.bf16.gmra.mrb[0].mxu0 %v100
    %v436 = vpop.f32.mrb[0].mxu0
    %v437 = vadd.f32 %v305, %v436
    %v438 = vpop.f32.mrb[0].mxu0
    %v439 = vadd.f32 %v309, %v438
    %v440 = vpop.f32.mrb[0].mxu0
    %v441 = vadd.f32 %v305, %v440
    %v442 = vpop.f32.mrb[0].mxu0
    %v443 = vadd.f32 %v309, %v442
    %444 = vmatprep.mubr.bf16.mxu0 0
    %445 = vmatmul.mubr.bf16.gmra.mrb[0].mxu0 %v101
    %v446 = vpop.f32.mrb[0].mxu0
    %v447 = vadd.f32 %v305, %v446
    %v448 = vpop.f32.mrb[0].mxu0
    %v449 = vadd.f32 %v309, %v448
    %v450 = vpop.f32.mrb[0].mxu0
    %v451 = vadd.f32 %v305, %v450
    %v452 = vpop.f32.mrb[0].mxu0
    %v453 = vadd.f32 %v309, %v452
    %454 = vmatprep.mubr.bf16.mxu0 0
    %455 = vmatmul.mubr.bf16.gmra.mrb[0].mxu0 %v102
    %v456 = vpop.f32.mrb[0].mxu0
    %v457 = vadd.f32 %v305, %v456
    %v458 = vpop.f32.mrb[0].mxu0
    %v459 = vadd.f32 %v309, %v458
    %v460 = vpop.f32.mrb[0].mxu0
    %v461 = vadd.f32 %v305, %v460
    %v462 = vpop.f32.mrb[0].mxu0
    %v463 = vadd.f32 %v309, %v462
    %464 = vdwg.mxu0
    %465 = vst [vmem:[#allocation2] sm:$0xff] %v246
    %466 = vst [vmem:[#allocation2 + $0x8] sm:$0xff] %v248
    %467 = vst [vmem:[#allocation2 + $0x10] sm:$0xff] %v250
    %468 = vst [vmem:[#allocation2 + $0x18] sm:$0xff] %v252
    %469 = vst [vmem:[#allocation2 + $0x20] sm:$0xff] %v256
    %470 = vst [vmem:[#allocation2 + $0x28] sm:$0xff] %v258
    %471 = vst [vmem:[#allocation2 + $0x30] sm:$0xff] %v260
    %472 = vst [vmem:[#allocation2 + $0x38] sm:$0xff] %v262
    %473 = vst [vmem:[#allocation2 + $0x40] sm:$0xff] %v266
    %474 = vst [vmem:[#allocation2 + $0x48] sm:$0xff] %v268
    %475 = vst [vmem:[#allocation2 + $0x50] sm:$0xff] %v270
    %476 = vst [vmem:[#allocation2 + $0x58] sm:$0xff] %v272
    %477 = vst [vmem:[#allocation2 + $0x60] sm:$0xff] %v276
    %478 = vst [vmem:[#allocation2 + $0x68] sm:$0xff] %v278
    %479 = vst [vmem:[#allocation2 + $0x70] sm:$0xff] %v280
    %480 = vst [vmem:[#allocation2 + $0x78] sm:$0xff] %v282
    %481 = vst [vmem:[#allocation3] sm:$0xff] %v427
    %482 = vst [vmem:[#allocation3 + $0x8] sm:$0xff] %v429
    %483 = vst [vmem:[#allocation3 + $0x10] sm:$0xff] %v431
    %484 = vst [vmem:[#allocation3 + $0x18] sm:$0xff] %v433
    %485 = vst [vmem:[#allocation3 + $0x20] sm:$0xff] %v437
    %486 = vst [vmem:[#allocation3 + $0x28] sm:$0xff] %v439
    %487 = vst [vmem:[#allocation3 + $0x30] sm:$0xff] %v441
    %488 = vst [vmem:[#allocation3 + $0x38] sm:$0xff] %v443
    %489 = vst [vmem:[#allocation3 + $0x40] sm:$0xff] %v447
    %490 = vst [vmem:[#allocation3 + $0x48] sm:$0xff] %v449
    %491 = vst [vmem:[#allocation3 + $0x50] sm:$0xff] %v451
    %492 = vst [vmem:[#allocation3 + $0x58] sm:$0xff] %v453
    %493 = vst [vmem:[#allocation3 + $0x60] sm:$0xff] %v457
    %494 = vst [vmem:[#allocation3 + $0x68] sm:$0xff] %v459
    %495 = vst [vmem:[#allocation3 + $0x70] sm:$0xff] %v461
    %496 = vst [vmem:[#allocation3 + $0x78] sm:$0xff] %v463
    %v497 = vld [vmem:[#allocation10] sm:$0xff]
    %v498 = vld [vmem:[#allocation10 + $0x8] sm:$0xff]
    %v499 = vld [vmem:[#allocation10 + $0x10] sm:$0xff]
    %v500 = vld [vmem:[#allocation10 + $0x18] sm:$0xff]
    %v501 = vld [vmem:[#allocation10 + $0x20] sm:$0xff]
    %v502 = vld [vmem:[#allocation10 + $0x28] sm:$0xff]
    %v503 = vld [vmem:[#allocation10 + $0x30] sm:$0xff]
    %v504 = vld [vmem:[#allocation10 + $0x38] sm:$0xff]
    %v505 = vld [vmem:[#allocation12] sm:$0xff]
    %v506 = vld [vmem:[#allocation12 + $0x8] sm:$0xff]
    %v507 = vld [vmem:[#allocation12 + $0x10] sm:$0xff]
    %v508 = vld [vmem:[#allocation12 + $0x18] sm:$0xff]
    %v509 = vld [vmem:[#allocation12 + $0x20] sm:$0xff]
    %v510 = vld [vmem:[#allocation12 + $0x28] sm:$0xff]
    %v511 = vld [vmem:[#allocation12 + $0x30] sm:$0xff]
    %v512 = vld [vmem:[#allocation12 + $0x38] sm:$0xff]
    %v513 = vld [vmem:[#allocation4] sm:$0xff]
    %v514 = vld [vmem:[#allocation5] sm:$0xff]
    %v515 = vld [vmem:[#allocation6] sm:$0xff]
    %v516 = vld [vmem:[#allocation7] sm:$0xff]
    %s517 = smul.u32 0, 2
    %s518 = smul.addr %s517, 8
    %s519 = scalar_lea.vmem [#allocation2], %s518
    %v520 = vld [vmem:[%s519] sm:$0xff]
    %v521 = vld [vmem:[%s519 + $0x8] sm:$0xff]
    %v522 = vpack.c.bf16 %v513, %v513
    %v531 = vunpack.c.l.b16 %v497
    %v532 = vunpack.c.h.b16 %v497
    %v533 = vunpack.c.l.b16 %v498
    %v534 = vunpack.c.h.b16 %v498
    %v535 = vunpack.c.l.b16 %v499
    %v536 = vunpack.c.h.b16 %v499
    %v537 = vunpack.c.l.b16 %v500
    %v538 = vunpack.c.h.b16 %v500
    %v539 = vunpack.c.l.b16 %v501
    %v540 = vunpack.c.h.b16 %v501
    %v541 = vunpack.c.l.b16 %v502
    %v542 = vunpack.c.h.b16 %v502
    %v543 = vunpack.c.l.b16 %v503
    %v544 = vunpack.c.h.b16 %v503
    %v545 = vunpack.c.l.b16 %v504
    %v546 = vunpack.c.h.b16 %v504
    %v547 = vpack.c.b16 %v533, %v531
    %v548 = vpack.c.b16 %v534, %v532
    %v549 = vpack.c.b16 %v537, %v535
    %v550 = vpack.c.b16 %v538, %v536
    %v551 = vpack.c.b16 %v541, %v539
    %v552 = vpack.c.b16 %v542, %v540
    %v553 = vpack.c.b16 %v545, %v543
    %v554 = vpack.c.b16 %v546, %v544
    %vm563 = vcmask 523264
    %v565 = vsel %vm563, %v522, 0
    %567 = vmatprep.subr.bf16.mxu0 %v548
    %568 = vmatpush1.bf16.msra.mxu0 %v547
    %569 = vmatprep.subr.bf16.mxu0 %v550
    %570 = vmatpush1.bf16.msra.mxu0 %v549
    %571 = vmatprep.subr.bf16.mxu0 %v552
    %572 = vmatpush1.bf16.msra.mxu0 %v551
    %573 = vmatprep.subr.bf16.mxu0 %v554
    %574 = vmatpush1.bf16.msra.mxu0 %v553
    %575 = vmatprep.subr.bf16.mxu0 0
    %576 = vmatpush1.bf16.msra.mxu0 0
    %577 = vmatprep.subr.bf16.mxu0 0
    %578 = vmatpush1.bf16.msra.mxu0 0
    %579 = vmatprep.subr.bf16.mxu0 0
    %580 = vmatpush1.bf16.msra.mxu0 0
    %581 = vmatprep.subr.bf16.mxu0 0
    %582 = vmatpush1.bf16.msra.mxu0 0
    %583 = vmatprep.subr.bf16.mxu0 0
    %584 = vmatpush1.bf16.msra.mxu0 0
    %585 = vmatprep.subr.bf16.mxu0 0
    %586 = vmatpush1.bf16.msra.mxu0 0
    %587 = vmatprep.subr.bf16.mxu0 0
    %588 = vmatpush1.bf16.msra.mxu0 0
    %589 = vmatprep.subr.bf16.mxu0 0
    %590 = vmatpush1.bf16.msra.mxu0 0
    %591 = vmatprep.subr.bf16.mxu0 0
    %592 = vmatpush1.bf16.msra.mxu0 0
    %593 = vmatprep.subr.bf16.mxu0 0
    %594 = vmatpush1.bf16.msra.mxu0 0
    %595 = vmatprep.subr.bf16.mxu0 0
    %596 = vmatpush1.bf16.msra.mxu0 0
    %597 = vmatprep.subr.bf16.mxu0 0
    %598 = vmatpush1.bf16.msra.mxu0 0
    %599 = vmatprep.mubr.bf16.mxu0 0
    %600 = vmatmul.mubr.bf16.gmra.mrb[0].mxu0 %v565
    %v601 = vpop.f32.mrb[0].mxu0
    %v602 = vadd.f32 0.0, %v601
    %v603 = vpop.f32.mrb[0].mxu0
    %v604 = vadd.f32 0.0, %v603
    %v605 = vpop.f32.mrb[0].mxu0
    %v606 = vpop.f32.mrb[0].mxu0
    %607 = vdwg.mxu0
    %v608 = vadd.f32 %v520, %v602
    %v609 = vadd.f32 %v521, %v604
    %s610 = smul.u32 7, 2
    %s611 = smul.addr %s610, 8
    %s612 = scalar_lea.vmem [#allocation3], %s611
    %v613 = vld [vmem:[%s612] sm:$0xff]
    %v614 = vld [vmem:[%s612 + $0x8] sm:$0xff]
    %v615 = vpack.c.bf16 %v515, %v515
    %v624 = vunpack.c.l.b16 %v505
    %v625 = vunpack.c.h.b16 %v505
    %v626 = vunpack.c.l.b16 %v506
    %v627 = vunpack.c.h.b16 %v506
    %v628 = vunpack.c.l.b16 %v507
    %v629 = vunpack.c.h.b16 %v507
    %v630 = vunpack.c.l.b16 %v508
    %v631 = vunpack.c.h.b16 %v508
    %v632 = vunpack.c.l.b16 %v509
    %v633 = vunpack.c.h.b16 %v509
    %v634 = vunpack.c.l.b16 %v510
    %v635 = vunpack.c.h.b16 %v510
    %v636 = vunpack.c.l.b16 %v511
    %v637 = vunpack.c.h.b16 %v511
    %v638 = vunpack.c.l.b16 %v512
    %v639 = vunpack.c.h.b16 %v512
    %v640 = vpack.c.b16 %v626, %v624
    %v641 = vpack.c.b16 %v627, %v625
    %v642 = vpack.c.b16 %v630, %v628
    %v643 = vpack.c.b16 %v631, %v629
    %v644 = vpack.c.b16 %v634, %v632
    %v645 = vpack.c.b16 %v635, %v633
    %v646 = vpack.c.b16 %v638, %v636
    %v647 = vpack.c.b16 %v639, %v637
    %v657 = vsel %vm563, %v615, 0
    %659 = vmatprep.subr.bf16.mxu0 %v641
    %660 = vmatpush1.bf16.msra.mxu0 %v640
    %661 = vmatprep.subr.bf16.mxu0 %v643
    %662 = vmatpush1.bf16.msra.mxu0 %v642
    %663 = vmatprep.subr.bf16.mxu0 %v645
    %664 = vmatpush1.bf16.msra.mxu0 %v644
    %665 = vmatprep.subr.bf16.mxu0 %v647
    %666 = vmatpush1.bf16.msra.mxu0 %v646
    %667 = vmatprep.subr.bf16.mxu0 0
    %668 = vmatpush1.bf16.msra.mxu0 0
    %669 = vmatprep.subr.bf16.mxu0 0
    %670 = vmatpush1.bf16.msra.mxu0 0
    %671 = vmatprep.subr.bf16.mxu0 0
    %672 = vmatpush1.bf16.msra.mxu0 0
    %673 = vmatprep.subr.bf16.mxu0 0
    %674 = vmatpush1.bf16.msra.mxu0 0
    %675 = vmatprep.subr.bf16.mxu0 0
    %676 = vmatpush1.bf16.msra.mxu0 0
    %677 = vmatprep.subr.bf16.mxu0 0
    %678 = vmatpush1.bf16.msra.mxu0 0
    %679 = vmatprep.subr.bf16.mxu0 0
    %680 = vmatpush1.bf16.msra.mxu0 0
    %681 = vmatprep.subr.bf16.mxu0 0
    %682 = vmatpush1.bf16.msra.mxu0 0
    %683 = vmatprep.subr.bf16.mxu0 0
    %684 = vmatpush1.bf16.msra.mxu0 0
    %685 = vmatprep.subr.bf16.mxu0 0
    %686 = vmatpush1.bf16.msra.mxu0 0
    %687 = vmatprep.subr.bf16.mxu0 0
    %688 = vmatpush1.bf16.msra.mxu0 0
    %689 = vmatprep.subr.bf16.mxu0 0
    %690 = vmatpush1.bf16.msra.mxu0 0
    %691 = vmatprep.mubr.bf16.mxu0 0
    %692 = vmatmul.mubr.bf16.gmra.mrb[0].mxu0 %v657
    %v693 = vpop.f32.mrb[0].mxu0
    %v694 = vadd.f32 0.0, %v693
    %v695 = vpop.f32.mrb[0].mxu0
    %v696 = vadd.f32 0.0, %v695
    %v697 = vpop.f32.mrb[0].mxu0
    %v698 = vpop.f32.mrb[0].mxu0
    %699 = vdwg.mxu0
    %v700 = vadd.f32 %v613, %v694
    %v701 = vadd.f32 %v614, %v696
    %v702 = vxor.u32 %v608, 2147483648
    %v703 = vxor.u32 %v609, 2147483648
    %v704 = vmul.f32 %v702, 1.442695
    %v705 = vpow.pop %v704
    %v706 = vmul.f32 %v703, 1.442695
    %v707 = vpow.pop %v706
    %v708 = vadd.f32 %v705, 1.0
    %v709 = vadd.f32 %v707, 1.0
    %v710 = vrcp.pop %v708
    %v711 = vmul.f32 1.0, %v710
    %v712 = vrcp.pop %v709
    %v713 = vmul.f32 1.0, %v712
    %v714 = vtanh.pop %v609
    %716 = vrot.lane.b32.xlu0 %v514, 64
    %v717 = vpop.permute.xlu0 %716
    %v719 = vmul.f32 %v711, %v717
    %v720 = vmul.f32 %v711, %v714
    %722 = vrot.lane.b32.xlu0 %v720, 64
    %v723 = vpop.permute.xlu0 %722
    %v725 = vadd.f32 %v719, %v723
    %v726 = vtanh.pop %v725
    %v727 = vmul.f32 %v713, %v726
    %v728 = vxor.u32 %v700, 2147483648
    %v729 = vxor.u32 %v701, 2147483648
    %v730 = vmul.f32 %v728, 1.442695
    %v731 = vpow.pop %v730
    %v732 = vmul.f32 %v729, 1.442695
    %v733 = vpow.pop %v732
    %v734 = vadd.f32 %v731, 1.0
    %v735 = vadd.f32 %v733, 1.0
    %v736 = vrcp.pop %v734
    %v737 = vmul.f32 1.0, %v736
    %v738 = vrcp.pop %v735
    %v739 = vmul.f32 1.0, %v738
    %v740 = vtanh.pop %v701
    %742 = vrot.lane.b32.xlu0 %v516, 64
    %v743 = vpop.permute.xlu0 %742
    %v745 = vmul.f32 %v737, %v743
    %v746 = vmul.f32 %v737, %v740
    %748 = vrot.lane.b32.xlu0 %v746, 64
    %v749 = vpop.permute.xlu0 %748
    %v751 = vadd.f32 %v745, %v749
    %v752 = vtanh.pop %v751
    %v753 = vmul.f32 %v739, %v752
    %v754 = vpack.c.bf16 %v727, %v727
    %v756 = vunpack.c.l.b16 %v754
    %v757 = vpack.c.b16 %v756, %v756
    %758 = vrot.lane.b32.xlu0 %v757, 64
    %v759 = vpop.permute.xlu0 %758
    %vm761 = vcmask 519168
    %762 = vst.msk [vmem:[%s7] sm:$0xf] %vm761, %v759
    %v763 = vpack.c.bf16 %v753, %v753
    %v765 = vunpack.c.l.b16 %v763
    %v766 = vpack.c.b16 %v765, %v765
    %767 = vrot.lane.b32.xlu0 %v766, 64
    %v768 = vpop.permute.xlu0 %767
    %s770 = scalar_lea.vmem %s78, 28
    %771 = vst.msk [vmem:[%s770] sm:$0xf] %vm761, %v768
    %s772 = smul.u32 1, 2
    %s773 = smul.addr %s772, 8
    %s774 = scalar_lea.vmem [#allocation2], %s773
    %v775 = vld [vmem:[%s774] sm:$0xff]
    %v776 = vld [vmem:[%s774 + $0x8] sm:$0xff]
    %777 = vrot.lane.b32.xlu0 %v754, 64
    %v778 = vpop.permute.xlu0 %777
    %v780 = vsel %vm563, %v778, 0
    %782 = vmatprep.subr.bf16.mxu0 %v548
    %783 = vmatpush1.bf16.msra.mxu0 %v547
    %784 = vmatprep.subr.bf16.mxu0 %v550
    %785 = vmatpush1.bf16.msra.mxu0 %v549
    %786 = vmatprep.subr.bf16.mxu0 %v552
    %787 = vmatpush1.bf16.msra.mxu0 %v551
    %788 = vmatprep.subr.bf16.mxu0 %v554
    %789 = vmatpush1.bf16.msra.mxu0 %v553
    %790 = vmatprep.subr.bf16.mxu0 0
    %791 = vmatpush1.bf16.msra.mxu0 0
    %792 = vmatprep.subr.bf16.mxu0 0
    %793 = vmatpush1.bf16.msra.mxu0 0
    %794 = vmatprep.subr.bf16.mxu0 0
    %795 = vmatpush1.bf16.msra.mxu0 0
    %796 = vmatprep.subr.bf16.mxu0 0
    %797 = vmatpush1.bf16.msra.mxu0 0
    %798 = vmatprep.subr.bf16.mxu0 0
    %799 = vmatpush1.bf16.msra.mxu0 0
    %800 = vmatprep.subr.bf16.mxu0 0
    %801 = vmatpush1.bf16.msra.mxu0 0
    %802 = vmatprep.subr.bf16.mxu0 0
    %803 = vmatpush1.bf16.msra.mxu0 0
    %804 = vmatprep.subr.bf16.mxu0 0
    %805 = vmatpush1.bf16.msra.mxu0 0
    %806 = vmatprep.subr.bf16.mxu0 0
    %807 = vmatpush1.bf16.msra.mxu0 0
    %808 = vmatprep.subr.bf16.mxu0 0
    %809 = vmatpush1.bf16.msra.mxu0 0
    %810 = vmatprep.subr.bf16.mxu0 0
    %811 = vmatpush1.bf16.msra.mxu0 0
    %812 = vmatprep.subr.bf16.mxu0 0
    %813 = vmatpush1.bf16.msra.mxu0 0
    %814 = vmatprep.mubr.bf16.mxu0 0
    %815 = vmatmul.mubr.bf16.gmra.mrb[0].mxu0 %v780
    %v816 = vpop.f32.mrb[0].mxu0
    %v817 = vadd.f32 0.0, %v816
    %v818 = vpop.f32.mrb[0].mxu0
    %v819 = vadd.f32 0.0, %v818
    %v820 = vpop.f32.mrb[0].mxu0
    %v821 = vpop.f32.mrb[0].mxu0
    %822 = vdwg.mxu0
    %v823 = vadd.f32 %v775, %v817
    %v824 = vadd.f32 %v776, %v819
    %s825 = smul.u32 6, 2
    %s826 = smul.addr %s825, 8
    %s827 = scalar_lea.vmem [#allocation3], %s826
    %v828 = vld [vmem:[%s827] sm:$0xff]
    %v829 = vld [vmem:[%s827 + $0x8] sm:$0xff]
    %830 = vrot.lane.b32.xlu0 %v763, 64
    %v831 = vpop.permute.xlu0 %830
    %v833 = vsel %vm563, %v831, 0
    %835 = vmatprep.subr.bf16.mxu0 %v641
    %836 = vmatpush1.bf16.msra.mxu0 %v640
    %837 = vmatprep.subr.bf16.mxu0 %v643
    %838 = vmatpush1.bf16.msra.mxu0 %v642
    %839 = vmatprep.subr.bf16.mxu0 %v645
    %840 = vmatpush1.bf16.msra.mxu0 %v644
    %841 = vmatprep.subr.bf16.mxu0 %v647
    %842 = vmatpush1.bf16.msra.mxu0 %v646
    %843 = vmatprep.subr.bf16.mxu0 0
    %844 = vmatpush1.bf16.msra.mxu0 0
    %845 = vmatprep.subr.bf16.mxu0 0
    %846 = vmatpush1.bf16.msra.mxu0 0
    %847 = vmatprep.subr.bf16.mxu0 0
    %848 = vmatpush1.bf16.msra.mxu0 0
    %849 = vmatprep.subr.bf16.mxu0 0
    %850 = vmatpush1.bf16.msra.mxu0 0
    %851 = vmatprep.subr.bf16.mxu0 0
    %852 = vmatpush1.bf16.msra.mxu0 0
    %853 = vmatprep.subr.bf16.mxu0 0
    %854 = vmatpush1.bf16.msra.mxu0 0
    %855 = vmatprep.subr.bf16.mxu0 0
    %856 = vmatpush1.bf16.msra.mxu0 0
    %857 = vmatprep.subr.bf16.mxu0 0
    %858 = vmatpush1.bf16.msra.mxu0 0
    %859 = vmatprep.subr.bf16.mxu0 0
    %860 = vmatpush1.bf16.msra.mxu0 0
    %861 = vmatprep.subr.bf16.mxu0 0
    %862 = vmatpush1.bf16.msra.mxu0 0
    %863 = vmatprep.subr.bf16.mxu0 0
    %864 = vmatpush1.bf16.msra.mxu0 0
    %865 = vmatprep.subr.bf16.mxu0 0
    %866 = vmatpush1.bf16.msra.mxu0 0
    %867 = vmatprep.mubr.bf16.mxu0 0
    %868 = vmatmul.mubr.bf16.gmra.mrb[0].mxu0 %v833
    %v869 = vpop.f32.mrb[0].mxu0
    %v870 = vadd.f32 0.0, %v869
    %v871 = vpop.f32.mrb[0].mxu0
    %v872 = vadd.f32 0.0, %v871
    %v873 = vpop.f32.mrb[0].mxu0
    %v874 = vpop.f32.mrb[0].mxu0
    %875 = vdwg.mxu0
    %v876 = vadd.f32 %v828, %v870
    %v877 = vadd.f32 %v829, %v872
    %v878 = vxor.u32 %v823, 2147483648
    %v879 = vxor.u32 %v824, 2147483648
    %v880 = vmul.f32 %v878, 1.442695
    %v881 = vpow.pop %v880
    %v882 = vmul.f32 %v879, 1.442695
    %v883 = vpow.pop %v882
    %v884 = vadd.f32 %v881, 1.0
    %v885 = vadd.f32 %v883, 1.0
    %v886 = vrcp.pop %v884
    %v887 = vmul.f32 1.0, %v886
    %v888 = vrcp.pop %v885
    %v889 = vmul.f32 1.0, %v888
    %v890 = vtanh.pop %v824
    %v891 = vmul.f32 %v887, %v725
    %v892 = vmul.f32 %v887, %v890
    %894 = vrot.lane.b32.xlu0 %v892, 64
    %v895 = vpop.permute.xlu0 %894
    %v897 = vadd.f32 %v891, %v895
    %v898 = vtanh.pop %v897
    %v899 = vmul.f32 %v889, %v898
    %v900 = vxor.u32 %v876, 2147483648
    %v901 = vxor.u32 %v877, 2147483648
    %v902 = vmul.f32 %v900, 1.442695
    %v903 = vpow.pop %v902
    %v904 = vmul.f32 %v901, 1.442695
    %v905 = vpow.pop %v904
    %v906 = vadd.f32 %v903, 1.0
    %v907 = vadd.f32 %v905, 1.0
    %v908 = vrcp.pop %v906
    %v909 = vmul.f32 1.0, %v908
    %v910 = vrcp.pop %v907
    %v911 = vmul.f32 1.0, %v910
    %v912 = vtanh.pop %v877
    %v913 = vmul.f32 %v909, %v751
    %v914 = vmul.f32 %v909, %v912
    %916 = vrot.lane.b32.xlu0 %v914, 64
    %v917 = vpop.permute.xlu0 %916
    %v919 = vadd.f32 %v913, %v917
    %v920 = vtanh.pop %v919
    %v921 = vmul.f32 %v911, %v920
    %v922 = vpack.c.bf16 %v899, %v899
    %v924 = vunpack.c.l.b16 %v922
    %v925 = vpack.c.b16 %v924, %v924
    %926 = vrot.lane.b32.xlu0 %v925, 64
    %v927 = vpop.permute.xlu0 %926
    %s929 = scalar_lea.vmem %s7, 4
    %930 = vst.msk [vmem:[%s929] sm:$0xf] %vm761, %v927
    %v931 = vpack.c.bf16 %v921, %v921
    %v933 = vunpack.c.l.b16 %v931
    %v934 = vpack.c.b16 %v933, %v933
    %935 = vrot.lane.b32.xlu0 %v934, 64
    %v936 = vpop.permute.xlu0 %935
    %s938 = scalar_lea.vmem %s78, 24
    %939 = vst.msk [vmem:[%s938] sm:$0xf] %vm761, %v936
    %s940 = smul.u32 2, 2
    %s941 = smul.addr %s940, 8
    %s942 = scalar_lea.vmem [#allocation2], %s941
    %v943 = vld [vmem:[%s942] sm:$0xff]
    %v944 = vld [vmem:[%s942 + $0x8] sm:$0xff]
    %945 = vrot.lane.b32.xlu0 %v922, 64
    %v946 = vpop.permute.xlu0 %945
    %v948 = vsel %vm563, %v946, 0
    %950 = vmatprep.subr.bf16.mxu0 %v548
    %951 = vmatpush1.bf16.msra.mxu0 %v547
    %952 = vmatprep.subr.bf16.mxu0 %v550
    %953 = vmatpush1.bf16.msra.mxu0 %v549
    %954 = vmatprep.subr.bf16.mxu0 %v552
    %955 = vmatpush1.bf16.msra.mxu0 %v551
    %956 = vmatprep.subr.bf16.mxu0 %v554
    %957 = vmatpush1.bf16.msra.mxu0 %v553
    %958 = vmatprep.subr.bf16.mxu0 0
    %959 = vmatpush1.bf16.msra.mxu0 0
    %960 = vmatprep.subr.bf16.mxu0 0
    %961 = vmatpush1.bf16.msra.mxu0 0
    %962 = vmatprep.subr.bf16.mxu0 0
    %963 = vmatpush1.bf16.msra.mxu0 0
    %964 = vmatprep.subr.bf16.mxu0 0
    %965 = vmatpush1.bf16.msra.mxu0 0
    %966 = vmatprep.subr.bf16.mxu0 0
    %967 = vmatpush1.bf16.msra.mxu0 0
    %968 = vmatprep.subr.bf16.mxu0 0
    %969 = vmatpush1.bf16.msra.mxu0 0
    %970 = vmatprep.subr.bf16.mxu0 0
    %971 = vmatpush1.bf16.msra.mxu0 0
    %972 = vmatprep.subr.bf16.mxu0 0
    %973 = vmatpush1.bf16.msra.mxu0 0
    %974 = vmatprep.subr.bf16.mxu0 0
    %975 = vmatpush1.bf16.msra.mxu0 0
    %976 = vmatprep.subr.bf16.mxu0 0
    %977 = vmatpush1.bf16.msra.mxu0 0
    %978 = vmatprep.subr.bf16.mxu0 0
    %979 = vmatpush1.bf16.msra.mxu0 0
    %980 = vmatprep.subr.bf16.mxu0 0
    %981 = vmatpush1.bf16.msra.mxu0 0
    %982 = vmatprep.mubr.bf16.mxu0 0
    %983 = vmatmul.mubr.bf16.gmra.mrb[0].mxu0 %v948
    %v984 = vpop.f32.mrb[0].mxu0
    %v985 = vadd.f32 0.0, %v984
    %v986 = vpop.f32.mrb[0].mxu0
    %v987 = vadd.f32 0.0, %v986
    %v988 = vpop.f32.mrb[0].mxu0
    %v989 = vpop.f32.mrb[0].mxu0
    %990 = vdwg.mxu0
    %v991 = vadd.f32 %v943, %v985
    %v992 = vadd.f32 %v944, %v987
    %s993 = smul.u32 5, 2
    %s994 = smul.addr %s993, 8
    %s995 = scalar_lea.vmem [#allocation3], %s994
    %v996 = vld [vmem:[%s995] sm:$0xff]
    %v997 = vld [vmem:[%s995 + $0x8] sm:$0xff]
    %998 = vrot.lane.b32.xlu0 %v931, 64
    %v999 = vpop.permute.xlu0 %998
    %v1001 = vsel %vm563, %v999, 0
    %1003 = vmatprep.subr.bf16.mxu0 %v641
    %1004 = vmatpush1.bf16.msra.mxu0 %v640
    %1005 = vmatprep.subr.bf16.mxu0 %v643
    %1006 = vmatpush1.bf16.msra.mxu0 %v642
    %1007 = vmatprep.subr.bf16.mxu0 %v645
    %1008 = vmatpush1.bf16.msra.mxu0 %v644
    %1009 = vmatprep.subr.bf16.mxu0 %v647
    %1010 = vmatpush1.bf16.msra.mxu0 %v646
    %1011 = vmatprep.subr.bf16.mxu0 0
    %1012 = vmatpush1.bf16.msra.mxu0 0
    %1013 = vmatprep.subr.bf16.mxu0 0
    %1014 = vmatpush1.bf16.msra.mxu0 0
    %1015 = vmatprep.subr.bf16.mxu0 0
    %1016 = vmatpush1.bf16.msra.mxu0 0
    %1017 = vmatprep.subr.bf16.mxu0 0
    %1018 = vmatpush1.bf16.msra.mxu0 0
    %1019 = vmatprep.subr.bf16.mxu0 0
    %1020 = vmatpush1.bf16.msra.mxu0 0
    %1021 = vmatprep.subr.bf16.mxu0 0
    %1022 = vmatpush1.bf16.msra.mxu0 0
    %1023 = vmatprep.subr.bf16.mxu0 0
    %1024 = vmatpush1.bf16.msra.mxu0 0
    %1025 = vmatprep.subr.bf16.mxu0 0
    %1026 = vmatpush1.bf16.msra.mxu0 0
    %1027 = vmatprep.subr.bf16.mxu0 0
    %1028 = vmatpush1.bf16.msra.mxu0 0
    %1029 = vmatprep.subr.bf16.mxu0 0
    %1030 = vmatpush1.bf16.msra.mxu0 0
    %1031 = vmatprep.subr.bf16.mxu0 0
    %1032 = vmatpush1.bf16.msra.mxu0 0
    %1033 = vmatprep.subr.bf16.mxu0 0
    %1034 = vmatpush1.bf16.msra.mxu0 0
    %1035 = vmatprep.mubr.bf16.mxu0 0
    %1036 = vmatmul.mubr.bf16.gmra.mrb[0].mxu0 %v1001
    %v1037 = vpop.f32.mrb[0].mxu0
    %v1038 = vadd.f32 0.0, %v1037
    %v1039 = vpop.f32.mrb[0].mxu0
    %v1040 = vadd.f32 0.0, %v1039
    %v1041 = vpop.f32.mrb[0].mxu0
    %v1042 = vpop.f32.mrb[0].mxu0
    %1043 = vdwg.mxu0
    %v1044 = vadd.f32 %v996, %v1038
    %v1045 = vadd.f32 %v997, %v1040
    %v1046 = vxor.u32 %v991, 2147483648
    %v1047 = vxor.u32 %v992, 2147483648
    %v1048 = vmul.f32 %v1046, 1.442695
    %v1049 = vpow.pop %v1048
    %v1050 = vmul.f32 %v1047, 1.442695
    %v1051 = vpow.pop %v1050
    %v1052 = vadd.f32 %v1049, 1.0
    %v1053 = vadd.f32 %v1051, 1.0
    %v1054 = vrcp.pop %v1052
    %v1055 = vmul.f32 1.0, %v1054
    %v1056 = vrcp.pop %v1053
    %v1057 = vmul.f32 1.0, %v1056
    %v1058 = vtanh.pop %v992
    %v1059 = vmul.f32 %v1055, %v897
    %v1060 = vmul.f32 %v1055, %v1058
    %1062 = vrot.lane.b32.xlu0 %v1060, 64
    %v1063 = vpop.permute.xlu0 %1062
    %v1065 = vadd.f32 %v1059, %v1063
    %v1066 = vtanh.pop %v1065
    %v1067 = vmul.f32 %v1057, %v1066
    %v1068 = vxor.u32 %v1044, 2147483648
    %v1069 = vxor.u32 %v1045, 2147483648
    %v1070 = vmul.f32 %v1068, 1.442695
    %v1071 = vpow.pop %v1070
    %v1072 = vmul.f32 %v1069, 1.442695
    %v1073 = vpow.pop %v1072
    %v1074 = vadd.f32 %v1071, 1.0
    %v1075 = vadd.f32 %v1073, 1.0
    %v1076 = vrcp.pop %v1074
    %v1077 = vmul.f32 1.0, %v1076
    %v1078 = vrcp.pop %v1075
    %v1079 = vmul.f32 1.0, %v1078
    %v1080 = vtanh.pop %v1045
    %v1081 = vmul.f32 %v1077, %v919
    %v1082 = vmul.f32 %v1077, %v1080
    %1084 = vrot.lane.b32.xlu0 %v1082, 64
    %v1085 = vpop.permute.xlu0 %1084
    %v1087 = vadd.f32 %v1081, %v1085
    %v1088 = vtanh.pop %v1087
    %v1089 = vmul.f32 %v1079, %v1088
    %v1090 = vpack.c.bf16 %v1067, %v1067
    %v1092 = vunpack.c.l.b16 %v1090
    %v1093 = vpack.c.b16 %v1092, %v1092
    %1094 = vrot.lane.b32.xlu0 %v1093, 64
    %v1095 = vpop.permute.xlu0 %1094
    %s1097 = scalar_lea.vmem %s7, 8
    %1098 = vst.msk [vmem:[%s1097] sm:$0xf] %vm761, %v1095
    %v1099 = vpack.c.bf16 %v1089, %v1089
    %v1101 = vunpack.c.l.b16 %v1099
    %v1102 = vpack.c.b16 %v1101, %v1101
    %1103 = vrot.lane.b32.xlu0 %v1102, 64
    %v1104 = vpop.permute.xlu0 %1103
    %s1106 = scalar_lea.vmem %s78, 20
    %1107 = vst.msk [vmem:[%s1106] sm:$0xf] %vm761, %v1104
    %s1108 = smul.u32 3, 2
    %s1109 = smul.addr %s1108, 8
    %s1110 = scalar_lea.vmem [#allocation2], %s1109
    %v1111 = vld [vmem:[%s1110] sm:$0xff]
    %v1112 = vld [vmem:[%s1110 + $0x8] sm:$0xff]
    %1113 = vrot.lane.b32.xlu0 %v1090, 64
    %v1114 = vpop.permute.xlu0 %1113
    %v1116 = vsel %vm563, %v1114, 0
    %1118 = vmatprep.subr.bf16.mxu0 %v548
    %1119 = vmatpush1.bf16.msra.mxu0 %v547
    %1120 = vmatprep.subr.bf16.mxu0 %v550
    %1121 = vmatpush1.bf16.msra.mxu0 %v549
    %1122 = vmatprep.subr.bf16.mxu0 %v552
    %1123 = vmatpush1.bf16.msra.mxu0 %v551
    %1124 = vmatprep.subr.bf16.mxu0 %v554
    %1125 = vmatpush1.bf16.msra.mxu0 %v553
    %1126 = vmatprep.subr.bf16.mxu0 0
    %1127 = vmatpush1.bf16.msra.mxu0 0
    %1128 = vmatprep.subr.bf16.mxu0 0
    %1129 = vmatpush1.bf16.msra.mxu0 0
    %1130 = vmatprep.subr.bf16.mxu0 0
    %1131 = vmatpush1.bf16.msra.mxu0 0
    %1132 = vmatprep.subr.bf16.mxu0 0
    %1133 = vmatpush1.bf16.msra.mxu0 0
    %1134 = vmatprep.subr.bf16.mxu0 0
    %1135 = vmatpush1.bf16.msra.mxu0 0
    %1136 = vmatprep.subr.bf16.mxu0 0
    %1137 = vmatpush1.bf16.msra.mxu0 0
    %1138 = vmatprep.subr.bf16.mxu0 0
    %1139 = vmatpush1.bf16.msra.mxu0 0
    %1140 = vmatprep.subr.bf16.mxu0 0
    %1141 = vmatpush1.bf16.msra.mxu0 0
    %1142 = vmatprep.subr.bf16.mxu0 0
    %1143 = vmatpush1.bf16.msra.mxu0 0
    %1144 = vmatprep.subr.bf16.mxu0 0
    %1145 = vmatpush1.bf16.msra.mxu0 0
    %1146 = vmatprep.subr.bf16.mxu0 0
    %1147 = vmatpush1.bf16.msra.mxu0 0
    %1148 = vmatprep.subr.bf16.mxu0 0
    %1149 = vmatpush1.bf16.msra.mxu0 0
    %1150 = vmatprep.mubr.bf16.mxu0 0
    %1151 = vmatmul.mubr.bf16.gmra.mrb[0].mxu0 %v1116
    %v1152 = vpop.f32.mrb[0].mxu0
    %v1153 = vadd.f32 0.0, %v1152
    %v1154 = vpop.f32.mrb[0].mxu0
    %v1155 = vadd.f32 0.0, %v1154
    %v1156 = vpop.f32.mrb[0].mxu0
    %v1157 = vpop.f32.mrb[0].mxu0
    %1158 = vdwg.mxu0
    %v1159 = vadd.f32 %v1111, %v1153
    %v1160 = vadd.f32 %v1112, %v1155
    %s1161 = smul.u32 4, 2
    %s1162 = smul.addr %s1161, 8
    %s1163 = scalar_lea.vmem [#allocation3], %s1162
    %v1164 = vld [vmem:[%s1163] sm:$0xff]
    %v1165 = vld [vmem:[%s1163 + $0x8] sm:$0xff]
    %1166 = vrot.lane.b32.xlu0 %v1099, 64
    %v1167 = vpop.permute.xlu0 %1166
    %v1169 = vsel %vm563, %v1167, 0
    %1171 = vmatprep.subr.bf16.mxu0 %v641
    %1172 = vmatpush1.bf16.msra.mxu0 %v640
    %1173 = vmatprep.subr.bf16.mxu0 %v643
    %1174 = vmatpush1.bf16.msra.mxu0 %v642
    %1175 = vmatprep.subr.bf16.mxu0 %v645
    %1176 = vmatpush1.bf16.msra.mxu0 %v644
    %1177 = vmatprep.subr.bf16.mxu0 %v647
    %1178 = vmatpush1.bf16.msra.mxu0 %v646
    %1179 = vmatprep.subr.bf16.mxu0 0
    %1180 = vmatpush1.bf16.msra.mxu0 0
    %1181 = vmatprep.subr.bf16.mxu0 0
    %1182 = vmatpush1.bf16.msra.mxu0 0
    %1183 = vmatprep.subr.bf16.mxu0 0
    %1184 = vmatpush1.bf16.msra.mxu0 0
    %1185 = vmatprep.subr.bf16.mxu0 0
    %1186 = vmatpush1.bf16.msra.mxu0 0
    %1187 = vmatprep.subr.bf16.mxu0 0
    %1188 = vmatpush1.bf16.msra.mxu0 0
    %1189 = vmatprep.subr.bf16.mxu0 0
    %1190 = vmatpush1.bf16.msra.mxu0 0
    %1191 = vmatprep.subr.bf16.mxu0 0
    %1192 = vmatpush1.bf16.msra.mxu0 0
    %1193 = vmatprep.subr.bf16.mxu0 0
    %1194 = vmatpush1.bf16.msra.mxu0 0
    %1195 = vmatprep.subr.bf16.mxu0 0
    %1196 = vmatpush1.bf16.msra.mxu0 0
    %1197 = vmatprep.subr.bf16.mxu0 0
    %1198 = vmatpush1.bf16.msra.mxu0 0
    %1199 = vmatprep.subr.bf16.mxu0 0
    %1200 = vmatpush1.bf16.msra.mxu0 0
    %1201 = vmatprep.subr.bf16.mxu0 0
    %1202 = vmatpush1.bf16.msra.mxu0 0
    %1203 = vmatprep.mubr.bf16.mxu0 0
    %1204 = vmatmul.mubr.bf16.gmra.mrb[0].mxu0 %v1169
    %v1205 = vpop.f32.mrb[0].mxu0
    %v1206 = vadd.f32 0.0, %v1205
    %v1207 = vpop.f32.mrb[0].mxu0
    %v1208 = vadd.f32 0.0, %v1207
    %v1209 = vpop.f32.mrb[0].mxu0
    %v1210 = vpop.f32.mrb[0].mxu0
    %1211 = vdwg.mxu0
    %v1212 = vadd.f32 %v1164, %v1206
    %v1213 = vadd.f32 %v1165, %v1208
    %v1214 = vxor.u32 %v1159, 2147483648
    %v1215 = vxor.u32 %v1160, 2147483648
    %v1216 = vmul.f32 %v1214, 1.442695
    %v1217 = vpow.pop %v1216
    %v1218 = vmul.f32 %v1215, 1.442695
    %v1219 = vpow.pop %v1218
    %v1220 = vadd.f32 %v1217, 1.0
    %v1221 = vadd.f32 %v1219, 1.0
    %v1222 = vrcp.pop %v1220
    %v1223 = vmul.f32 1.0, %v1222
    %v1224 = vrcp.pop %v1221
    %v1225 = vmul.f32 1.0, %v1224
    %v1226 = vtanh.pop %v1160
    %v1227 = vmul.f32 %v1223, %v1065
    %v1228 = vmul.f32 %v1223, %v1226
    %1230 = vrot.lane.b32.xlu0 %v1228, 64
    %v1231 = vpop.permute.xlu0 %1230
    %v1233 = vadd.f32 %v1227, %v1231
    %v1234 = vtanh.pop %v1233
    %v1235 = vmul.f32 %v1225, %v1234
    %v1236 = vxor.u32 %v1212, 2147483648
    %v1237 = vxor.u32 %v1213, 2147483648
    %v1238 = vmul.f32 %v1236, 1.442695
    %v1239 = vpow.pop %v1238
    %v1240 = vmul.f32 %v1237, 1.442695
    %v1241 = vpow.pop %v1240
    %v1242 = vadd.f32 %v1239, 1.0
    %v1243 = vadd.f32 %v1241, 1.0
    %v1244 = vrcp.pop %v1242
    %v1245 = vmul.f32 1.0, %v1244
    %v1246 = vrcp.pop %v1243
    %v1247 = vmul.f32 1.0, %v1246
    %v1248 = vtanh.pop %v1213
    %v1249 = vmul.f32 %v1245, %v1087
    %v1250 = vmul.f32 %v1245, %v1248
    %1252 = vrot.lane.b32.xlu0 %v1250, 64
    %v1253 = vpop.permute.xlu0 %1252
    %v1255 = vadd.f32 %v1249, %v1253
    %v1256 = vtanh.pop %v1255
    %v1257 = vmul.f32 %v1247, %v1256
    %v1258 = vpack.c.bf16 %v1235, %v1235
    %v1260 = vunpack.c.l.b16 %v1258
    %v1261 = vpack.c.b16 %v1260, %v1260
    %1262 = vrot.lane.b32.xlu0 %v1261, 64
    %v1263 = vpop.permute.xlu0 %1262
    %s1265 = scalar_lea.vmem %s7, 12
    %1266 = vst.msk [vmem:[%s1265] sm:$0xf] %vm761, %v1263
    %v1267 = vpack.c.bf16 %v1257, %v1257
    %v1269 = vunpack.c.l.b16 %v1267
    %v1270 = vpack.c.b16 %v1269, %v1269
    %1271 = vrot.lane.b32.xlu0 %v1270, 64
    %v1272 = vpop.permute.xlu0 %1271
    %s1274 = scalar_lea.vmem %s78, 16
    %1275 = vst.msk [vmem:[%s1274] sm:$0xf] %vm761, %v1272
    %s1276 = smul.addr %s1161, 8
    %s1277 = scalar_lea.vmem [#allocation2], %s1276
    %v1278 = vld [vmem:[%s1277] sm:$0xff]
    %v1279 = vld [vmem:[%s1277 + $0x8] sm:$0xff]
    %1280 = vrot.lane.b32.xlu0 %v1258, 64
    %v1281 = vpop.permute.xlu0 %1280
    %v1283 = vsel %vm563, %v1281, 0
    %1285 = vmatprep.subr.bf16.mxu0 %v548
    %1286 = vmatpush1.bf16.msra.mxu0 %v547
    %1287 = vmatprep.subr.bf16.mxu0 %v550
    %1288 = vmatpush1.bf16.msra.mxu0 %v549
    %1289 = vmatprep.subr.bf16.mxu0 %v552
    %1290 = vmatpush1.bf16.msra.mxu0 %v551
    %1291 = vmatprep.subr.bf16.mxu0 %v554
    %1292 = vmatpush1.bf16.msra.mxu0 %v553
    %1293 = vmatprep.subr.bf16.mxu0 0
    %1294 = vmatpush1.bf16.msra.mxu0 0
    %1295 = vmatprep.subr.bf16.mxu0 0
    %1296 = vmatpush1.bf16.msra.mxu0 0
    %1297 = vmatprep.subr.bf16.mxu0 0
    %1298 = vmatpush1.bf16.msra.mxu0 0
    %1299 = vmatprep.subr.bf16.mxu0 0
    %1300 = vmatpush1.bf16.msra.mxu0 0
    %1301 = vmatprep.subr.bf16.mxu0 0
    %1302 = vmatpush1.bf16.msra.mxu0 0
    %1303 = vmatprep.subr.bf16.mxu0 0
    %1304 = vmatpush1.bf16.msra.mxu0 0
    %1305 = vmatprep.subr.bf16.mxu0 0
    %1306 = vmatpush1.bf16.msra.mxu0 0
    %1307 = vmatprep.subr.bf16.mxu0 0
    %1308 = vmatpush1.bf16.msra.mxu0 0
    %1309 = vmatprep.subr.bf16.mxu0 0
    %1310 = vmatpush1.bf16.msra.mxu0 0
    %1311 = vmatprep.subr.bf16.mxu0 0
    %1312 = vmatpush1.bf16.msra.mxu0 0
    %1313 = vmatprep.subr.bf16.mxu0 0
    %1314 = vmatpush1.bf16.msra.mxu0 0
    %1315 = vmatprep.subr.bf16.mxu0 0
    %1316 = vmatpush1.bf16.msra.mxu0 0
    %1317 = vmatprep.mubr.bf16.mxu0 0
    %1318 = vmatmul.mubr.bf16.gmra.mrb[0].mxu0 %v1283
    %v1319 = vpop.f32.mrb[0].mxu0
    %v1320 = vadd.f32 0.0, %v1319
    %v1321 = vpop.f32.mrb[0].mxu0
    %v1322 = vadd.f32 0.0, %v1321
    %v1323 = vpop.f32.mrb[0].mxu0
    %v1324 = vpop.f32.mrb[0].mxu0
    %1325 = vdwg.mxu0
    %v1326 = vadd.f32 %v1278, %v1320
    %v1327 = vadd.f32 %v1279, %v1322
    %s1328 = smul.addr %s1108, 8
    %s1329 = scalar_lea.vmem [#allocation3], %s1328
    %v1330 = vld [vmem:[%s1329] sm:$0xff]
    %v1331 = vld [vmem:[%s1329 + $0x8] sm:$0xff]
    %1332 = vrot.lane.b32.xlu0 %v1267, 64
    %v1333 = vpop.permute.xlu0 %1332
    %v1335 = vsel %vm563, %v1333, 0
    %1337 = vmatprep.subr.bf16.mxu0 %v641
    %1338 = vmatpush1.bf16.msra.mxu0 %v640
    %1339 = vmatprep.subr.bf16.mxu0 %v643
    %1340 = vmatpush1.bf16.msra.mxu0 %v642
    %1341 = vmatprep.subr.bf16.mxu0 %v645
    %1342 = vmatpush1.bf16.msra.mxu0 %v644
    %1343 = vmatprep.subr.bf16.mxu0 %v647
    %1344 = vmatpush1.bf16.msra.mxu0 %v646
    %1345 = vmatprep.subr.bf16.mxu0 0
    %1346 = vmatpush1.bf16.msra.mxu0 0
    %1347 = vmatprep.subr.bf16.mxu0 0
    %1348 = vmatpush1.bf16.msra.mxu0 0
    %1349 = vmatprep.subr.bf16.mxu0 0
    %1350 = vmatpush1.bf16.msra.mxu0 0
    %1351 = vmatprep.subr.bf16.mxu0 0
    %1352 = vmatpush1.bf16.msra.mxu0 0
    %1353 = vmatprep.subr.bf16.mxu0 0
    %1354 = vmatpush1.bf16.msra.mxu0 0
    %1355 = vmatprep.subr.bf16.mxu0 0
    %1356 = vmatpush1.bf16.msra.mxu0 0
    %1357 = vmatprep.subr.bf16.mxu0 0
    %1358 = vmatpush1.bf16.msra.mxu0 0
    %1359 = vmatprep.subr.bf16.mxu0 0
    %1360 = vmatpush1.bf16.msra.mxu0 0
    %1361 = vmatprep.subr.bf16.mxu0 0
    %1362 = vmatpush1.bf16.msra.mxu0 0
    %1363 = vmatprep.subr.bf16.mxu0 0
    %1364 = vmatpush1.bf16.msra.mxu0 0
    %1365 = vmatprep.subr.bf16.mxu0 0
    %1366 = vmatpush1.bf16.msra.mxu0 0
    %1367 = vmatprep.subr.bf16.mxu0 0
    %1368 = vmatpush1.bf16.msra.mxu0 0
    %1369 = vmatprep.mubr.bf16.mxu0 0
    %1370 = vmatmul.mubr.bf16.gmra.mrb[0].mxu0 %v1335
    %v1371 = vpop.f32.mrb[0].mxu0
    %v1372 = vadd.f32 0.0, %v1371
    %v1373 = vpop.f32.mrb[0].mxu0
    %v1374 = vadd.f32 0.0, %v1373
    %v1375 = vpop.f32.mrb[0].mxu0
    %v1376 = vpop.f32.mrb[0].mxu0
    %1377 = vdwg.mxu0
    %v1378 = vadd.f32 %v1330, %v1372
    %v1379 = vadd.f32 %v1331, %v1374
    %v1380 = vxor.u32 %v1326, 2147483648
    %v1381 = vxor.u32 %v1327, 2147483648
    %v1382 = vmul.f32 %v1380, 1.442695
    %v1383 = vpow.pop %v1382
    %v1384 = vmul.f32 %v1381, 1.442695
    %v1385 = vpow.pop %v1384
    %v1386 = vadd.f32 %v1383, 1.0
    %v1387 = vadd.f32 %v1385, 1.0
    %v1388 = vrcp.pop %v1386
    %v1389 = vmul.f32 1.0, %v1388
    %v1390 = vrcp.pop %v1387
    %v1391 = vmul.f32 1.0, %v1390
    %v1392 = vtanh.pop %v1327
    %v1393 = vmul.f32 %v1389, %v1233
    %v1394 = vmul.f32 %v1389, %v1392
    %1396 = vrot.lane.b32.xlu0 %v1394, 64
    %v1397 = vpop.permute.xlu0 %1396
    %v1399 = vadd.f32 %v1393, %v1397
    %v1400 = vtanh.pop %v1399
    %v1401 = vmul.f32 %v1391, %v1400
    %v1402 = vxor.u32 %v1378, 2147483648
    %v1403 = vxor.u32 %v1379, 2147483648
    %v1404 = vmul.f32 %v1402, 1.442695
    %v1405 = vpow.pop %v1404
    %v1406 = vmul.f32 %v1403, 1.442695
    %v1407 = vpow.pop %v1406
    %v1408 = vadd.f32 %v1405, 1.0
    %v1409 = vadd.f32 %v1407, 1.0
    %v1410 = vrcp.pop %v1408
    %v1411 = vmul.f32 1.0, %v1410
    %v1412 = vrcp.pop %v1409
    %v1413 = vmul.f32 1.0, %v1412
    %v1414 = vtanh.pop %v1379
    %v1415 = vmul.f32 %v1411, %v1255
    %v1416 = vmul.f32 %v1411, %v1414
    %1418 = vrot.lane.b32.xlu0 %v1416, 64
    %v1419 = vpop.permute.xlu0 %1418
    %v1421 = vadd.f32 %v1415, %v1419
    %v1422 = vtanh.pop %v1421
    %v1423 = vmul.f32 %v1413, %v1422
    %v1424 = vpack.c.bf16 %v1401, %v1401
    %v1426 = vunpack.c.l.b16 %v1424
    %v1427 = vpack.c.b16 %v1426, %v1426
    %1428 = vrot.lane.b32.xlu0 %v1427, 64
    %v1429 = vpop.permute.xlu0 %1428
    %s1431 = scalar_lea.vmem %s7, 16
    %1432 = vst.msk [vmem:[%s1431] sm:$0xf] %vm761, %v1429
    %v1433 = vpack.c.bf16 %v1423, %v1423
    %v1435 = vunpack.c.l.b16 %v1433
    %v1436 = vpack.c.b16 %v1435, %v1435
    %1437 = vrot.lane.b32.xlu0 %v1436, 64
    %v1438 = vpop.permute.xlu0 %1437
    %s1440 = scalar_lea.vmem %s78, 12
    %1441 = vst.msk [vmem:[%s1440] sm:$0xf] %vm761, %v1438
    %s1442 = smul.addr %s993, 8
    %s1443 = scalar_lea.vmem [#allocation2], %s1442
    %v1444 = vld [vmem:[%s1443] sm:$0xff]
    %v1445 = vld [vmem:[%s1443 + $0x8] sm:$0xff]
    %1446 = vrot.lane.b32.xlu0 %v1424, 64
    %v1447 = vpop.permute.xlu0 %1446
    %v1449 = vsel %vm563, %v1447, 0
    %1451 = vmatprep.subr.bf16.mxu0 %v548
    %1452 = vmatpush1.bf16.msra.mxu0 %v547
    %1453 = vmatprep.subr.bf16.mxu0 %v550
    %1454 = vmatpush1.bf16.msra.mxu0 %v549
    %1455 = vmatprep.subr.bf16.mxu0 %v552
    %1456 = vmatpush1.bf16.msra.mxu0 %v551
    %1457 = vmatprep.subr.bf16.mxu0 %v554
    %1458 = vmatpush1.bf16.msra.mxu0 %v553
    %1459 = vmatprep.subr.bf16.mxu0 0
    %1460 = vmatpush1.bf16.msra.mxu0 0
    %1461 = vmatprep.subr.bf16.mxu0 0
    %1462 = vmatpush1.bf16.msra.mxu0 0
    %1463 = vmatprep.subr.bf16.mxu0 0
    %1464 = vmatpush1.bf16.msra.mxu0 0
    %1465 = vmatprep.subr.bf16.mxu0 0
    %1466 = vmatpush1.bf16.msra.mxu0 0
    %1467 = vmatprep.subr.bf16.mxu0 0
    %1468 = vmatpush1.bf16.msra.mxu0 0
    %1469 = vmatprep.subr.bf16.mxu0 0
    %1470 = vmatpush1.bf16.msra.mxu0 0
    %1471 = vmatprep.subr.bf16.mxu0 0
    %1472 = vmatpush1.bf16.msra.mxu0 0
    %1473 = vmatprep.subr.bf16.mxu0 0
    %1474 = vmatpush1.bf16.msra.mxu0 0
    %1475 = vmatprep.subr.bf16.mxu0 0
    %1476 = vmatpush1.bf16.msra.mxu0 0
    %1477 = vmatprep.subr.bf16.mxu0 0
    %1478 = vmatpush1.bf16.msra.mxu0 0
    %1479 = vmatprep.subr.bf16.mxu0 0
    %1480 = vmatpush1.bf16.msra.mxu0 0
    %1481 = vmatprep.subr.bf16.mxu0 0
    %1482 = vmatpush1.bf16.msra.mxu0 0
    %1483 = vmatprep.mubr.bf16.mxu0 0
    %1484 = vmatmul.mubr.bf16.gmra.mrb[0].mxu0 %v1449
    %v1485 = vpop.f32.mrb[0].mxu0
    %v1486 = vadd.f32 0.0, %v1485
    %v1487 = vpop.f32.mrb[0].mxu0
    %v1488 = vadd.f32 0.0, %v1487
    %v1489 = vpop.f32.mrb[0].mxu0
    %v1490 = vpop.f32.mrb[0].mxu0
    %1491 = vdwg.mxu0
    %v1492 = vadd.f32 %v1444, %v1486
    %v1493 = vadd.f32 %v1445, %v1488
    %s1494 = smul.addr %s940, 8
    %s1495 = scalar_lea.vmem [#allocation3], %s1494
    %v1496 = vld [vmem:[%s1495] sm:$0xff]
    %v1497 = vld [vmem:[%s1495 + $0x8] sm:$0xff]
    %1498 = vrot.lane.b32.xlu0 %v1433, 64
    %v1499 = vpop.permute.xlu0 %1498
    %v1501 = vsel %vm563, %v1499, 0
    %1503 = vmatprep.subr.bf16.mxu0 %v641
    %1504 = vmatpush1.bf16.msra.mxu0 %v640
    %1505 = vmatprep.subr.bf16.mxu0 %v643
    %1506 = vmatpush1.bf16.msra.mxu0 %v642
    %1507 = vmatprep.subr.bf16.mxu0 %v645
    %1508 = vmatpush1.bf16.msra.mxu0 %v644
    %1509 = vmatprep.subr.bf16.mxu0 %v647
    %1510 = vmatpush1.bf16.msra.mxu0 %v646
    %1511 = vmatprep.subr.bf16.mxu0 0
    %1512 = vmatpush1.bf16.msra.mxu0 0
    %1513 = vmatprep.subr.bf16.mxu0 0
    %1514 = vmatpush1.bf16.msra.mxu0 0
    %1515 = vmatprep.subr.bf16.mxu0 0
    %1516 = vmatpush1.bf16.msra.mxu0 0
    %1517 = vmatprep.subr.bf16.mxu0 0
    %1518 = vmatpush1.bf16.msra.mxu0 0
    %1519 = vmatprep.subr.bf16.mxu0 0
    %1520 = vmatpush1.bf16.msra.mxu0 0
    %1521 = vmatprep.subr.bf16.mxu0 0
    %1522 = vmatpush1.bf16.msra.mxu0 0
    %1523 = vmatprep.subr.bf16.mxu0 0
    %1524 = vmatpush1.bf16.msra.mxu0 0
    %1525 = vmatprep.subr.bf16.mxu0 0
    %1526 = vmatpush1.bf16.msra.mxu0 0
    %1527 = vmatprep.subr.bf16.mxu0 0
    %1528 = vmatpush1.bf16.msra.mxu0 0
    %1529 = vmatprep.subr.bf16.mxu0 0
    %1530 = vmatpush1.bf16.msra.mxu0 0
    %1531 = vmatprep.subr.bf16.mxu0 0
    %1532 = vmatpush1.bf16.msra.mxu0 0
    %1533 = vmatprep.subr.bf16.mxu0 0
    %1534 = vmatpush1.bf16.msra.mxu0 0
    %1535 = vmatprep.mubr.bf16.mxu0 0
    %1536 = vmatmul.mubr.bf16.gmra.mrb[0].mxu0 %v1501
    %v1537 = vpop.f32.mrb[0].mxu0
    %v1538 = vadd.f32 0.0, %v1537
    %v1539 = vpop.f32.mrb[0].mxu0
    %v1540 = vadd.f32 0.0, %v1539
    %v1541 = vpop.f32.mrb[0].mxu0
    %v1542 = vpop.f32.mrb[0].mxu0
    %1543 = vdwg.mxu0
    %v1544 = vadd.f32 %v1496, %v1538
    %v1545 = vadd.f32 %v1497, %v1540
    %v1546 = vxor.u32 %v1492, 2147483648
    %v1547 = vxor.u32 %v1493, 2147483648
    %v1548 = vmul.f32 %v1546, 1.442695
    %v1549 = vpow.pop %v1548
    %v1550 = vmul.f32 %v1547, 1.442695
    %v1551 = vpow.pop %v1550
    %v1552 = vadd.f32 %v1549, 1.0
    %v1553 = vadd.f32 %v1551, 1.0
    %v1554 = vrcp.pop %v1552
    %v1555 = vmul.f32 1.0, %v1554
    %v1556 = vrcp.pop %v1553
    %v1557 = vmul.f32 1.0, %v1556
    %v1558 = vtanh.pop %v1493
    %v1559 = vmul.f32 %v1555, %v1399
    %v1560 = vmul.f32 %v1555, %v1558
    %1562 = vrot.lane.b32.xlu0 %v1560, 64
    %v1563 = vpop.permute.xlu0 %1562
    %v1565 = vadd.f32 %v1559, %v1563
    %v1566 = vtanh.pop %v1565
    %v1567 = vmul.f32 %v1557, %v1566
    %v1568 = vxor.u32 %v1544, 2147483648
    %v1569 = vxor.u32 %v1545, 2147483648
    %v1570 = vmul.f32 %v1568, 1.442695
    %v1571 = vpow.pop %v1570
    %v1572 = vmul.f32 %v1569, 1.442695
    %v1573 = vpow.pop %v1572
    %v1574 = vadd.f32 %v1571, 1.0
    %v1575 = vadd.f32 %v1573, 1.0
    %v1576 = vrcp.pop %v1574
    %v1577 = vmul.f32 1.0, %v1576
    %v1578 = vrcp.pop %v1575
    %v1579 = vmul.f32 1.0, %v1578
    %v1580 = vtanh.pop %v1545
    %v1581 = vmul.f32 %v1577, %v1421
    %v1582 = vmul.f32 %v1577, %v1580
    %1584 = vrot.lane.b32.xlu0 %v1582, 64
    %v1585 = vpop.permute.xlu0 %1584
    %v1587 = vadd.f32 %v1581, %v1585
    %v1588 = vtanh.pop %v1587
    %v1589 = vmul.f32 %v1579, %v1588
    %v1590 = vpack.c.bf16 %v1567, %v1567
    %v1592 = vunpack.c.l.b16 %v1590
    %v1593 = vpack.c.b16 %v1592, %v1592
    %1594 = vrot.lane.b32.xlu0 %v1593, 64
    %v1595 = vpop.permute.xlu0 %1594
    %s1597 = scalar_lea.vmem %s7, 20
    %1598 = vst.msk [vmem:[%s1597] sm:$0xf] %vm761, %v1595
    %v1599 = vpack.c.bf16 %v1589, %v1589
    %v1601 = vunpack.c.l.b16 %v1599
    %v1602 = vpack.c.b16 %v1601, %v1601
    %1603 = vrot.lane.b32.xlu0 %v1602, 64
    %v1604 = vpop.permute.xlu0 %1603
    %s1606 = scalar_lea.vmem %s78, 8
    %1607 = vst.msk [vmem:[%s1606] sm:$0xf] %vm761, %v1604
    %s1608 = smul.addr %s825, 8
    %s1609 = scalar_lea.vmem [#allocation2], %s1608
    %v1610 = vld [vmem:[%s1609] sm:$0xff]
    %v1611 = vld [vmem:[%s1609 + $0x8] sm:$0xff]
    %1612 = vrot.lane.b32.xlu0 %v1590, 64
    %v1613 = vpop.permute.xlu0 %1612
    %v1615 = vsel %vm563, %v1613, 0
    %1617 = vmatprep.subr.bf16.mxu0 %v548
    %1618 = vmatpush1.bf16.msra.mxu0 %v547
    %1619 = vmatprep.subr.bf16.mxu0 %v550
    %1620 = vmatpush1.bf16.msra.mxu0 %v549
    %1621 = vmatprep.subr.bf16.mxu0 %v552
    %1622 = vmatpush1.bf16.msra.mxu0 %v551
    %1623 = vmatprep.subr.bf16.mxu0 %v554
    %1624 = vmatpush1.bf16.msra.mxu0 %v553
    %1625 = vmatprep.subr.bf16.mxu0 0
    %1626 = vmatpush1.bf16.msra.mxu0 0
    %1627 = vmatprep.subr.bf16.mxu0 0
    %1628 = vmatpush1.bf16.msra.mxu0 0
    %1629 = vmatprep.subr.bf16.mxu0 0
    %1630 = vmatpush1.bf16.msra.mxu0 0
    %1631 = vmatprep.subr.bf16.mxu0 0
    %1632 = vmatpush1.bf16.msra.mxu0 0
    %1633 = vmatprep.subr.bf16.mxu0 0
    %1634 = vmatpush1.bf16.msra.mxu0 0
    %1635 = vmatprep.subr.bf16.mxu0 0
    %1636 = vmatpush1.bf16.msra.mxu0 0
    %1637 = vmatprep.subr.bf16.mxu0 0
    %1638 = vmatpush1.bf16.msra.mxu0 0
    %1639 = vmatprep.subr.bf16.mxu0 0
    %1640 = vmatpush1.bf16.msra.mxu0 0
    %1641 = vmatprep.subr.bf16.mxu0 0
    %1642 = vmatpush1.bf16.msra.mxu0 0
    %1643 = vmatprep.subr.bf16.mxu0 0
    %1644 = vmatpush1.bf16.msra.mxu0 0
    %1645 = vmatprep.subr.bf16.mxu0 0
    %1646 = vmatpush1.bf16.msra.mxu0 0
    %1647 = vmatprep.subr.bf16.mxu0 0
    %1648 = vmatpush1.bf16.msra.mxu0 0
    %1649 = vmatprep.mubr.bf16.mxu0 0
    %1650 = vmatmul.mubr.bf16.gmra.mrb[0].mxu0 %v1615
    %v1651 = vpop.f32.mrb[0].mxu0
    %v1652 = vadd.f32 0.0, %v1651
    %v1653 = vpop.f32.mrb[0].mxu0
    %v1654 = vadd.f32 0.0, %v1653
    %v1655 = vpop.f32.mrb[0].mxu0
    %v1656 = vpop.f32.mrb[0].mxu0
    %1657 = vdwg.mxu0
    %v1658 = vadd.f32 %v1610, %v1652
    %v1659 = vadd.f32 %v1611, %v1654
    %s1660 = smul.addr %s772, 8
    %s1661 = scalar_lea.vmem [#allocation3], %s1660
    %v1662 = vld [vmem:[%s1661] sm:$0xff]
    %v1663 = vld [vmem:[%s1661 + $0x8] sm:$0xff]
    %1664 = vrot.lane.b32.xlu0 %v1599, 64
    %v1665 = vpop.permute.xlu0 %1664
    %v1667 = vsel %vm563, %v1665, 0
    %1669 = vmatprep.subr.bf16.mxu0 %v641
    %1670 = vmatpush1.bf16.msra.mxu0 %v640
    %1671 = vmatprep.subr.bf16.mxu0 %v643
    %1672 = vmatpush1.bf16.msra.mxu0 %v642
    %1673 = vmatprep.subr.bf16.mxu0 %v645
    %1674 = vmatpush1.bf16.msra.mxu0 %v644
    %1675 = vmatprep.subr.bf16.mxu0 %v647
    %1676 = vmatpush1.bf16.msra.mxu0 %v646
    %1677 = vmatprep.subr.bf16.mxu0 0
    %1678 = vmatpush1.bf16.msra.mxu0 0
    %1679 = vmatprep.subr.bf16.mxu0 0
    %1680 = vmatpush1.bf16.msra.mxu0 0
    %1681 = vmatprep.subr.bf16.mxu0 0
    %1682 = vmatpush1.bf16.msra.mxu0 0
    %1683 = vmatprep.subr.bf16.mxu0 0
    %1684 = vmatpush1.bf16.msra.mxu0 0
    %1685 = vmatprep.subr.bf16.mxu0 0
    %1686 = vmatpush1.bf16.msra.mxu0 0
    %1687 = vmatprep.subr.bf16.mxu0 0
    %1688 = vmatpush1.bf16.msra.mxu0 0
    %1689 = vmatprep.subr.bf16.mxu0 0
    %1690 = vmatpush1.bf16.msra.mxu0 0
    %1691 = vmatprep.subr.bf16.mxu0 0
    %1692 = vmatpush1.bf16.msra.mxu0 0
    %1693 = vmatprep.subr.bf16.mxu0 0
    %1694 = vmatpush1.bf16.msra.mxu0 0
    %1695 = vmatprep.subr.bf16.mxu0 0
    %1696 = vmatpush1.bf16.msra.mxu0 0
    %1697 = vmatprep.subr.bf16.mxu0 0
    %1698 = vmatpush1.bf16.msra.mxu0 0
    %1699 = vmatprep.subr.bf16.mxu0 0
    %1700 = vmatpush1.bf16.msra.mxu0 0
    %1701 = vmatprep.mubr.bf16.mxu0 0
    %1702 = vmatmul.mubr.bf16.gmra.mrb[0].mxu0 %v1667
    %v1703 = vpop.f32.mrb[0].mxu0
    %v1704 = vadd.f32 0.0, %v1703
    %v1705 = vpop.f32.mrb[0].mxu0
    %v1706 = vadd.f32 0.0, %v1705
    %v1707 = vpop.f32.mrb[0].mxu0
    %v1708 = vpop.f32.mrb[0].mxu0
    %1709 = vdwg.mxu0
    %v1710 = vadd.f32 %v1662, %v1704
    %v1711 = vadd.f32 %v1663, %v1706
    %v1712 = vxor.u32 %v1658, 2147483648
    %v1713 = vxor.u32 %v1659, 2147483648
    %v1714 = vmul.f32 %v1712, 1.442695
    %v1715 = vpow.pop %v1714
    %v1716 = vmul.f32 %v1713, 1.442695
    %v1717 = vpow.pop %v1716
    %v1718 = vadd.f32 %v1715, 1.0
    %v1719 = vadd.f32 %v1717, 1.0
    %v1720 = vrcp.pop %v1718
    %v1721 = vmul.f32 1.0, %v1720
    %v1722 = vrcp.pop %v1719
    %v1723 = vmul.f32 1.0, %v1722
    %v1724 = vtanh.pop %v1659
    %v1725 = vmul.f32 %v1721, %v1565
    %v1726 = vmul.f32 %v1721, %v1724
    %1728 = vrot.lane.b32.xlu0 %v1726, 64
    %v1729 = vpop.permute.xlu0 %1728
    %v1731 = vadd.f32 %v1725, %v1729
    %v1732 = vtanh.pop %v1731
    %v1733 = vmul.f32 %v1723, %v1732
    %v1734 = vxor.u32 %v1710, 2147483648
    %v1735 = vxor.u32 %v1711, 2147483648
    %v1736 = vmul.f32 %v1734, 1.442695
    %v1737 = vpow.pop %v1736
    %v1738 = vmul.f32 %v1735, 1.442695
    %v1739 = vpow.pop %v1738
    %v1740 = vadd.f32 %v1737, 1.0
    %v1741 = vadd.f32 %v1739, 1.0
    %v1742 = vrcp.pop %v1740
    %v1743 = vmul.f32 1.0, %v1742
    %v1744 = vrcp.pop %v1741
    %v1745 = vmul.f32 1.0, %v1744
    %v1746 = vtanh.pop %v1711
    %v1747 = vmul.f32 %v1743, %v1587
    %v1748 = vmul.f32 %v1743, %v1746
    %1750 = vrot.lane.b32.xlu0 %v1748, 64
    %v1751 = vpop.permute.xlu0 %1750
    %v1753 = vadd.f32 %v1747, %v1751
    %v1754 = vtanh.pop %v1753
    %v1755 = vmul.f32 %v1745, %v1754
    %v1756 = vpack.c.bf16 %v1733, %v1733
    %v1758 = vunpack.c.l.b16 %v1756
    %v1759 = vpack.c.b16 %v1758, %v1758
    %1760 = vrot.lane.b32.xlu0 %v1759, 64
    %v1761 = vpop.permute.xlu0 %1760
    %s1763 = scalar_lea.vmem %s7, 24
    %1764 = vst.msk [vmem:[%s1763] sm:$0xf] %vm761, %v1761
    %v1765 = vpack.c.bf16 %v1755, %v1755
    %v1767 = vunpack.c.l.b16 %v1765
    %v1768 = vpack.c.b16 %v1767, %v1767
    %1769 = vrot.lane.b32.xlu0 %v1768, 64
    %v1770 = vpop.permute.xlu0 %1769
    %s1772 = scalar_lea.vmem %s78, 4
    %1773 = vst.msk [vmem:[%s1772] sm:$0xf] %vm761, %v1770
    %s1774 = smul.addr %s610, 8
    %s1775 = scalar_lea.vmem [#allocation2], %s1774
    %v1776 = vld [vmem:[%s1775] sm:$0xff]
    %v1777 = vld [vmem:[%s1775 + $0x8] sm:$0xff]
    %1778 = vrot.lane.b32.xlu0 %v1756, 64
    %v1779 = vpop.permute.xlu0 %1778
    %v1781 = vsel %vm563, %v1779, 0
    %1783 = vmatprep.subr.bf16.mxu0 %v548
    %1784 = vmatpush1.bf16.msra.mxu0 %v547
    %1785 = vmatprep.subr.bf16.mxu0 %v550
    %1786 = vmatpush1.bf16.msra.mxu0 %v549
    %1787 = vmatprep.subr.bf16.mxu0 %v552
    %1788 = vmatpush1.bf16.msra.mxu0 %v551
    %1789 = vmatprep.subr.bf16.mxu0 %v554
    %1790 = vmatpush1.bf16.msra.mxu0 %v553
    %1791 = vmatprep.subr.bf16.mxu0 0
    %1792 = vmatpush1.bf16.msra.mxu0 0
    %1793 = vmatprep.subr.bf16.mxu0 0
    %1794 = vmatpush1.bf16.msra.mxu0 0
    %1795 = vmatprep.subr.bf16.mxu0 0
    %1796 = vmatpush1.bf16.msra.mxu0 0
    %1797 = vmatprep.subr.bf16.mxu0 0
    %1798 = vmatpush1.bf16.msra.mxu0 0
    %1799 = vmatprep.subr.bf16.mxu0 0
    %1800 = vmatpush1.bf16.msra.mxu0 0
    %1801 = vmatprep.subr.bf16.mxu0 0
    %1802 = vmatpush1.bf16.msra.mxu0 0
    %1803 = vmatprep.subr.bf16.mxu0 0
    %1804 = vmatpush1.bf16.msra.mxu0 0
    %1805 = vmatprep.subr.bf16.mxu0 0
    %1806 = vmatpush1.bf16.msra.mxu0 0
    %1807 = vmatprep.subr.bf16.mxu0 0
    %1808 = vmatpush1.bf16.msra.mxu0 0
    %1809 = vmatprep.subr.bf16.mxu0 0
    %1810 = vmatpush1.bf16.msra.mxu0 0
    %1811 = vmatprep.subr.bf16.mxu0 0
    %1812 = vmatpush1.bf16.msra.mxu0 0
    %1813 = vmatprep.subr.bf16.mxu0 0
    %1814 = vmatpush1.bf16.msra.mxu0 0
    %1815 = vmatprep.mubr.bf16.mxu0 0
    %1816 = vmatmul.mubr.bf16.gmra.mrb[0].mxu0 %v1781
    %v1817 = vpop.f32.mrb[0].mxu0
    %v1818 = vadd.f32 0.0, %v1817
    %v1819 = vpop.f32.mrb[0].mxu0
    %v1820 = vadd.f32 0.0, %v1819
    %v1821 = vpop.f32.mrb[0].mxu0
    %v1822 = vpop.f32.mrb[0].mxu0
    %1823 = vdwg.mxu0
    %v1824 = vadd.f32 %v1776, %v1818
    %v1825 = vadd.f32 %v1777, %v1820
    %s1826 = smul.addr %s517, 8
    %s1827 = scalar_lea.vmem [#allocation3], %s1826
    %v1828 = vld [vmem:[%s1827] sm:$0xff]
    %v1829 = vld [vmem:[%s1827 + $0x8] sm:$0xff]
    %1830 = vrot.lane.b32.xlu0 %v1765, 64
    %v1831 = vpop.permute.xlu0 %1830
    %v1833 = vsel %vm563, %v1831, 0
    %1835 = vmatprep.subr.bf16.mxu0 %v641
    %1836 = vmatpush1.bf16.msra.mxu0 %v640
    %1837 = vmatprep.subr.bf16.mxu0 %v643
    %1838 = vmatpush1.bf16.msra.mxu0 %v642
    %1839 = vmatprep.subr.bf16.mxu0 %v645
    %1840 = vmatpush1.bf16.msra.mxu0 %v644
    %1841 = vmatprep.subr.bf16.mxu0 %v647
    %1842 = vmatpush1.bf16.msra.mxu0 %v646
    %1843 = vmatprep.subr.bf16.mxu0 0
    %1844 = vmatpush1.bf16.msra.mxu0 0
    %1845 = vmatprep.subr.bf16.mxu0 0
    %1846 = vmatpush1.bf16.msra.mxu0 0
    %1847 = vmatprep.subr.bf16.mxu0 0
    %1848 = vmatpush1.bf16.msra.mxu0 0
    %1849 = vmatprep.subr.bf16.mxu0 0
    %1850 = vmatpush1.bf16.msra.mxu0 0
    %1851 = vmatprep.subr.bf16.mxu0 0
    %1852 = vmatpush1.bf16.msra.mxu0 0
    %1853 = vmatprep.subr.bf16.mxu0 0
    %1854 = vmatpush1.bf16.msra.mxu0 0
    %1855 = vmatprep.subr.bf16.mxu0 0
    %1856 = vmatpush1.bf16.msra.mxu0 0
    %1857 = vmatprep.subr.bf16.mxu0 0
    %1858 = vmatpush1.bf16.msra.mxu0 0
    %1859 = vmatprep.subr.bf16.mxu0 0
    %1860 = vmatpush1.bf16.msra.mxu0 0
    %1861 = vmatprep.subr.bf16.mxu0 0
    %1862 = vmatpush1.bf16.msra.mxu0 0
    %1863 = vmatprep.subr.bf16.mxu0 0
    %1864 = vmatpush1.bf16.msra.mxu0 0
    %1865 = vmatprep.subr.bf16.mxu0 0
    %1866 = vmatpush1.bf16.msra.mxu0 0
    %1867 = vmatprep.mubr.bf16.mxu0 0
    %1868 = vmatmul.mubr.bf16.gmra.mrb[0].mxu0 %v1833
    %v1869 = vpop.f32.mrb[0].mxu0
    %v1870 = vadd.f32 0.0, %v1869
    %v1871 = vpop.f32.mrb[0].mxu0
    %v1872 = vadd.f32 0.0, %v1871
    %v1873 = vpop.f32.mrb[0].mxu0
    %v1874 = vpop.f32.mrb[0].mxu0
    %1875 = vdwg.mxu0
    %v1876 = vadd.f32 %v1828, %v1870
    %v1877 = vadd.f32 %v1829, %v1872
    %v1878 = vxor.u32 %v1824, 2147483648
    %v1879 = vxor.u32 %v1825, 2147483648
    %v1880 = vmul.f32 %v1878, 1.442695
    %v1881 = vpow.pop %v1880
    %v1882 = vmul.f32 %v1879, 1.442695
    %v1883 = vpow.pop %v1882
    %v1884 = vadd.f32 %v1881, 1.0
    %v1885 = vadd.f32 %v1883, 1.0
    %v1886 = vrcp.pop %v1884
    %v1887 = vmul.f32 1.0, %v1886
    %v1888 = vrcp.pop %v1885
    %v1889 = vmul.f32 1.0, %v1888
    %v1890 = vtanh.pop %v1825
    %v1891 = vmul.f32 %v1887, %v1731
    %v1892 = vmul.f32 %v1887, %v1890
    %1894 = vrot.lane.b32.xlu0 %v1892, 64
    %v1895 = vpop.permute.xlu0 %1894
    %v1897 = vadd.f32 %v1891, %v1895
    %v1898 = vtanh.pop %v1897
    %v1899 = vmul.f32 %v1889, %v1898
    %v1900 = vxor.u32 %v1876, 2147483648
    %v1901 = vxor.u32 %v1877, 2147483648
    %v1902 = vmul.f32 %v1900, 1.442695
    %v1903 = vpow.pop %v1902
    %v1904 = vmul.f32 %v1901, 1.442695
    %v1905 = vpow.pop %v1904
    %v1906 = vadd.f32 %v1903, 1.0
    %v1907 = vadd.f32 %v1905, 1.0
    %v1908 = vrcp.pop %v1906
    %v1909 = vmul.f32 1.0, %v1908
    %v1910 = vrcp.pop %v1907
    %v1911 = vmul.f32 1.0, %v1910
    %v1912 = vtanh.pop %v1877
    %v1913 = vmul.f32 %v1909, %v1753
    %v1914 = vmul.f32 %v1909, %v1912
    %1916 = vrot.lane.b32.xlu0 %v1914, 64
    %v1917 = vpop.permute.xlu0 %1916
    %v1919 = vadd.f32 %v1913, %v1917
    %v1920 = vtanh.pop %v1919
    %v1921 = vmul.f32 %v1911, %v1920
    %v1922 = vpack.c.bf16 %v1899, %v1899
    %v1924 = vunpack.c.l.b16 %v1922
    %v1925 = vpack.c.b16 %v1924, %v1924
    %1926 = vrot.lane.b32.xlu0 %v1925, 64
    %v1927 = vpop.permute.xlu0 %1926
    %s1929 = scalar_lea.vmem %s7, 28
    %1930 = vst.msk [vmem:[%s1929] sm:$0xf] %vm761, %v1927
    %v1931 = vpack.c.bf16 %v1921, %v1921
    %v1933 = vunpack.c.l.b16 %v1931
    %v1934 = vpack.c.b16 %v1933, %v1933
    %1935 = vrot.lane.b32.xlu0 %v1934, 64
    %v1936 = vpop.permute.xlu0 %1935
    %1938 = vst.msk [vmem:[%s78] sm:$0xf] %vm761, %v1936
    %1940 = vrot.lane.b32.xlu0 %v1899, 64
    %v1941 = vpop.permute.xlu0 %1940
    %1943 = vst.msk [vmem:[#allocation4] sm:$0xff] %vm563, %v1941
    %1945 = vrot.lane.b32.xlu0 %v1897, 64
    %v1946 = vpop.permute.xlu0 %1945
    %1948 = vst.msk [vmem:[#allocation5] sm:$0xff] %vm563, %v1946
    %1950 = vrot.lane.b32.xlu0 %v1921, 64
    %v1951 = vpop.permute.xlu0 %1950
    %1953 = vst.msk [vmem:[#allocation6] sm:$0xff] %vm563, %v1951
    %1955 = vrot.lane.b32.xlu0 %v1919, 64
    %v1956 = vpop.permute.xlu0 %1955
    %1958 = vst.msk [vmem:[#allocation7] sm:$0xff] %vm563, %v1956
    %s1959 = ssub.s32 0, 0
    %s1960 = smul.u32 8, %s1959
    %p1961 = scmp.lt.s32.totalorder %s1960, 7
    %s1962 = scalar_select %p1961, %s1960, 7
    %s1963 = smul.addr %s1962, 4
    %s1964 = scalar_lea.vmem %s8, %s1963
    // Predicated region
    $region46: #{video_regression_forward.2} parent=1 // pred_check
      _
    $region47: #{video_regression_forward.2} parent=1 // pred_check_branch
      %1966 = sbr.rel (0) target = $region49
    $region48: #{video_regression_forward.2} parent=1 // pred_region
      _
    $region49: #{video_regression_forward.2} parent=1 // pred_fallthru
      _
    // Predicated region
    $region50: #{video_regression_forward.2} parent=1 // pred_check
      _
    $region51: #{video_regression_forward.2} parent=1 // pred_check_branch
      %1968 = sbr.rel (0) target = $region53
    $region52: #{video_regression_forward.2} parent=1 // pred_region
      %s1969 = ssub.s32 0, 0
      %s1970 = smul.u32 8, %s1969
    $region53: #{video_regression_forward.2} parent=1 // pred_fallthru
      _
    // Predicated region
    $region54: #{video_regression_forward.2} parent=1 // pred_check
      _
    $region55: #{video_regression_forward.2} parent=1 // pred_check_branch
      %1972 = sbr.rel (0) target = $region57
    $region56: #{video_regression_forward.2} parent=1 // pred_region
      _
    $region57: #{video_regression_forward.2} parent=1 // pred_fallthru
      _
    // Predicated region
    $region58: #{video_regression_forward.2} parent=1 // pred_check
      _
    $region59: #{video_regression_forward.2} parent=1 // pred_check_branch
      %1974 = sbr.rel (0) target = $region61
    $region60: #{video_regression_forward.2} parent=1 // pred_region
      %s1975 = ssub.s32 0, 0
      %s1976 = smul.u32 8, %s1975
      %p1977 = scmp.lt.s32.totalorder %s1976, 7
      %s1978 = scalar_select %p1977, %s1976, 7
      %s1979 = smul.addr %s1978, 4
      %s1980 = scalar_lea.vmem %s8, %s1979
    $region61: #{video_regression_forward.2} parent=1 // pred_fallthru
      _
    %1981 = vsyncpa [#allocation9], 1
    %1982 = vsyncpa [#allocation11], 1

// kernel: video_regression_forward.3
$region0: #{video_regression_forward.3}
  #allocation0 [shape = 'u32[]', space=smem, size = 0x4, offset = 0x4, fixed_abs, tag = 'smem constant byte address 0x4 - core index']
  #allocation1 [shape = 'u32[144,128]{1,0:T(1,128)}', space=vmem, size = 0x12000, scoped, tag = 'internal scratch']
  #allocation2 [shape = 'f32[64,256]{1,0:T(8,128)}', space=vmem, size = 0x10000, scoped, tag = 'scratch operand']
  #allocation3 [shape = 'f32[64,256]{1,0:T(8,128)}', space=vmem, size = 0x10000, scoped, tag = 'scratch operand']
  #allocation4 [shape = 'f32[8,64]{1,0:T(8,128)}', space=vmem, size = 0x1000, scoped, tag = 'scratch operand']
  #allocation5 [shape = 'f32[8,64]{1,0:T(8,128)}', space=vmem, size = 0x1000, scoped, tag = 'scratch operand']
  #allocation6 [shape = 'f32[8,64]{1,0:T(8,128)}', space=vmem, size = 0x1000, scoped, tag = 'scratch operand']
  #allocation7 [shape = 'f32[8,64]{1,0:T(8,128)}', space=vmem, size = 0x1000, scoped, tag = 'scratch operand']
  #allocation8 [shape = 'f32[64,64]{1,0:T(8,128)}', space=vmem, size = 0x8000, scoped, tag = 'scratch operand']
  #allocation9 [shape = 'f32[64,64]{1,0:T(8,128)}', space=vmem, size = 0x8000, scoped, tag = 'scratch operand']
  %s0 = inlined_call_operand.vmem [shape: bf16[64,64], index: 0, kind: input, shape index: {}]
  %s1 = inlined_call_operand.vmem [shape: bf16[64,64], index: 1, kind: input, shape index: {}]
  %s2 = inlined_call_operand.vmem [shape: bf16[64,256], index: 2, kind: input, shape index: {}]
  %s3 = inlined_call_operand.vmem [shape: bf16[64,256], index: 3, kind: input, shape index: {}]
  %s4 = inlined_call_operand.vmem [shape: bf16[64,256], index: 4, kind: input, shape index: {}]
  %s5 = inlined_call_operand.vmem [shape: bf16[64,256], index: 5, kind: input, shape index: {}]
  %s6 = inlined_call_operand.vmem [shape: f32[1,256], index: 6, kind: input, shape index: {}]
  %s7 = inlined_call_operand.vmem [shape: f32[1,256], index: 7, kind: input, shape index: {}]
  %s8 = inlined_call_operand.vmem [shape: bf16[64,256], index: 8, kind: input, shape index: {}]
  %s9 = inlined_call_operand.vmem [shape: bf16[64,256], index: 9, kind: input, shape index: {}]
  %s10 = inlined_call_operand.vmem [shape: bf16[64,128], index: 10, kind: input, shape index: {}]
  %s11 = inlined_call_operand.vmem [shape: bf16[64,128], index: 11, kind: input, shape index: {}]
  %s12 = inlined_call_operand.vmem [shape: f32[1,128], index: 12, kind: input, shape index: {}]
  %s13 = inlined_call_operand.vmem [shape: f32[64,128], index: 13, kind: output, shape index: {}]
  %s14 = sld [smem:[#allocation0]]
  $region66: #{video_regression_forward.3} parent=0
    _
  %s16 = ssub.s32 1, %s14
  %s17 = scalar_select 0, %s16, %s14
  // Predicated region
  $region2: #{video_regression_forward.3} parent=0 // pred_check
    _
  $region3: #{video_regression_forward.3} parent=0 // pred_check_branch
    %19 = sbr.rel (0) target = $region5
  $region4: #{video_regression_forward.3} parent=0 // pred_region
    _
  $region5: #{video_regression_forward.3} parent=0 // pred_fallthru
    _
  // Predicated region
  $region6: #{video_regression_forward.3} parent=0 // pred_check
    _
  $region7: #{video_regression_forward.3} parent=0 // pred_check_branch
    %21 = sbr.rel (0) target = $region9
  $region8: #{video_regression_forward.3} parent=0 // pred_region
    _
  $region9: #{video_regression_forward.3} parent=0 // pred_fallthru
    _
  // Predicated region
  $region10: #{video_regression_forward.3} parent=0 // pred_check
    _
  $region11: #{video_regression_forward.3} parent=0 // pred_check_branch
    %23 = sbr.rel (0) target = $region13
  $region12: #{video_regression_forward.3} parent=0 // pred_region
    _
  $region13: #{video_regression_forward.3} parent=0 // pred_fallthru
    _
  // Predicated region
  $region14: #{video_regression_forward.3} parent=0 // pred_check
    _
  $region15: #{video_regression_forward.3} parent=0 // pred_check_branch
    %25 = sbr.rel (0) target = $region17
  $region16: #{video_regression_forward.3} parent=0 // pred_region
    _
  $region17: #{video_regression_forward.3} parent=0 // pred_fallthru
    _
  // Predicated region
  $region18: #{video_regression_forward.3} parent=0 // pred_check
    _
  $region19: #{video_regression_forward.3} parent=0 // pred_check_branch
    %27 = sbr.rel (0) target = $region21
  $region20: #{video_regression_forward.3} parent=0 // pred_region
    _
  $region21: #{video_regression_forward.3} parent=0 // pred_fallthru
    _
  // Predicated region
  $region22: #{video_regression_forward.3} parent=0 // pred_check
    _
  $region23: #{video_regression_forward.3} parent=0 // pred_check_branch
    %29 = sbr.rel (0) target = $region25
  $region24: #{video_regression_forward.3} parent=0 // pred_region
    _
  $region25: #{video_regression_forward.3} parent=0 // pred_fallthru
    _
  // Predicated region
  $region26: #{video_regression_forward.3} parent=0 // pred_check
    _
  $region27: #{video_regression_forward.3} parent=0 // pred_check_branch
    %31 = sbr.rel (0) target = $region29
  $region28: #{video_regression_forward.3} parent=0 // pred_region
    _
  $region29: #{video_regression_forward.3} parent=0 // pred_fallthru
    _
  // Predicated region
  $region30: #{video_regression_forward.3} parent=0 // pred_check
    _
  $region31: #{video_regression_forward.3} parent=0 // pred_check_branch
    %33 = sbr.rel (0) target = $region33
  $region32: #{video_regression_forward.3} parent=0 // pred_region
    _
  $region33: #{video_regression_forward.3} parent=0 // pred_fallthru
    _
  // Predicated region
  $region34: #{video_regression_forward.3} parent=0 // pred_check
    _
  $region35: #{video_regression_forward.3} parent=0 // pred_check_branch
    %35 = sbr.rel (0) target = $region37
  $region36: #{video_regression_forward.3} parent=0 // pred_region
    _
  $region37: #{video_regression_forward.3} parent=0 // pred_fallthru
    _
  // Predicated region
  $region38: #{video_regression_forward.3} parent=0 // pred_check
    _
  $region39: #{video_regression_forward.3} parent=0 // pred_check_branch
    %37 = sbr.rel (0) target = $region41
  $region40: #{video_regression_forward.3} parent=0 // pred_region
    _
  $region41: #{video_regression_forward.3} parent=0 // pred_fallthru
    _
  // Predicated region
  $region42: #{video_regression_forward.3} parent=0 // pred_check
    _
  $region43: #{video_regression_forward.3} parent=0 // pred_check_branch
    %39 = sbr.rel (0) target = $region45
  $region44: #{video_regression_forward.3} parent=0 // pred_region
    _
  $region45: #{video_regression_forward.3} parent=0 // pred_fallthru
    _
  // Predicated region
  $region46: #{video_regression_forward.3} parent=0 // pred_check
    _
  $region47: #{video_regression_forward.3} parent=0 // pred_check_branch
    %41 = sbr.rel (0) target = $region49
  $region48: #{video_regression_forward.3} parent=0 // pred_region
    _
  $region49: #{video_regression_forward.3} parent=0 // pred_fallthru
    _
  // Predicated region
  $region50: #{video_regression_forward.3} parent=0 // pred_check
    _
  $region51: #{video_regression_forward.3} parent=0 // pred_check_branch
    %43 = sbr.rel (0) target = $region53
  $region52: #{video_regression_forward.3} parent=0 // pred_region
    _
  $region53: #{video_regression_forward.3} parent=0 // pred_fallthru
    _
  %p45 = scmp.eq.s32.totalorder 0, 0
  // Predicated region
  $region54: #{video_regression_forward.3} parent=0 // pred_check
    %p46 = pneg %p45
  $region55: #{video_regression_forward.3} parent=0 // pred_check_branch
    %48 = sbr.rel (%p46) target = $region57
  $region56: #{video_regression_forward.3} parent=0 // pred_region
    %vm49 = vcmask 523264
    %50 = vst.msk [vmem:[#allocation4] sm:$0xff] %vm49, 0.0
    %51 = vst.msk [vmem:[#allocation5] sm:$0xff] %vm49, 0.0
    %52 = vst.msk [vmem:[#allocation6] sm:$0xff] %vm49, 0.0
    %53 = vst.msk [vmem:[#allocation7] sm:$0xff] %vm49, 0.0
  $region57: #{video_regression_forward.3} parent=0 // pred_fallthru
    _
  %v54 = vld [vmem:[%s0] sm:$0xf]
  %v55 = vld [vmem:[%s0 + $0x4] sm:$0xf]
  %v56 = vld [vmem:[%s0 + $0x8] sm:$0xf]
  %v57 = vld [vmem:[%s0 + $0xc] sm:$0xf]
  %v58 = vld [vmem:[%s0 + $0x10] sm:$0xf]
  %v59 = vld [vmem:[%s0 + $0x14] sm:$0xf]
  %v60 = vld [vmem:[%s0 + $0x18] sm:$0xf]
  %v61 = vld [vmem:[%s0 + $0x1c] sm:$0xf]
  %v62 = vld [vmem:[%s1] sm:$0xf]
  %v63 = vld [vmem:[%s1 + $0x4] sm:$0xf]
  %v64 = vld [vmem:[%s1 + $0x8] sm:$0xf]
  %v65 = vld [vmem:[%s1 + $0xc] sm:$0xf]
  %v66 = vld [vmem:[%s1 + $0x10] sm:$0xf]
  %v67 = vld [vmem:[%s1 + $0x14] sm:$0xf]
  %v68 = vld [vmem:[%s1 + $0x18] sm:$0xf]
  %v69 = vld [vmem:[%s1 + $0x1c] sm:$0xf]
  %v70 = vld [vmem:[%s2] sm:$0xff]
  %v71 = vld [vmem:[%s2 + $0x8] sm:$0xff]
  %v72 = vld [vmem:[%s2 + $0x10] sm:$0xff]
  %v73 = vld [vmem:[%s2 + $0x18] sm:$0xff]
  %v74 = vld [vmem:[%s2 + $0x20] sm:$0xff]
  %v75 = vld [vmem:[%s2 + $0x28] sm:$0xff]
  %v76 = vld [vmem:[%s2 + $0x30] sm:$0xff]
  %v77 = vld [vmem:[%s2 + $0x38] sm:$0xff]
  %v78 = vld [vmem:[%s3] sm:$0xff]
  %v79 = vld [vmem:[%s3 + $0x8] sm:$0xff]
  %v80 = vld [vmem:[%s3 + $0x10] sm:$0xff]
  %v81 = vld [vmem:[%s3 + $0x18] sm:$0xff]
  %v82 = vld [vmem:[%s3 + $0x20] sm:$0xff]
  %v83 = vld [vmem:[%s3 + $0x28] sm:$0xff]
  %v84 = vld [vmem:[%s3 + $0x30] sm:$0xff]
  %v85 = vld [vmem:[%s3 + $0x38] sm:$0xff]
  %v86 = vld [vmem:[%s4] sm:$0xff]
  %v87 = vld [vmem:[%s4 + $0x8] sm:$0xff]
  %v88 = vld [vmem:[%s4 + $0x10] sm:$0xff]
  %v89 = vld [vmem:[%s4 + $0x18] sm:$0xff]
  %v90 = vld [vmem:[%s4 + $0x20] sm:$0xff]
  %v91 = vld [vmem:[%s4 + $0x28] sm:$0xff]
  %v92 = vld [vmem:[%s4 + $0x30] sm:$0xff]
  %v93 = vld [vmem:[%s4 + $0x38] sm:$0xff]
  %v94 = vld [vmem:[%s5] sm:$0xff]
  %v95 = vld [vmem:[%s5 + $0x8] sm:$0xff]
  %v96 = vld [vmem:[%s5 + $0x10] sm:$0xff]
  %v97 = vld [vmem:[%s5 + $0x18] sm:$0xff]
  %v98 = vld [vmem:[%s5 + $0x20] sm:$0xff]
  %v99 = vld [vmem:[%s5 + $0x28] sm:$0xff]
  %v100 = vld [vmem:[%s5 + $0x30] sm:$0xff]
  %v101 = vld [vmem:[%s5 + $0x38] sm:$0xff]
  %v110 = vunpack.c.l.b16 %v62
  %v111 = vunpack.c.l.b16 %v63
  %v112 = vunpack.c.l.b16 %v64
  %v113 = vunpack.c.l.b16 %v65
  %v114 = vunpack.c.l.b16 %v66
  %v115 = vunpack.c.l.b16 %v67
  %v116 = vunpack.c.l.b16 %v68
  %v117 = vunpack.c.l.b16 %v69
  %v118 = vpack.c.b16 %v111, %v110
  %v119 = vpack.c.b16 %v113, %v112
  %v120 = vpack.c.b16 %v115, %v114
  %v121 = vpack.c.b16 %v117, %v116
  %v130 = vunpack.c.l.b16 %v78
  %v131 = vunpack.c.h.b16 %v78
  %v132 = vunpack.c.l.b16 %v79
  %v133 = vunpack.c.h.b16 %v79
  %v134 = vunpack.c.l.b16 %v80
  %v135 = vunpack.c.h.b16 %v80
  %v136 = vunpack.c.l.b16 %v81
  %v137 = vunpack.c.h.b16 %v81
  %v138 = vunpack.c.l.b16 %v82
  %v139 = vunpack.c.h.b16 %v82
  %v140 = vunpack.c.l.b16 %v83
  %v141 = vunpack.c.h.b16 %v83
  %v142 = vunpack.c.l.b16 %v84
  %v143 = vunpack.c.h.b16 %v84
  %v144 = vunpack.c.l.b16 %v85
  %v145 = vunpack.c.h.b16 %v85
  %v146 = vpack.c.b16 %v132, %v130
  %v147 = vpack.c.b16 %v133, %v131
  %v148 = vpack.c.b16 %v136, %v134
  %v149 = vpack.c.b16 %v137, %v135
  %v150 = vpack.c.b16 %v140, %v138
  %v151 = vpack.c.b16 %v141, %v139
  %v152 = vpack.c.b16 %v144, %v142
  %v153 = vpack.c.b16 %v145, %v143
  %vm162 = vcmask 523264
  %v164 = vsel %vm162, %v118, 0
  %v167 = vsel %vm162, %v119, 0
  %v170 = vsel %vm162, %v120, 0
  %v173 = vsel %vm162, %v121, 0
  %175 = vmatprep.subr.bf16.mxu0 %v147
  %176 = vmatpush1.bf16.msra.mxu0 %v146
  %177 = vmatprep.subr.bf16.mxu0 %v149
  %178 = vmatpush1.bf16.msra.mxu0 %v148
  %179 = vmatprep.subr.bf16.mxu0 %v151
  %180 = vmatpush1.bf16.msra.mxu0 %v150
  %181 = vmatprep.subr.bf16.mxu0 %v153
  %182 = vmatpush1.bf16.msra.mxu0 %v152
  %183 = vmatprep.subr.bf16.mxu0 0
  %184 = vmatpush1.bf16.msra.mxu0 0
  %185 = vmatprep.subr.bf16.mxu0 0
  %186 = vmatpush1.bf16.msra.mxu0 0
  %187 = vmatprep.subr.bf16.mxu0 0
  %188 = vmatpush1.bf16.msra.mxu0 0
  %189 = vmatprep.subr.bf16.mxu0 0
  %190 = vmatpush1.bf16.msra.mxu0 0
  %191 = vmatprep.subr.bf16.mxu0 0
  %192 = vmatpush1.bf16.msra.mxu0 0
  %193 = vmatprep.subr.bf16.mxu0 0
  %194 = vmatpush1.bf16.msra.mxu0 0
  %195 = vmatprep.subr.bf16.mxu0 0
  %196 = vmatpush1.bf16.msra.mxu0 0
  %197 = vmatprep.subr.bf16.mxu0 0
  %198 = vmatpush1.bf16.msra.mxu0 0
  %199 = vmatprep.subr.bf16.mxu0 0
  %200 = vmatpush1.bf16.msra.mxu0 0
  %201 = vmatprep.subr.bf16.mxu0 0
  %202 = vmatpush1.bf16.msra.mxu0 0
  %203 = vmatprep.subr.bf16.mxu0 0
  %204 = vmatpush1.bf16.msra.mxu0 0
  %205 = vmatprep.subr.bf16.mxu0 0
  %206 = vmatpush1.bf16.msra.mxu0 0
  %207 = vmatprep.mubr.bf16.mxu0 0
  %208 = vmatmul.mubr.bf16.gmra.mrb[0].mxu0 %v164
  %v209 = vpop.f32.mrb[0].mxu0
  %v210 = vadd.f32 0.0, %v209
  %v211 = vpop.f32.mrb[0].mxu0
  %v212 = vadd.f32 0.0, %v211
  %v213 = vpop.f32.mrb[0].mxu0
  %v214 = vadd.f32 0.0, %v213
  %v215 = vpop.f32.mrb[0].mxu0
  %v216 = vadd.f32 0.0, %v215
  %217 = vmatprep.mubr.bf16.mxu0 0
  %218 = vmatmul.mubr.bf16.gmra.mrb[0].mxu0 %v167
  %v219 = vpop.f32.mrb[0].mxu0
  %v220 = vadd.f32 0.0, %v219
  %v221 = vpop.f32.mrb[0].mxu0
  %v222 = vadd.f32 0.0, %v221
  %v223 = vpop.f32.mrb[0].mxu0
  %v224 = vadd.f32 0.0, %v223
  %v225 = vpop.f32.mrb[0].mxu0
  %v226 = vadd.f32 0.0, %v225
  %227 = vmatprep.mubr.bf16.mxu0 0
  %228 = vmatmul.mubr.bf16.gmra.mrb[0].mxu0 %v170
  %v229 = vpop.f32.mrb[0].mxu0
  %v230 = vadd.f32 0.0, %v229
  %v231 = vpop.f32.mrb[0].mxu0
  %v232 = vadd.f32 0.0, %v231
  %v233 = vpop.f32.mrb[0].mxu0
  %v234 = vadd.f32 0.0, %v233
  %v235 = vpop.f32.mrb[0].mxu0
  %v236 = vadd.f32 0.0, %v235
  %237 = vmatprep.mubr.bf16.mxu0 0
  %238 = vmatmul.mubr.bf16.gmra.mrb[0].mxu0 %v173
  %v239 = vpop.f32.mrb[0].mxu0
  %v240 = vadd.f32 0.0, %v239
  %v241 = vpop.f32.mrb[0].mxu0
  %v242 = vadd.f32 0.0, %v241
  %v243 = vpop.f32.mrb[0].mxu0
  %v244 = vadd.f32 0.0, %v243
  %v245 = vpop.f32.mrb[0].mxu0
  %v246 = vadd.f32 0.0, %v245
  %247 = vdwg.mxu0
  %v256 = vunpack.c.l.b16 %v54
  %v257 = vunpack.c.l.b16 %v55
  %v258 = vunpack.c.l.b16 %v56
  %v259 = vunpack.c.l.b16 %v57
  %v260 = vunpack.c.l.b16 %v58
  %v261 = vunpack.c.l.b16 %v59
  %v262 = vunpack.c.l.b16 %v60
  %v263 = vunpack.c.l.b16 %v61
  %v264 = vpack.c.b16 %v257, %v256
  %v265 = vpack.c.b16 %v259, %v258
  %v266 = vpack.c.b16 %v261, %v260
  %v267 = vpack.c.b16 %v263, %v262
  %v276 = vunpack.c.l.b16 %v70
  %v277 = vunpack.c.h.b16 %v70
  %v278 = vunpack.c.l.b16 %v71
  %v279 = vunpack.c.h.b16 %v71
  %v280 = vunpack.c.l.b16 %v72
  %v281 = vunpack.c.h.b16 %v72
  %v282 = vunpack.c.l.b16 %v73
  %v283 = vunpack.c.h.b16 %v73
  %v284 = vunpack.c.l.b16 %v74
  %v285 = vunpack.c.h.b16 %v74
  %v286 = vunpack.c.l.b16 %v75
  %v287 = vunpack.c.h.b16 %v75
  %v288 = vunpack.c.l.b16 %v76
  %v289 = vunpack.c.h.b16 %v76
  %v290 = vunpack.c.l.b16 %v77
  %v291 = vunpack.c.h.b16 %v77
  %v292 = vpack.c.b16 %v278, %v276
  %v293 = vpack.c.b16 %v279, %v277
  %v294 = vpack.c.b16 %v282, %v280
  %v295 = vpack.c.b16 %v283, %v281
  %v296 = vpack.c.b16 %v286, %v284
  %v297 = vpack.c.b16 %v287, %v285
  %v298 = vpack.c.b16 %v290, %v288
  %v299 = vpack.c.b16 %v291, %v289
  %v309 = vsel %vm162, %v264, 0
  %v312 = vsel %vm162, %v265, 0
  %v315 = vsel %vm162, %v266, 0
  %v318 = vsel %vm162, %v267, 0
  %320 = vmatprep.subr.bf16.mxu0 %v293
  %321 = vmatpush1.bf16.msra.mxu0 %v292
  %322 = vmatprep.subr.bf16.mxu0 %v295
  %323 = vmatpush1.bf16.msra.mxu0 %v294
  %324 = vmatprep.subr.bf16.mxu0 %v297
  %325 = vmatpush1.bf16.msra.mxu0 %v296
  %326 = vmatprep.subr.bf16.mxu0 %v299
  %327 = vmatpush1.bf16.msra.mxu0 %v298
  %328 = vmatprep.subr.bf16.mxu0 0
  %329 = vmatpush1.bf16.msra.mxu0 0
  %330 = vmatprep.subr.bf16.mxu0 0
  %331 = vmatpush1.bf16.msra.mxu0 0
  %332 = vmatprep.subr.bf16.mxu0 0
  %333 = vmatpush1.bf16.msra.mxu0 0
  %334 = vmatprep.subr.bf16.mxu0 0
  %335 = vmatpush1.bf16.msra.mxu0 0
  %336 = vmatprep.subr.bf16.mxu0 0
  %337 = vmatpush1.bf16.msra.mxu0 0
  %338 = vmatprep.subr.bf16.mxu0 0
  %339 = vmatpush1.bf16.msra.mxu0 0
  %340 = vmatprep.subr.bf16.mxu0 0
  %341 = vmatpush1.bf16.msra.mxu0 0
  %342 = vmatprep.subr.bf16.mxu0 0
  %343 = vmatpush1.bf16.msra.mxu0 0
  %344 = vmatprep.subr.bf16.mxu0 0
  %345 = vmatpush1.bf16.msra.mxu0 0
  %346 = vmatprep.subr.bf16.mxu0 0
  %347 = vmatpush1.bf16.msra.mxu0 0
  %348 = vmatprep.subr.bf16.mxu0 0
  %349 = vmatpush1.bf16.msra.mxu0 0
  %350 = vmatprep.subr.bf16.mxu0 0
  %351 = vmatpush1.bf16.msra.mxu0 0
  %352 = vmatprep.mubr.bf16.mxu0 0
  %353 = vmatmul.mubr.bf16.gmra.mrb[0].mxu0 %v309
  %v354 = vpop.f32.mrb[0].mxu0
  %v355 = vadd.f32 %v210, %v354
  %v356 = vpop.f32.mrb[0].mxu0
  %v357 = vadd.f32 %v212, %v356
  %v358 = vpop.f32.mrb[0].mxu0
  %v359 = vadd.f32 %v214, %v358
  %v360 = vpop.f32.mrb[0].mxu0
  %v361 = vadd.f32 %v216, %v360
  %362 = vmatprep.mubr.bf16.mxu0 0
  %363 = vmatmul.mubr.bf16.gmra.mrb[0].mxu0 %v312
  %v364 = vpop.f32.mrb[0].mxu0
  %v365 = vadd.f32 %v220, %v364
  %v366 = vpop.f32.mrb[0].mxu0
  %v367 = vadd.f32 %v222, %v366
  %v368 = vpop.f32.mrb[0].mxu0
  %v369 = vadd.f32 %v224, %v368
  %v370 = vpop.f32.mrb[0].mxu0
  %v371 = vadd.f32 %v226, %v370
  %372 = vmatprep.mubr.bf16.mxu0 0
  %373 = vmatmul.mubr.bf16.gmra.mrb[0].mxu0 %v315
  %v374 = vpop.f32.mrb[0].mxu0
  %v375 = vadd.f32 %v230, %v374
  %v376 = vpop.f32.mrb[0].mxu0
  %v377 = vadd.f32 %v232, %v376
  %v378 = vpop.f32.mrb[0].mxu0
  %v379 = vadd.f32 %v234, %v378
  %v380 = vpop.f32.mrb[0].mxu0
  %v381 = vadd.f32 %v236, %v380
  %382 = vmatprep.mubr.bf16.mxu0 0
  %383 = vmatmul.mubr.bf16.gmra.mrb[0].mxu0 %v318
  %v384 = vpop.f32.mrb[0].mxu0
  %v385 = vadd.f32 %v240, %v384
  %v386 = vpop.f32.mrb[0].mxu0
  %v387 = vadd.f32 %v242, %v386
  %v388 = vpop.f32.mrb[0].mxu0
  %v389 = vadd.f32 %v244, %v388
  %v390 = vpop.f32.mrb[0].mxu0
  %v391 = vadd.f32 %v246, %v390
  %392 = vdwg.mxu0
  %v393 = vld [vmem:[%s6] sm:$0x3]
  %v395 = vlaneseq
  %v396 = vshrl.u32 %v395, 7
  %v397 = vsub.s32 0, %v396
  %v398 = vrot.slane %v393, %v397
  %v399 = vlaneseq
  %v400 = vshrl.u32 %v399, 7
  %v401 = vsub.s32 1, %v400
  %v402 = vrot.slane %v393, %v401
  %v405 = vadd.f32 %v355, %v398
  %v406 = vadd.f32 %v357, %v402
  %v407 = vadd.f32 %v359, %v398
  %v408 = vadd.f32 %v361, %v402
  %v409 = vadd.f32 %v365, %v398
  %v410 = vadd.f32 %v367, %v402
  %v411 = vadd.f32 %v369, %v398
  %v412 = vadd.f32 %v371, %v402
  %v413 = vadd.f32 %v375, %v398
  %v414 = vadd.f32 %v377, %v402
  %v415 = vadd.f32 %v379, %v398
  %v416 = vadd.f32 %v381, %v402
  %v417 = vadd.f32 %v385, %v398
  %v418 = vadd.f32 %v387, %v402
  %v419 = vadd.f32 %v389, %v398
  %v420 = vadd.f32 %v391, %v402
  %v429 = vunpack.c.l.b16 %v94
  %v430 = vunpack.c.h.b16 %v94
  %v431 = vunpack.c.l.b16 %v95
  %v432 = vunpack.c.h.b16 %v95
  %v433 = vunpack.c.l.b16 %v96
  %v434 = vunpack.c.h.b16 %v96
  %v435 = vunpack.c.l.b16 %v97
  %v436 = vunpack.c.h.b16 %v97
  %v437 = vunpack.c.l.b16 %v98
  %v438 = vunpack.c.h.b16 %v98
  %v439 = vunpack.c.l.b16 %v99
  %v440 = vunpack.c.h.b16 %v99
  %v441 = vunpack.c.l.b16 %v100
  %v442 = vunpack.c.h.b16 %v100
  %v443 = vunpack.c.l.b16 %v101
  %v444 = vunpack.c.h.b16 %v101
  %v445 = vpack.c.b16 %v431, %v429
  %v446 = vpack.c.b16 %v432, %v430
  %v447 = vpack.c.b16 %v435, %v433
  %v448 = vpack.c.b16 %v436, %v434
  %v449 = vpack.c.b16 %v439, %v437
  %v450 = vpack.c.b16 %v440, %v438
  %v451 = vpack.c.b16 %v443, %v441
  %v452 = vpack.c.b16 %v444, %v442
  %461 = vmatprep.subr.bf16.mxu0 %v446
  %462 = vmatpush1.bf16.msra.mxu0 %v445
  %463 = vmatprep.subr.bf16.mxu0 %v448
  %464 = vmatpush1.bf16.msra.mxu0 %v447
  %465 = vmatprep.subr.bf16.mxu0 %v450
  %466 = vmatpush1.bf16.msra.mxu0 %v449
  %467 = vmatprep.subr.bf16.mxu0 %v452
  %468 = vmatpush1.bf16.msra.mxu0 %v451
  %469 = vmatprep.subr.bf16.mxu0 0
  %470 = vmatpush1.bf16.msra.mxu0 0
  %471 = vmatprep.subr.bf16.mxu0 0
  %472 = vmatpush1.bf16.msra.mxu0 0
  %473 = vmatprep.subr.bf16.mxu0 0
  %474 = vmatpush1.bf16.msra.mxu0 0
  %475 = vmatprep.subr.bf16.mxu0 0
  %476 = vmatpush1.bf16.msra.mxu0 0
  %477 = vmatprep.subr.bf16.mxu0 0
  %478 = vmatpush1.bf16.msra.mxu0 0
  %479 = vmatprep.subr.bf16.mxu0 0
  %480 = vmatpush1.bf16.msra.mxu0 0
  %481 = vmatprep.subr.bf16.mxu0 0
  %482 = vmatpush1.bf16.msra.mxu0 0
  %483 = vmatprep.subr.bf16.mxu0 0
  %484 = vmatpush1.bf16.msra.mxu0 0
  %485 = vmatprep.subr.bf16.mxu0 0
  %486 = vmatpush1.bf16.msra.mxu0 0
  %487 = vmatprep.subr.bf16.mxu0 0
  %488 = vmatpush1.bf16.msra.mxu0 0
  %489 = vmatprep.subr.bf16.mxu0 0
  %490 = vmatpush1.bf16.msra.mxu0 0
  %491 = vmatprep.subr.bf16.mxu0 0
  %492 = vmatpush1.bf16.msra.mxu0 0
  %493 = vmatprep.mubr.bf16.mxu0 0
  %494 = vmatmul.mubr.bf16.gmra.mrb[0].mxu0 %v164
  %v495 = vpop.f32.mrb[0].mxu0
  %v496 = vadd.f32 0.0, %v495
  %v497 = vpop.f32.mrb[0].mxu0
  %v498 = vadd.f32 0.0, %v497
  %v499 = vpop.f32.mrb[0].mxu0
  %v500 = vadd.f32 0.0, %v499
  %v501 = vpop.f32.mrb[0].mxu0
  %v502 = vadd.f32 0.0, %v501
  %503 = vmatprep.mubr.bf16.mxu0 0
  %504 = vmatmul.mubr.bf16.gmra.mrb[0].mxu0 %v167
  %v505 = vpop.f32.mrb[0].mxu0
  %v506 = vadd.f32 0.0, %v505
  %v507 = vpop.f32.mrb[0].mxu0
  %v508 = vadd.f32 0.0, %v507
  %v509 = vpop.f32.mrb[0].mxu0
  %v510 = vadd.f32 0.0, %v509
  %v511 = vpop.f32.mrb[0].mxu0
  %v512 = vadd.f32 0.0, %v511
  %513 = vmatprep.mubr.bf16.mxu0 0
  %514 = vmatmul.mubr.bf16.gmra.mrb[0].mxu0 %v170
  %v515 = vpop.f32.mrb[0].mxu0
  %v516 = vadd.f32 0.0, %v515
  %v517 = vpop.f32.mrb[0].mxu0
  %v518 = vadd.f32 0.0, %v517
  %v519 = vpop.f32.mrb[0].mxu0
  %v520 = vadd.f32 0.0, %v519
  %v521 = vpop.f32.mrb[0].mxu0
  %v522 = vadd.f32 0.0, %v521
  %523 = vmatprep.mubr.bf16.mxu0 0
  %524 = vmatmul.mubr.bf16.gmra.mrb[0].mxu0 %v173
  %v525 = vpop.f32.mrb[0].mxu0
  %v526 = vadd.f32 0.0, %v525
  %v527 = vpop.f32.mrb[0].mxu0
  %v528 = vadd.f32 0.0, %v527
  %v529 = vpop.f32.mrb[0].mxu0
  %v530 = vadd.f32 0.0, %v529
  %v531 = vpop.f32.mrb[0].mxu0
  %v532 = vadd.f32 0.0, %v531
  %533 = vdwg.mxu0
  %v542 = vunpack.c.l.b16 %v86
  %v543 = vunpack.c.h.b16 %v86
  %v544 = vunpack.c.l.b16 %v87
  %v545 = vunpack.c.h.b16 %v87
  %v546 = vunpack.c.l.b16 %v88
  %v547 = vunpack.c.h.b16 %v88
  %v548 = vunpack.c.l.b16 %v89
  %v549 = vunpack.c.h.b16 %v89
  %v550 = vunpack.c.l.b16 %v90
  %v551 = vunpack.c.h.b16 %v90
  %v552 = vunpack.c.l.b16 %v91
  %v553 = vunpack.c.h.b16 %v91
  %v554 = vunpack.c.l.b16 %v92
  %v555 = vunpack.c.h.b16 %v92
  %v556 = vunpack.c.l.b16 %v93
  %v557 = vunpack.c.h.b16 %v93
  %v558 = vpack.c.b16 %v544, %v542
  %v559 = vpack.c.b16 %v545, %v543
  %v560 = vpack.c.b16 %v548, %v546
  %v561 = vpack.c.b16 %v549, %v547
  %v562 = vpack.c.b16 %v552, %v550
  %v563 = vpack.c.b16 %v553, %v551
  %v564 = vpack.c.b16 %v556, %v554
  %v565 = vpack.c.b16 %v557, %v555
  %574 = vmatprep.subr.bf16.mxu0 %v559
  %575 = vmatpush1.bf16.msra.mxu0 %v558
  %576 = vmatprep.subr.bf16.mxu0 %v561
  %577 = vmatpush1.bf16.msra.mxu0 %v560
  %578 = vmatprep.subr.bf16.mxu0 %v563
  %579 = vmatpush1.bf16.msra.mxu0 %v562
  %580 = vmatprep.subr.bf16.mxu0 %v565
  %581 = vmatpush1.bf16.msra.mxu0 %v564
  %582 = vmatprep.subr.bf16.mxu0 0
  %583 = vmatpush1.bf16.msra.mxu0 0
  %584 = vmatprep.subr.bf16.mxu0 0
  %585 = vmatpush1.bf16.msra.mxu0 0
  %586 = vmatprep.subr.bf16.mxu0 0
  %587 = vmatpush1.bf16.msra.mxu0 0
  %588 = vmatprep.subr.bf16.mxu0 0
  %589 = vmatpush1.bf16.msra.mxu0 0
  %590 = vmatprep.subr.bf16.mxu0 0
  %591 = vmatpush1.bf16.msra.mxu0 0
  %592 = vmatprep.subr.bf16.mxu0 0
  %593 = vmatpush1.bf16.msra.mxu0 0
  %594 = vmatprep.subr.bf16.mxu0 0
  %595 = vmatpush1.bf16.msra.mxu0 0
  %596 = vmatprep.subr.bf16.mxu0 0
  %597 = vmatpush1.bf16.msra.mxu0 0
  %598 = vmatprep.subr.bf16.mxu0 0
  %599 = vmatpush1.bf16.msra.mxu0 0
  %600 = vmatprep.subr.bf16.mxu0 0
  %601 = vmatpush1.bf16.msra.mxu0 0
  %602 = vmatprep.subr.bf16.mxu0 0
  %603 = vmatpush1.bf16.msra.mxu0 0
  %604 = vmatprep.subr.bf16.mxu0 0
  %605 = vmatpush1.bf16.msra.mxu0 0
  %606 = vmatprep.mubr.bf16.mxu0 0
  %607 = vmatmul.mubr.bf16.gmra.mrb[0].mxu0 %v309
  %v608 = vpop.f32.mrb[0].mxu0
  %v609 = vadd.f32 %v496, %v608
  %v610 = vpop.f32.mrb[0].mxu0
  %v611 = vadd.f32 %v498, %v610
  %v612 = vpop.f32.mrb[0].mxu0
  %v613 = vadd.f32 %v500, %v612
  %v614 = vpop.f32.mrb[0].mxu0
  %v615 = vadd.f32 %v502, %v614
  %616 = vmatprep.mubr.bf16.mxu0 0
  %617 = vmatmul.mubr.bf16.gmra.mrb[0].mxu0 %v312
  %v618 = vpop.f32.mrb[0].mxu0
  %v619 = vadd.f32 %v506, %v618
  %v620 = vpop.f32.mrb[0].mxu0
  %v621 = vadd.f32 %v508, %v620
  %v622 = vpop.f32.mrb[0].mxu0
  %v623 = vadd.f32 %v510, %v622
  %v624 = vpop.f32.mrb[0].mxu0
  %v625 = vadd.f32 %v512, %v624
  %626 = vmatprep.mubr.bf16.mxu0 0
  %627 = vmatmul.mubr.bf16.gmra.mrb[0].mxu0 %v315
  %v628 = vpop.f32.mrb[0].mxu0
  %v629 = vadd.f32 %v516, %v628
  %v630 = vpop.f32.mrb[0].mxu0
  %v631 = vadd.f32 %v518, %v630
  %v632 = vpop.f32.mrb[0].mxu0
  %v633 = vadd.f32 %v520, %v632
  %v634 = vpop.f32.mrb[0].mxu0
  %v635 = vadd.f32 %v522, %v634
  %636 = vmatprep.mubr.bf16.mxu0 0
  %637 = vmatmul.mubr.bf16.gmra.mrb[0].mxu0 %v318
  %v638 = vpop.f32.mrb[0].mxu0
  %v639 = vadd.f32 %v526, %v638
  %v640 = vpop.f32.mrb[0].mxu0
  %v641 = vadd.f32 %v528, %v640
  %v642 = vpop.f32.mrb[0].mxu0
  %v643 = vadd.f32 %v530, %v642
  %v644 = vpop.f32.mrb[0].mxu0
  %v645 = vadd.f32 %v532, %v644
  %646 = vdwg.mxu0
  %v647 = vld [vmem:[%s7] sm:$0x3]
  %v649 = vlaneseq
  %v650 = vshrl.u32 %v649, 7
  %v651 = vsub.s32 0, %v650
  %v652 = vrot.slane %v647, %v651
  %v653 = vlaneseq
  %v654 = vshrl.u32 %v653, 7
  %v655 = vsub.s32 1, %v654
  %v656 = vrot.slane %v647, %v655
  %v659 = vadd.f32 %v609, %v652
  %v660 = vadd.f32 %v611, %v656
  %v661 = vadd.f32 %v613, %v652
  %v662 = vadd.f32 %v615, %v656
  %v663 = vadd.f32 %v619, %v652
  %v664 = vadd.f32 %v621, %v656
  %v665 = vadd.f32 %v623, %v652
  %v666 = vadd.f32 %v625, %v656
  %v667 = vadd.f32 %v629, %v652
  %v668 = vadd.f32 %v631, %v656
  %v669 = vadd.f32 %v633, %v652
  %v670 = vadd.f32 %v635, %v656
  %v671 = vadd.f32 %v639, %v652
  %v672 = vadd.f32 %v641, %v656
  %v673 = vadd.f32 %v643, %v652
  %v674 = vadd.f32 %v645, %v656
  %675 = vst [vmem:[#allocation2] sm:$0xff] %v405
  %676 = vst [vmem:[#allocation2 + $0x8] sm:$0xff] %v406
  %677 = vst [vmem:[#allocation2 + $0x10] sm:$0xff] %v407
  %678 = vst [vmem:[#allocation2 + $0x18] sm:$0xff] %v408
  %679 = vst [vmem:[#allocation2 + $0x20] sm:$0xff] %v409
  %680 = vst [vmem:[#allocation2 + $0x28] sm:$0xff] %v410
  %681 = vst [vmem:[#allocation2 + $0x30] sm:$0xff] %v411
  %682 = vst [vmem:[#allocation2 + $0x38] sm:$0xff] %v412
  %683 = vst [vmem:[#allocation2 + $0x40] sm:$0xff] %v413
  %684 = vst [vmem:[#allocation2 + $0x48] sm:$0xff] %v414
  %685 = vst [vmem:[#allocation2 + $0x50] sm:$0xff] %v415
  %686 = vst [vmem:[#allocation2 + $0x58] sm:$0xff] %v416
  %687 = vst [vmem:[#allocation2 + $0x60] sm:$0xff] %v417
  %688 = vst [vmem:[#allocation2 + $0x68] sm:$0xff] %v418
  %689 = vst [vmem:[#allocation2 + $0x70] sm:$0xff] %v419
  %690 = vst [vmem:[#allocation2 + $0x78] sm:$0xff] %v420
  %691 = vst [vmem:[#allocation3] sm:$0xff] %v659
  %692 = vst [vmem:[#allocation3 + $0x8] sm:$0xff] %v660
  %693 = vst [vmem:[#allocation3 + $0x10] sm:$0xff] %v661
  %694 = vst [vmem:[#allocation3 + $0x18] sm:$0xff] %v662
  %695 = vst [vmem:[#allocation3 + $0x20] sm:$0xff] %v663
  %696 = vst [vmem:[#allocation3 + $0x28] sm:$0xff] %v664
  %697 = vst [vmem:[#allocation3 + $0x30] sm:$0xff] %v665
  %698 = vst [vmem:[#allocation3 + $0x38] sm:$0xff] %v666
  %699 = vst [vmem:[#allocation3 + $0x40] sm:$0xff] %v667
  %700 = vst [vmem:[#allocation3 + $0x48] sm:$0xff] %v668
  %701 = vst [vmem:[#allocation3 + $0x50] sm:$0xff] %v669
  %702 = vst [vmem:[#allocation3 + $0x58] sm:$0xff] %v670
  %703 = vst [vmem:[#allocation3 + $0x60] sm:$0xff] %v671
  %704 = vst [vmem:[#allocation3 + $0x68] sm:$0xff] %v672
  %705 = vst [vmem:[#allocation3 + $0x70] sm:$0xff] %v673
  %706 = vst [vmem:[#allocation3 + $0x78] sm:$0xff] %v674
  %v707 = vld [vmem:[%s8] sm:$0xff]
  %v708 = vld [vmem:[%s8 + $0x8] sm:$0xff]
  %v709 = vld [vmem:[%s8 + $0x10] sm:$0xff]
  %v710 = vld [vmem:[%s8 + $0x18] sm:$0xff]
  %v711 = vld [vmem:[%s8 + $0x20] sm:$0xff]
  %v712 = vld [vmem:[%s8 + $0x28] sm:$0xff]
  %v713 = vld [vmem:[%s8 + $0x30] sm:$0xff]
  %v714 = vld [vmem:[%s8 + $0x38] sm:$0xff]
  %v715 = vld [vmem:[%s9] sm:$0xff]
  %v716 = vld [vmem:[%s9 + $0x8] sm:$0xff]
  %v717 = vld [vmem:[%s9 + $0x10] sm:$0xff]
  %v718 = vld [vmem:[%s9 + $0x18] sm:$0xff]
  %v719 = vld [vmem:[%s9 + $0x20] sm:$0xff]
  %v720 = vld [vmem:[%s9 + $0x28] sm:$0xff]
  %v721 = vld [vmem:[%s9 + $0x30] sm:$0xff]
  %v722 = vld [vmem:[%s9 + $0x38] sm:$0xff]
  %v723 = vld [vmem:[#allocation4] sm:$0xff]
  %v724 = vld [vmem:[#allocation5] sm:$0xff]
  %v725 = vld [vmem:[#allocation6] sm:$0xff]
  %v726 = vld [vmem:[#allocation7] sm:$0xff]
  %s727 = smul.u32 0, 2
  %s728 = smul.addr %s727, 8
  %s729 = scalar_lea.vmem [#allocation2], %s728
  %v730 = vld [vmem:[%s729] sm:$0xff]
  %v731 = vld [vmem:[%s729 + $0x8] sm:$0xff]
  %v732 = vpack.c.bf16 %v723, %v723
  %v741 = vunpack.c.l.b16 %v707
  %v742 = vunpack.c.h.b16 %v707
  %v743 = vunpack.c.l.b16 %v708
  %v744 = vunpack.c.h.b16 %v708
  %v745 = vunpack.c.l.b16 %v709
  %v746 = vunpack.c.h.b16 %v709
  %v747 = vunpack.c.l.b16 %v710
  %v748 = vunpack.c.h.b16 %v710
  %v749 = vunpack.c.l.b16 %v711
  %v750 = vunpack.c.h.b16 %v711
  %v751 = vunpack.c.l.b16 %v712
  %v752 = vunpack.c.h.b16 %v712
  %v753 = vunpack.c.l.b16 %v713
  %v754 = vunpack.c.h.b16 %v713
  %v755 = vunpack.c.l.b16 %v714
  %v756 = vunpack.c.h.b16 %v714
  %v757 = vpack.c.b16 %v743, %v741
  %v758 = vpack.c.b16 %v744, %v742
  %v759 = vpack.c.b16 %v747, %v745
  %v760 = vpack.c.b16 %v748, %v746
  %v761 = vpack.c.b16 %v751, %v749
  %v762 = vpack.c.b16 %v752, %v750
  %v763 = vpack.c.b16 %v755, %v753
  %v764 = vpack.c.b16 %v756, %v754
  %v774 = vsel %vm162, %v732, 0
  %776 = vmatprep.subr.bf16.mxu0 %v758
  %777 = vmatpush1.bf16.msra.mxu0 %v757
  %778 = vmatprep.subr.bf16.mxu0 %v760
  %779 = vmatpush1.bf16.msra.mxu0 %v759
  %780 = vmatprep.subr.bf16.mxu0 %v762
  %781 = vmatpush1.bf16.msra.mxu0 %v761
  %782 = vmatprep.subr.bf16.mxu0 %v764
  %783 = vmatpush1.bf16.msra.mxu0 %v763
  %784 = vmatprep.subr.bf16.mxu0 0
  %785 = vmatpush1.bf16.msra.mxu0 0
  %786 = vmatprep.subr.bf16.mxu0 0
  %787 = vmatpush1.bf16.msra.mxu0 0
  %788 = vmatprep.subr.bf16.mxu0 0
  %789 = vmatpush1.bf16.msra.mxu0 0
  %790 = vmatprep.subr.bf16.mxu0 0
  %791 = vmatpush1.bf16.msra.mxu0 0
  %792 = vmatprep.subr.bf16.mxu0 0
  %793 = vmatpush1.bf16.msra.mxu0 0
  %794 = vmatprep.subr.bf16.mxu0 0
  %795 = vmatpush1.bf16.msra.mxu0 0
  %796 = vmatprep.subr.bf16.mxu0 0
  %797 = vmatpush1.bf16.msra.mxu0 0
  %798 = vmatprep.subr.bf16.mxu0 0
  %799 = vmatpush1.bf16.msra.mxu0 0
  %800 = vmatprep.subr.bf16.mxu0 0
  %801 = vmatpush1.bf16.msra.mxu0 0
  %802 = vmatprep.subr.bf16.mxu0 0
  %803 = vmatpush1.bf16.msra.mxu0 0
  %804 = vmatprep.subr.bf16.mxu0 0
  %805 = vmatpush1.bf16.msra.mxu0 0
  %806 = vmatprep.subr.bf16.mxu0 0
  %807 = vmatpush1.bf16.msra.mxu0 0
  %808 = vmatprep.mubr.bf16.mxu0 0
  %809 = vmatmul.mubr.bf16.gmra.mrb[0].mxu0 %v774
  %v810 = vpop.f32.mrb[0].mxu0
  %v811 = vadd.f32 0.0, %v810
  %v812 = vpop.f32.mrb[0].mxu0
  %v813 = vadd.f32 0.0, %v812
  %v814 = vpop.f32.mrb[0].mxu0
  %v815 = vpop.f32.mrb[0].mxu0
  %816 = vdwg.mxu0
  %v817 = vadd.f32 %v730, %v811
  %v818 = vadd.f32 %v731, %v813
  %s819 = smul.u32 7, 2
  %s820 = smul.addr %s819, 8
  %s821 = scalar_lea.vmem [#allocation3], %s820
  %v822 = vld [vmem:[%s821] sm:$0xff]
  %v823 = vld [vmem:[%s821 + $0x8] sm:$0xff]
  %v824 = vpack.c.bf16 %v725, %v725
  %v833 = vunpack.c.l.b16 %v715
  %v834 = vunpack.c.h.b16 %v715
  %v835 = vunpack.c.l.b16 %v716
  %v836 = vunpack.c.h.b16 %v716
  %v837 = vunpack.c.l.b16 %v717
  %v838 = vunpack.c.h.b16 %v717
  %v839 = vunpack.c.l.b16 %v718
  %v840 = vunpack.c.h.b16 %v718
  %v841 = vunpack.c.l.b16 %v719
  %v842 = vunpack.c.h.b16 %v719
  %v843 = vunpack.c.l.b16 %v720
  %v844 = vunpack.c.h.b16 %v720
  %v845 = vunpack.c.l.b16 %v721
  %v846 = vunpack.c.h.b16 %v721
  %v847 = vunpack.c.l.b16 %v722
  %v848 = vunpack.c.h.b16 %v722
  %v849 = vpack.c.b16 %v835, %v833
  %v850 = vpack.c.b16 %v836, %v834
  %v851 = vpack.c.b16 %v839, %v837
  %v852 = vpack.c.b16 %v840, %v838
  %v853 = vpack.c.b16 %v843, %v841
  %v854 = vpack.c.b16 %v844, %v842
  %v855 = vpack.c.b16 %v847, %v845
  %v856 = vpack.c.b16 %v848, %v846
  %v866 = vsel %vm162, %v824, 0
  %868 = vmatprep.subr.bf16.mxu0 %v850
  %869 = vmatpush1.bf16.msra.mxu0 %v849
  %870 = vmatprep.subr.bf16.mxu0 %v852
  %871 = vmatpush1.bf16.msra.mxu0 %v851
  %872 = vmatprep.subr.bf16.mxu0 %v854
  %873 = vmatpush1.bf16.msra.mxu0 %v853
  %874 = vmatprep.subr.bf16.mxu0 %v856
  %875 = vmatpush1.bf16.msra.mxu0 %v855
  %876 = vmatprep.subr.bf16.mxu0 0
  %877 = vmatpush1.bf16.msra.mxu0 0
  %878 = vmatprep.subr.bf16.mxu0 0
  %879 = vmatpush1.bf16.msra.mxu0 0
  %880 = vmatprep.subr.bf16.mxu0 0
  %881 = vmatpush1.bf16.msra.mxu0 0
  %882 = vmatprep.subr.bf16.mxu0 0
  %883 = vmatpush1.bf16.msra.mxu0 0
  %884 = vmatprep.subr.bf16.mxu0 0
  %885 = vmatpush1.bf16.msra.mxu0 0
  %886 = vmatprep.subr.bf16.mxu0 0
  %887 = vmatpush1.bf16.msra.mxu0 0
  %888 = vmatprep.subr.bf16.mxu0 0
  %889 = vmatpush1.bf16.msra.mxu0 0
  %890 = vmatprep.subr.bf16.mxu0 0
  %891 = vmatpush1.bf16.msra.mxu0 0
  %892 = vmatprep.subr.bf16.mxu0 0
  %893 = vmatpush1.bf16.msra.mxu0 0
  %894 = vmatprep.subr.bf16.mxu0 0
  %895 = vmatpush1.bf16.msra.mxu0 0
  %896 = vmatprep.subr.bf16.mxu0 0
  %897 = vmatpush1.bf16.msra.mxu0 0
  %898 = vmatprep.subr.bf16.mxu0 0
  %899 = vmatpush1.bf16.msra.mxu0 0
  %900 = vmatprep.mubr.bf16.mxu0 0
  %901 = vmatmul.mubr.bf16.gmra.mrb[0].mxu0 %v866
  %v902 = vpop.f32.mrb[0].mxu0
  %v903 = vadd.f32 0.0, %v902
  %v904 = vpop.f32.mrb[0].mxu0
  %v905 = vadd.f32 0.0, %v904
  %v906 = vpop.f32.mrb[0].mxu0
  %v907 = vpop.f32.mrb[0].mxu0
  %908 = vdwg.mxu0
  %v909 = vadd.f32 %v822, %v903
  %v910 = vadd.f32 %v823, %v905
  %v911 = vxor.u32 %v817, 2147483648
  %v912 = vxor.u32 %v818, 2147483648
  %v913 = vmul.f32 %v911, 1.442695
  %v914 = vpow.pop %v913
  %v915 = vmul.f32 %v912, 1.442695
  %v916 = vpow.pop %v915
  %v917 = vadd.f32 %v914, 1.0
  %v918 = vadd.f32 %v916, 1.0
  %v919 = vrcp.pop %v917
  %v920 = vmul.f32 1.0, %v919
  %v921 = vrcp.pop %v918
  %v922 = vmul.f32 1.0, %v921
  %v923 = vtanh.pop %v818
  %925 = vrot.lane.b32.xlu0 %v724, 64
  %v926 = vpop.permute.xlu0 %925
  %v928 = vmul.f32 %v920, %v926
  %v929 = vmul.f32 %v920, %v923
  %931 = vrot.lane.b32.xlu0 %v929, 64
  %v932 = vpop.permute.xlu0 %931
  %v934 = vadd.f32 %v928, %v932
  %v935 = vtanh.pop %v934
  %v936 = vmul.f32 %v922, %v935
  %v937 = vxor.u32 %v909, 2147483648
  %v938 = vxor.u32 %v910, 2147483648
  %v939 = vmul.f32 %v937, 1.442695
  %v940 = vpow.pop %v939
  %v941 = vmul.f32 %v938, 1.442695
  %v942 = vpow.pop %v941
  %v943 = vadd.f32 %v940, 1.0
  %v944 = vadd.f32 %v942, 1.0
  %v945 = vrcp.pop %v943
  %v946 = vmul.f32 1.0, %v945
  %v947 = vrcp.pop %v944
  %v948 = vmul.f32 1.0, %v947
  %v949 = vtanh.pop %v910
  %951 = vrot.lane.b32.xlu0 %v726, 64
  %v952 = vpop.permute.xlu0 %951
  %v954 = vmul.f32 %v946, %v952
  %v955 = vmul.f32 %v946, %v949
  %957 = vrot.lane.b32.xlu0 %v955, 64
  %v958 = vpop.permute.xlu0 %957
  %v960 = vadd.f32 %v954, %v958
  %v961 = vtanh.pop %v960
  %v962 = vmul.f32 %v948, %v961
  %964 = vrot.lane.b32.xlu0 %v936, 64
  %v965 = vpop.permute.xlu0 %964
  %967 = vst.msk [vmem:[#allocation8] sm:$0xff] %vm162, %v965
  %969 = vrot.lane.b32.xlu0 %v962, 64
  %v970 = vpop.permute.xlu0 %969
  %s972 = scalar_lea.vmem [#allocation9], 56
  %973 = vst.msk [vmem:[%s972] sm:$0xff] %vm162, %v970
  %s974 = smul.u32 1, 2
  %s975 = smul.addr %s974, 8
  %s976 = scalar_lea.vmem [#allocation2], %s975
  %v977 = vld [vmem:[%s976] sm:$0xff]
  %v978 = vld [vmem:[%s976 + $0x8] sm:$0xff]
  %v979 = vpack.c.bf16 %v936, %v936
  %981 = vrot.lane.b32.xlu0 %v979, 64
  %v982 = vpop.permute.xlu0 %981
  %v984 = vsel %vm162, %v982, 0
  %986 = vmatprep.subr.bf16.mxu0 %v758
  %987 = vmatpush1.bf16.msra.mxu0 %v757
  %988 = vmatprep.subr.bf16.mxu0 %v760
  %989 = vmatpush1.bf16.msra.mxu0 %v759
  %990 = vmatprep.subr.bf16.mxu0 %v762
  %991 = vmatpush1.bf16.msra.mxu0 %v761
  %992 = vmatprep.subr.bf16.mxu0 %v764
  %993 = vmatpush1.bf16.msra.mxu0 %v763
  %994 = vmatprep.subr.bf16.mxu0 0
  %995 = vmatpush1.bf16.msra.mxu0 0
  %996 = vmatprep.subr.bf16.mxu0 0
  %997 = vmatpush1.bf16.msra.mxu0 0
  %998 = vmatprep.subr.bf16.mxu0 0
  %999 = vmatpush1.bf16.msra.mxu0 0
  %1000 = vmatprep.subr.bf16.mxu0 0
  %1001 = vmatpush1.bf16.msra.mxu0 0
  %1002 = vmatprep.subr.bf16.mxu0 0
  %1003 = vmatpush1.bf16.msra.mxu0 0
  %1004 = vmatprep.subr.bf16.mxu0 0
  %1005 = vmatpush1.bf16.msra.mxu0 0
  %1006 = vmatprep.subr.bf16.mxu0 0
  %1007 = vmatpush1.bf16.msra.mxu0 0
  %1008 = vmatprep.subr.bf16.mxu0 0
  %1009 = vmatpush1.bf16.msra.mxu0 0
  %1010 = vmatprep.subr.bf16.mxu0 0
  %1011 = vmatpush1.bf16.msra.mxu0 0
  %1012 = vmatprep.subr.bf16.mxu0 0
  %1013 = vmatpush1.bf16.msra.mxu0 0
  %1014 = vmatprep.subr.bf16.mxu0 0
  %1015 = vmatpush1.bf16.msra.mxu0 0
  %1016 = vmatprep.subr.bf16.mxu0 0
  %1017 = vmatpush1.bf16.msra.mxu0 0
  %1018 = vmatprep.mubr.bf16.mxu0 0
  %1019 = vmatmul.mubr.bf16.gmra.mrb[0].mxu0 %v984
  %v1020 = vpop.f32.mrb[0].mxu0
  %v1021 = vadd.f32 0.0, %v1020
  %v1022 = vpop.f32.mrb[0].mxu0
  %v1023 = vadd.f32 0.0, %v1022
  %v1024 = vpop.f32.mrb[0].mxu0
  %v1025 = vpop.f32.mrb[0].mxu0
  %1026 = vdwg.mxu0
  %v1027 = vadd.f32 %v977, %v1021
  %v1028 = vadd.f32 %v978, %v1023
  %s1029 = smul.u32 6, 2
  %s1030 = smul.addr %s1029, 8
  %s1031 = scalar_lea.vmem [#allocation3], %s1030
  %v1032 = vld [vmem:[%s1031] sm:$0xff]
  %v1033 = vld [vmem:[%s1031 + $0x8] sm:$0xff]
  %v1034 = vpack.c.bf16 %v962, %v962
  %1036 = vrot.lane.b32.xlu0 %v1034, 64
  %v1037 = vpop.permute.xlu0 %1036
  %v1039 = vsel %vm162, %v1037, 0
  %1041 = vmatprep.subr.bf16.mxu0 %v850
  %1042 = vmatpush1.bf16.msra.mxu0 %v849
  %1043 = vmatprep.subr.bf16.mxu0 %v852
  %1044 = vmatpush1.bf16.msra.mxu0 %v851
  %1045 = vmatprep.subr.bf16.mxu0 %v854
  %1046 = vmatpush1.bf16.msra.mxu0 %v853
  %1047 = vmatprep.subr.bf16.mxu0 %v856
  %1048 = vmatpush1.bf16.msra.mxu0 %v855
  %1049 = vmatprep.subr.bf16.mxu0 0
  %1050 = vmatpush1.bf16.msra.mxu0 0
  %1051 = vmatprep.subr.bf16.mxu0 0
  %1052 = vmatpush1.bf16.msra.mxu0 0
  %1053 = vmatprep.subr.bf16.mxu0 0
  %1054 = vmatpush1.bf16.msra.mxu0 0
  %1055 = vmatprep.subr.bf16.mxu0 0
  %1056 = vmatpush1.bf16.msra.mxu0 0
  %1057 = vmatprep.subr.bf16.mxu0 0
  %1058 = vmatpush1.bf16.msra.mxu0 0
  %1059 = vmatprep.subr.bf16.mxu0 0
  %1060 = vmatpush1.bf16.msra.mxu0 0
  %1061 = vmatprep.subr.bf16.mxu0 0
  %1062 = vmatpush1.bf16.msra.mxu0 0
  %1063 = vmatprep.subr.bf16.mxu0 0
  %1064 = vmatpush1.bf16.msra.mxu0 0
  %1065 = vmatprep.subr.bf16.mxu0 0
  %1066 = vmatpush1.bf16.msra.mxu0 0
  %1067 = vmatprep.subr.bf16.mxu0 0
  %1068 = vmatpush1.bf16.msra.mxu0 0
  %1069 = vmatprep.subr.bf16.mxu0 0
  %1070 = vmatpush1.bf16.msra.mxu0 0
  %1071 = vmatprep.subr.bf16.mxu0 0
  %1072 = vmatpush1.bf16.msra.mxu0 0
  %1073 = vmatprep.mubr.bf16.mxu0 0
  %1074 = vmatmul.mubr.bf16.gmra.mrb[0].mxu0 %v1039
  %v1075 = vpop.f32.mrb[0].mxu0
  %v1076 = vadd.f32 0.0, %v1075
  %v1077 = vpop.f32.mrb[0].mxu0
  %v1078 = vadd.f32 0.0, %v1077
  %v1079 = vpop.f32.mrb[0].mxu0
  %v1080 = vpop.f32.mrb[0].mxu0
  %1081 = vdwg.mxu0
  %v1082 = vadd.f32 %v1032, %v1076
  %v1083 = vadd.f32 %v1033, %v1078
  %v1084 = vxor.u32 %v1027, 2147483648
  %v1085 = vxor.u32 %v1028, 2147483648
  %v1086 = vmul.f32 %v1084, 1.442695
  %v1087 = vpow.pop %v1086
  %v1088 = vmul.f32 %v1085, 1.442695
  %v1089 = vpow.pop %v1088
  %v1090 = vadd.f32 %v1087, 1.0
  %v1091 = vadd.f32 %v1089, 1.0
  %v1092 = vrcp.pop %v1090
  %v1093 = vmul.f32 1.0, %v1092
  %v1094 = vrcp.pop %v1091
  %v1095 = vmul.f32 1.0, %v1094
  %v1096 = vtanh.pop %v1028
  %v1097 = vmul.f32 %v1093, %v934
  %v1098 = vmul.f32 %v1093, %v1096
  %1100 = vrot.lane.b32.xlu0 %v1098, 64
  %v1101 = vpop.permute.xlu0 %1100
  %v1103 = vadd.f32 %v1097, %v1101
  %v1104 = vtanh.pop %v1103
  %v1105 = vmul.f32 %v1095, %v1104
  %v1106 = vxor.u32 %v1082, 2147483648
  %v1107 = vxor.u32 %v1083, 2147483648
  %v1108 = vmul.f32 %v1106, 1.442695
  %v1109 = vpow.pop %v1108
  %v1110 = vmul.f32 %v1107, 1.442695
  %v1111 = vpow.pop %v1110
  %v1112 = vadd.f32 %v1109, 1.0
  %v1113 = vadd.f32 %v1111, 1.0
  %v1114 = vrcp.pop %v1112
  %v1115 = vmul.f32 1.0, %v1114
  %v1116 = vrcp.pop %v1113
  %v1117 = vmul.f32 1.0, %v1116
  %v1118 = vtanh.pop %v1083
  %v1119 = vmul.f32 %v1115, %v960
  %v1120 = vmul.f32 %v1115, %v1118
  %1122 = vrot.lane.b32.xlu0 %v1120, 64
  %v1123 = vpop.permute.xlu0 %1122
  %v1125 = vadd.f32 %v1119, %v1123
  %v1126 = vtanh.pop %v1125
  %v1127 = vmul.f32 %v1117, %v1126
  %1129 = vrot.lane.b32.xlu0 %v1105, 64
  %v1130 = vpop.permute.xlu0 %1129
  %s1132 = scalar_lea.vmem [#allocation8], 8
  %1133 = vst.msk [vmem:[%s1132] sm:$0xff] %vm162, %v1130
  %1135 = vrot.lane.b32.xlu0 %v1127, 64
  %v1136 = vpop.permute.xlu0 %1135
  %s1138 = scalar_lea.vmem [#allocation9], 48
  %1139 = vst.msk [vmem:[%s1138] sm:$0xff] %vm162, %v1136
  %s1140 = smul.u32 2, 2
  %s1141 = smul.addr %s1140, 8
  %s1142 = scalar_lea.vmem [#allocation2], %s1141
  %v1143 = vld [vmem:[%s1142] sm:$0xff]
  %v1144 = vld [vmem:[%s1142 + $0x8] sm:$0xff]
  %v1145 = vpack.c.bf16 %v1105, %v1105
  %1147 = vrot.lane.b32.xlu0 %v1145, 64
  %v1148 = vpop.permute.xlu0 %1147
  %v1150 = vsel %vm162, %v1148, 0
  %1152 = vmatprep.subr.bf16.mxu0 %v758
  %1153 = vmatpush1.bf16.msra.mxu0 %v757
  %1154 = vmatprep.subr.bf16.mxu0 %v760
  %1155 = vmatpush1.bf16.msra.mxu0 %v759
  %1156 = vmatprep.subr.bf16.mxu0 %v762
  %1157 = vmatpush1.bf16.msra.mxu0 %v761
  %1158 = vmatprep.subr.bf16.mxu0 %v764
  %1159 = vmatpush1.bf16.msra.mxu0 %v763
  %1160 = vmatprep.subr.bf16.mxu0 0
  %1161 = vmatpush1.bf16.msra.mxu0 0
  %1162 = vmatprep.subr.bf16.mxu0 0
  %1163 = vmatpush1.bf16.msra.mxu0 0
  %1164 = vmatprep.subr.bf16.mxu0 0
  %1165 = vmatpush1.bf16.msra.mxu0 0
  %1166 = vmatprep.subr.bf16.mxu0 0
  %1167 = vmatpush1.bf16.msra.mxu0 0
  %1168 = vmatprep.subr.bf16.mxu0 0
  %1169 = vmatpush1.bf16.msra.mxu0 0
  %1170 = vmatprep.subr.bf16.mxu0 0
  %1171 = vmatpush1.bf16.msra.mxu0 0
  %1172 = vmatprep.subr.bf16.mxu0 0
  %1173 = vmatpush1.bf16.msra.mxu0 0
  %1174 = vmatprep.subr.bf16.mxu0 0
  %1175 = vmatpush1.bf16.msra.mxu0 0
  %1176 = vmatprep.subr.bf16.mxu0 0
  %1177 = vmatpush1.bf16.msra.mxu0 0
  %1178 = vmatprep.subr.bf16.mxu0 0
  %1179 = vmatpush1.bf16.msra.mxu0 0
  %1180 = vmatprep.subr.bf16.mxu0 0
  %1181 = vmatpush1.bf16.msra.mxu0 0
  %1182 = vmatprep.subr.bf16.mxu0 0
  %1183 = vmatpush1.bf16.msra.mxu0 0
  %1184 = vmatprep.mubr.bf16.mxu0 0
  %1185 = vmatmul.mubr.bf16.gmra.mrb[0].mxu0 %v1150
  %v1186 = vpop.f32.mrb[0].mxu0
  %v1187 = vadd.f32 0.0, %v1186
  %v1188 = vpop.f32.mrb[0].mxu0
  %v1189 = vadd.f32 0.0, %v1188
  %v1190 = vpop.f32.mrb[0].mxu0
  %v1191 = vpop.f32.mrb[0].mxu0
  %1192 = vdwg.mxu0
  %v1193 = vadd.f32 %v1143, %v1187
  %v1194 = vadd.f32 %v1144, %v1189
  %s1195 = smul.u32 5, 2
  %s1196 = smul.addr %s1195, 8
  %s1197 = scalar_lea.vmem [#allocation3], %s1196
  %v1198 = vld [vmem:[%s1197] sm:$0xff]
  %v1199 = vld [vmem:[%s1197 + $0x8] sm:$0xff]
  %v1200 = vpack.c.bf16 %v1127, %v1127
  %1202 = vrot.lane.b32.xlu0 %v1200, 64
  %v1203 = vpop.permute.xlu0 %1202
  %v1205 = vsel %vm162, %v1203, 0
  %1207 = vmatprep.subr.bf16.mxu0 %v850
  %1208 = vmatpush1.bf16.msra.mxu0 %v849
  %1209 = vmatprep.subr.bf16.mxu0 %v852
  %1210 = vmatpush1.bf16.msra.mxu0 %v851
  %1211 = vmatprep.subr.bf16.mxu0 %v854
  %1212 = vmatpush1.bf16.msra.mxu0 %v853
  %1213 = vmatprep.subr.bf16.mxu0 %v856
  %1214 = vmatpush1.bf16.msra.mxu0 %v855
  %1215 = vmatprep.subr.bf16.mxu0 0
  %1216 = vmatpush1.bf16.msra.mxu0 0
  %1217 = vmatprep.subr.bf16.mxu0 0
  %1218 = vmatpush1.bf16.msra.mxu0 0
  %1219 = vmatprep.subr.bf16.mxu0 0
  %1220 = vmatpush1.bf16.msra.mxu0 0
  %1221 = vmatprep.subr.bf16.mxu0 0
  %1222 = vmatpush1.bf16.msra.mxu0 0
  %1223 = vmatprep.subr.bf16.mxu0 0
  %1224 = vmatpush1.bf16.msra.mxu0 0
  %1225 = vmatprep.subr.bf16.mxu0 0
  %1226 = vmatpush1.bf16.msra.mxu0 0
  %1227 = vmatprep.subr.bf16.mxu0 0
  %1228 = vmatpush1.bf16.msra.mxu0 0
  %1229 = vmatprep.subr.bf16.mxu0 0
  %1230 = vmatpush1.bf16.msra.mxu0 0
  %1231 = vmatprep.subr.bf16.mxu0 0
  %1232 = vmatpush1.bf16.msra.mxu0 0
  %1233 = vmatprep.subr.bf16.mxu0 0
  %1234 = vmatpush1.bf16.msra.mxu0 0
  %1235 = vmatprep.subr.bf16.mxu0 0
  %1236 = vmatpush1.bf16.msra.mxu0 0
  %1237 = vmatprep.subr.bf16.mxu0 0
  %1238 = vmatpush1.bf16.msra.mxu0 0
  %1239 = vmatprep.mubr.bf16.mxu0 0
  %1240 = vmatmul.mubr.bf16.gmra.mrb[0].mxu0 %v1205
  %v1241 = vpop.f32.mrb[0].mxu0
  %v1242 = vadd.f32 0.0, %v1241
  %v1243 = vpop.f32.mrb[0].mxu0
  %v1244 = vadd.f32 0.0, %v1243
  %v1245 = vpop.f32.mrb[0].mxu0
  %v1246 = vpop.f32.mrb[0].mxu0
  %1247 = vdwg.mxu0
  %v1248 = vadd.f32 %v1198, %v1242
  %v1249 = vadd.f32 %v1199, %v1244
  %v1250 = vxor.u32 %v1193, 2147483648
  %v1251 = vxor.u32 %v1194, 2147483648
  %v1252 = vmul.f32 %v1250, 1.442695
  %v1253 = vpow.pop %v1252
  %v1254 = vmul.f32 %v1251, 1.442695
  %v1255 = vpow.pop %v1254
  %v1256 = vadd.f32 %v1253, 1.0
  %v1257 = vadd.f32 %v1255, 1.0
  %v1258 = vrcp.pop %v1256
  %v1259 = vmul.f32 1.0, %v1258
  %v1260 = vrcp.pop %v1257
  %v1261 = vmul.f32 1.0, %v1260
  %v1262 = vtanh.pop %v1194
  %v1263 = vmul.f32 %v1259, %v1103
  %v1264 = vmul.f32 %v1259, %v1262
  %1266 = vrot.lane.b32.xlu0 %v1264, 64
  %v1267 = vpop.permute.xlu0 %1266
  %v1269 = vadd.f32 %v1263, %v1267
  %v1270 = vtanh.pop %v1269
  %v1271 = vmul.f32 %v1261, %v1270
  %v1272 = vxor.u32 %v1248, 2147483648
  %v1273 = vxor.u32 %v1249, 2147483648
  %v1274 = vmul.f32 %v1272, 1.442695
  %v1275 = vpow.pop %v1274
  %v1276 = vmul.f32 %v1273, 1.442695
  %v1277 = vpow.pop %v1276
  %v1278 = vadd.f32 %v1275, 1.0
  %v1279 = vadd.f32 %v1277, 1.0
  %v1280 = vrcp.pop %v1278
  %v1281 = vmul.f32 1.0, %v1280
  %v1282 = vrcp.pop %v1279
  %v1283 = vmul.f32 1.0, %v1282
  %v1284 = vtanh.pop %v1249
  %v1285 = vmul.f32 %v1281, %v1125
  %v1286 = vmul.f32 %v1281, %v1284
  %1288 = vrot.lane.b32.xlu0 %v1286, 64
  %v1289 = vpop.permute.xlu0 %1288
  %v1291 = vadd.f32 %v1285, %v1289
  %v1292 = vtanh.pop %v1291
  %v1293 = vmul.f32 %v1283, %v1292
  %1295 = vrot.lane.b32.xlu0 %v1271, 64
  %v1296 = vpop.permute.xlu0 %1295
  %s1298 = scalar_lea.vmem [#allocation8], 16
  %1299 = vst.msk [vmem:[%s1298] sm:$0xff] %vm162, %v1296
  %1301 = vrot.lane.b32.xlu0 %v1293, 64
  %v1302 = vpop.permute.xlu0 %1301
  %s1304 = scalar_lea.vmem [#allocation9], 40
  %1305 = vst.msk [vmem:[%s1304] sm:$0xff] %vm162, %v1302
  %s1306 = smul.u32 3, 2
  %s1307 = smul.addr %s1306, 8
  %s1308 = scalar_lea.vmem [#allocation2], %s1307
  %v1309 = vld [vmem:[%s1308] sm:$0xff]
  %v1310 = vld [vmem:[%s1308 + $0x8] sm:$0xff]
  %v1311 = vpack.c.bf16 %v1271, %v1271
  %1313 = vrot.lane.b32.xlu0 %v1311, 64
  %v1314 = vpop.permute.xlu0 %1313
  %v1316 = vsel %vm162, %v1314, 0
  %1318 = vmatprep.subr.bf16.mxu0 %v758
  %1319 = vmatpush1.bf16.msra.mxu0 %v757
  %1320 = vmatprep.subr.bf16.mxu0 %v760
  %1321 = vmatpush1.bf16.msra.mxu0 %v759
  %1322 = vmatprep.subr.bf16.mxu0 %v762
  %1323 = vmatpush1.bf16.msra.mxu0 %v761
  %1324 = vmatprep.subr.bf16.mxu0 %v764
  %1325 = vmatpush1.bf16.msra.mxu0 %v763
  %1326 = vmatprep.subr.bf16.mxu0 0
  %1327 = vmatpush1.bf16.msra.mxu0 0
  %1328 = vmatprep.subr.bf16.mxu0 0
  %1329 = vmatpush1.bf16.msra.mxu0 0
  %1330 = vmatprep.subr.bf16.mxu0 0
  %1331 = vmatpush1.bf16.msra.mxu0 0
  %1332 = vmatprep.subr.bf16.mxu0 0
  %1333 = vmatpush1.bf16.msra.mxu0 0
  %1334 = vmatprep.subr.bf16.mxu0 0
  %1335 = vmatpush1.bf16.msra.mxu0 0
  %1336 = vmatprep.subr.bf16.mxu0 0
  %1337 = vmatpush1.bf16.msra.mxu0 0
  %1338 = vmatprep.subr.bf16.mxu0 0
  %1339 = vmatpush1.bf16.msra.mxu0 0
  %1340 = vmatprep.subr.bf16.mxu0 0
  %1341 = vmatpush1.bf16.msra.mxu0 0
  %1342 = vmatprep.subr.bf16.mxu0 0
  %1343 = vmatpush1.bf16.msra.mxu0 0
  %1344 = vmatprep.subr.bf16.mxu0 0
  %1345 = vmatpush1.bf16.msra.mxu0 0
  %1346 = vmatprep.subr.bf16.mxu0 0
  %1347 = vmatpush1.bf16.msra.mxu0 0
  %1348 = vmatprep.subr.bf16.mxu0 0
  %1349 = vmatpush1.bf16.msra.mxu0 0
  %1350 = vmatprep.mubr.bf16.mxu0 0
  %1351 = vmatmul.mubr.bf16.gmra.mrb[0].mxu0 %v1316
  %v1352 = vpop.f32.mrb[0].mxu0
  %v1353 = vadd.f32 0.0, %v1352
  %v1354 = vpop.f32.mrb[0].mxu0
  %v1355 = vadd.f32 0.0, %v1354
  %v1356 = vpop.f32.mrb[0].mxu0
  %v1357 = vpop.f32.mrb[0].mxu0
  %1358 = vdwg.mxu0
  %v1359 = vadd.f32 %v1309, %v1353
  %v1360 = vadd.f32 %v1310, %v1355
  %s1361 = smul.u32 4, 2
  %s1362 = smul.addr %s1361, 8
  %s1363 = scalar_lea.vmem [#allocation3], %s1362
  %v1364 = vld [vmem:[%s1363] sm:$0xff]
  %v1365 = vld [vmem:[%s1363 + $0x8] sm:$0xff]
  %v1366 = vpack.c.bf16 %v1293, %v1293
  %1368 = vrot.lane.b32.xlu0 %v1366, 64
  %v1369 = vpop.permute.xlu0 %1368
  %v1371 = vsel %vm162, %v1369, 0
  %1373 = vmatprep.subr.bf16.mxu0 %v850
  %1374 = vmatpush1.bf16.msra.mxu0 %v849
  %1375 = vmatprep.subr.bf16.mxu0 %v852
  %1376 = vmatpush1.bf16.msra.mxu0 %v851
  %1377 = vmatprep.subr.bf16.mxu0 %v854
  %1378 = vmatpush1.bf16.msra.mxu0 %v853
  %1379 = vmatprep.subr.bf16.mxu0 %v856
  %1380 = vmatpush1.bf16.msra.mxu0 %v855
  %1381 = vmatprep.subr.bf16.mxu0 0
  %1382 = vmatpush1.bf16.msra.mxu0 0
  %1383 = vmatprep.subr.bf16.mxu0 0
  %1384 = vmatpush1.bf16.msra.mxu0 0
  %1385 = vmatprep.subr.bf16.mxu0 0
  %1386 = vmatpush1.bf16.msra.mxu0 0
  %1387 = vmatprep.subr.bf16.mxu0 0
  %1388 = vmatpush1.bf16.msra.mxu0 0
  %1389 = vmatprep.subr.bf16.mxu0 0
  %1390 = vmatpush1.bf16.msra.mxu0 0
  %1391 = vmatprep.subr.bf16.mxu0 0
  %1392 = vmatpush1.bf16.msra.mxu0 0
  %1393 = vmatprep.subr.bf16.mxu0 0
  %1394 = vmatpush1.bf16.msra.mxu0 0
  %1395 = vmatprep.subr.bf16.mxu0 0
  %1396 = vmatpush1.bf16.msra.mxu0 0
  %1397 = vmatprep.subr.bf16.mxu0 0
  %1398 = vmatpush1.bf16.msra.mxu0 0
  %1399 = vmatprep.subr.bf16.mxu0 0
  %1400 = vmatpush1.bf16.msra.mxu0 0
  %1401 = vmatprep.subr.bf16.mxu0 0
  %1402 = vmatpush1.bf16.msra.mxu0 0
  %1403 = vmatprep.subr.bf16.mxu0 0
  %1404 = vmatpush1.bf16.msra.mxu0 0
  %1405 = vmatprep.mubr.bf16.mxu0 0
  %1406 = vmatmul.mubr.bf16.gmra.mrb[0].mxu0 %v1371
  %v1407 = vpop.f32.mrb[0].mxu0
  %v1408 = vadd.f32 0.0, %v1407
  %v1409 = vpop.f32.mrb[0].mxu0
  %v1410 = vadd.f32 0.0, %v1409
  %v1411 = vpop.f32.mrb[0].mxu0
  %v1412 = vpop.f32.mrb[0].mxu0
  %1413 = vdwg.mxu0
  %v1414 = vadd.f32 %v1364, %v1408
  %v1415 = vadd.f32 %v1365, %v1410
  %v1416 = vxor.u32 %v1359, 2147483648
  %v1417 = vxor.u32 %v1360, 2147483648
  %v1418 = vmul.f32 %v1416, 1.442695
  %v1419 = vpow.pop %v1418
  %v1420 = vmul.f32 %v1417, 1.442695
  %v1421 = vpow.pop %v1420
  %v1422 = vadd.f32 %v1419, 1.0
  %v1423 = vadd.f32 %v1421, 1.0
  %v1424 = vrcp.pop %v1422
  %v1425 = vmul.f32 1.0, %v1424
  %v1426 = vrcp.pop %v1423
  %v1427 = vmul.f32 1.0, %v1426
  %v1428 = vtanh.pop %v1360
  %v1429 = vmul.f32 %v1425, %v1269
  %v1430 = vmul.f32 %v1425, %v1428
  %1432 = vrot.lane.b32.xlu0 %v1430, 64
  %v1433 = vpop.permute.xlu0 %1432
  %v1435 = vadd.f32 %v1429, %v1433
  %v1436 = vtanh.pop %v1435
  %v1437 = vmul.f32 %v1427, %v1436
  %v1438 = vxor.u32 %v1414, 2147483648
  %v1439 = vxor.u32 %v1415, 2147483648
  %v1440 = vmul.f32 %v1438, 1.442695
  %v1441 = vpow.pop %v1440
  %v1442 = vmul.f32 %v1439, 1.442695
  %v1443 = vpow.pop %v1442
  %v1444 = vadd.f32 %v1441, 1.0
  %v1445 = vadd.f32 %v1443, 1.0
  %v1446 = vrcp.pop %v1444
  %v1447 = vmul.f32 1.0, %v1446
  %v1448 = vrcp.pop %v1445
  %v1449 = vmul.f32 1.0, %v1448
  %v1450 = vtanh.pop %v1415
  %v1451 = vmul.f32 %v1447, %v1291
  %v1452 = vmul.f32 %v1447, %v1450
  %1454 = vrot.lane.b32.xlu0 %v1452, 64
  %v1455 = vpop.permute.xlu0 %1454
  %v1457 = vadd.f32 %v1451, %v1455
  %v1458 = vtanh.pop %v1457
  %v1459 = vmul.f32 %v1449, %v1458
  %1461 = vrot.lane.b32.xlu0 %v1437, 64
  %v1462 = vpop.permute.xlu0 %1461
  %s1464 = scalar_lea.vmem [#allocation8], 24
  %1465 = vst.msk [vmem:[%s1464] sm:$0xff] %vm162, %v1462
  %1467 = vrot.lane.b32.xlu0 %v1459, 64
  %v1468 = vpop.permute.xlu0 %1467
  %s1470 = scalar_lea.vmem [#allocation9], 32
  %1471 = vst.msk [vmem:[%s1470] sm:$0xff] %vm162, %v1468
  %s1472 = smul.addr %s1361, 8
  %s1473 = scalar_lea.vmem [#allocation2], %s1472
  %v1474 = vld [vmem:[%s1473] sm:$0xff]
  %v1475 = vld [vmem:[%s1473 + $0x8] sm:$0xff]
  %v1476 = vpack.c.bf16 %v1437, %v1437
  %1478 = vrot.lane.b32.xlu0 %v1476, 64
  %v1479 = vpop.permute.xlu0 %1478
  %v1481 = vsel %vm162, %v1479, 0
  %1483 = vmatprep.subr.bf16.mxu0 %v758
  %1484 = vmatpush1.bf16.msra.mxu0 %v757
  %1485 = vmatprep.subr.bf16.mxu0 %v760
  %1486 = vmatpush1.bf16.msra.mxu0 %v759
  %1487 = vmatprep.subr.bf16.mxu0 %v762
  %1488 = vmatpush1.bf16.msra.mxu0 %v761
  %1489 = vmatprep.subr.bf16.mxu0 %v764
  %1490 = vmatpush1.bf16.msra.mxu0 %v763
  %1491 = vmatprep.subr.bf16.mxu0 0
  %1492 = vmatpush1.bf16.msra.mxu0 0
  %1493 = vmatprep.subr.bf16.mxu0 0
  %1494 = vmatpush1.bf16.msra.mxu0 0
  %1495 = vmatprep.subr.bf16.mxu0 0
  %1496 = vmatpush1.bf16.msra.mxu0 0
  %1497 = vmatprep.subr.bf16.mxu0 0
  %1498 = vmatpush1.bf16.msra.mxu0 0
  %1499 = vmatprep.subr.bf16.mxu0 0
  %1500 = vmatpush1.bf16.msra.mxu0 0
  %1501 = vmatprep.subr.bf16.mxu0 0
  %1502 = vmatpush1.bf16.msra.mxu0 0
  %1503 = vmatprep.subr.bf16.mxu0 0
  %1504 = vmatpush1.bf16.msra.mxu0 0
  %1505 = vmatprep.subr.bf16.mxu0 0
  %1506 = vmatpush1.bf16.msra.mxu0 0
  %1507 = vmatprep.subr.bf16.mxu0 0
  %1508 = vmatpush1.bf16.msra.mxu0 0
  %1509 = vmatprep.subr.bf16.mxu0 0
  %1510 = vmatpush1.bf16.msra.mxu0 0
  %1511 = vmatprep.subr.bf16.mxu0 0
  %1512 = vmatpush1.bf16.msra.mxu0 0
  %1513 = vmatprep.subr.bf16.mxu0 0
  %1514 = vmatpush1.bf16.msra.mxu0 0
  %1515 = vmatprep.mubr.bf16.mxu0 0
  %1516 = vmatmul.mubr.bf16.gmra.mrb[0].mxu0 %v1481
  %v1517 = vpop.f32.mrb[0].mxu0
  %v1518 = vadd.f32 0.0, %v1517
  %v1519 = vpop.f32.mrb[0].mxu0
  %v1520 = vadd.f32 0.0, %v1519
  %v1521 = vpop.f32.mrb[0].mxu0
  %v1522 = vpop.f32.mrb[0].mxu0
  %1523 = vdwg.mxu0
  %v1524 = vadd.f32 %v1474, %v1518
  %v1525 = vadd.f32 %v1475, %v1520
  %s1526 = smul.addr %s1306, 8
  %s1527 = scalar_lea.vmem [#allocation3], %s1526
  %v1528 = vld [vmem:[%s1527] sm:$0xff]
  %v1529 = vld [vmem:[%s1527 + $0x8] sm:$0xff]
  %v1530 = vpack.c.bf16 %v1459, %v1459
  %1532 = vrot.lane.b32.xlu0 %v1530, 64
  %v1533 = vpop.permute.xlu0 %1532
  %v1535 = vsel %vm162, %v1533, 0
  %1537 = vmatprep.subr.bf16.mxu0 %v850
  %1538 = vmatpush1.bf16.msra.mxu0 %v849
  %1539 = vmatprep.subr.bf16.mxu0 %v852
  %1540 = vmatpush1.bf16.msra.mxu0 %v851
  %1541 = vmatprep.subr.bf16.mxu0 %v854
  %1542 = vmatpush1.bf16.msra.mxu0 %v853
  %1543 = vmatprep.subr.bf16.mxu0 %v856
  %1544 = vmatpush1.bf16.msra.mxu0 %v855
  %1545 = vmatprep.subr.bf16.mxu0 0
  %1546 = vmatpush1.bf16.msra.mxu0 0
  %1547 = vmatprep.subr.bf16.mxu0 0
  %1548 = vmatpush1.bf16.msra.mxu0 0
  %1549 = vmatprep.subr.bf16.mxu0 0
  %1550 = vmatpush1.bf16.msra.mxu0 0
  %1551 = vmatprep.subr.bf16.mxu0 0
  %1552 = vmatpush1.bf16.msra.mxu0 0
  %1553 = vmatprep.subr.bf16.mxu0 0
  %1554 = vmatpush1.bf16.msra.mxu0 0
  %1555 = vmatprep.subr.bf16.mxu0 0
  %1556 = vmatpush1.bf16.msra.mxu0 0
  %1557 = vmatprep.subr.bf16.mxu0 0
  %1558 = vmatpush1.bf16.msra.mxu0 0
  %1559 = vmatprep.subr.bf16.mxu0 0
  %1560 = vmatpush1.bf16.msra.mxu0 0
  %1561 = vmatprep.subr.bf16.mxu0 0
  %1562 = vmatpush1.bf16.msra.mxu0 0
  %1563 = vmatprep.subr.bf16.mxu0 0
  %1564 = vmatpush1.bf16.msra.mxu0 0
  %1565 = vmatprep.subr.bf16.mxu0 0
  %1566 = vmatpush1.bf16.msra.mxu0 0
  %1567 = vmatprep.subr.bf16.mxu0 0
  %1568 = vmatpush1.bf16.msra.mxu0 0
  %1569 = vmatprep.mubr.bf16.mxu0 0
  %1570 = vmatmul.mubr.bf16.gmra.mrb[0].mxu0 %v1535
  %v1571 = vpop.f32.mrb[0].mxu0
  %v1572 = vadd.f32 0.0, %v1571
  %v1573 = vpop.f32.mrb[0].mxu0
  %v1574 = vadd.f32 0.0, %v1573
  %v1575 = vpop.f32.mrb[0].mxu0
  %v1576 = vpop.f32.mrb[0].mxu0
  %1577 = vdwg.mxu0
  %v1578 = vadd.f32 %v1528, %v1572
  %v1579 = vadd.f32 %v1529, %v1574
  %v1580 = vxor.u32 %v1524, 2147483648
  %v1581 = vxor.u32 %v1525, 2147483648
  %v1582 = vmul.f32 %v1580, 1.442695
  %v1583 = vpow.pop %v1582
  %v1584 = vmul.f32 %v1581, 1.442695
  %v1585 = vpow.pop %v1584
  %v1586 = vadd.f32 %v1583, 1.0
  %v1587 = vadd.f32 %v1585, 1.0
  %v1588 = vrcp.pop %v1586
  %v1589 = vmul.f32 1.0, %v1588
  %v1590 = vrcp.pop %v1587
  %v1591 = vmul.f32 1.0, %v1590
  %v1592 = vtanh.pop %v1525
  %v1593 = vmul.f32 %v1589, %v1435
  %v1594 = vmul.f32 %v1589, %v1592
  %1596 = vrot.lane.b32.xlu0 %v1594, 64
  %v1597 = vpop.permute.xlu0 %1596
  %v1599 = vadd.f32 %v1593, %v1597
  %v1600 = vtanh.pop %v1599
  %v1601 = vmul.f32 %v1591, %v1600
  %v1602 = vxor.u32 %v1578, 2147483648
  %v1603 = vxor.u32 %v1579, 2147483648
  %v1604 = vmul.f32 %v1602, 1.442695
  %v1605 = vpow.pop %v1604
  %v1606 = vmul.f32 %v1603, 1.442695
  %v1607 = vpow.pop %v1606
  %v1608 = vadd.f32 %v1605, 1.0
  %v1609 = vadd.f32 %v1607, 1.0
  %v1610 = vrcp.pop %v1608
  %v1611 = vmul.f32 1.0, %v1610
  %v1612 = vrcp.pop %v1609
  %v1613 = vmul.f32 1.0, %v1612
  %v1614 = vtanh.pop %v1579
  %v1615 = vmul.f32 %v1611, %v1457
  %v1616 = vmul.f32 %v1611, %v1614
  %1618 = vrot.lane.b32.xlu0 %v1616, 64
  %v1619 = vpop.permute.xlu0 %1618
  %v1621 = vadd.f32 %v1615, %v1619
  %v1622 = vtanh.pop %v1621
  %v1623 = vmul.f32 %v1613, %v1622
  %1625 = vrot.lane.b32.xlu0 %v1601, 64
  %v1626 = vpop.permute.xlu0 %1625
  %s1628 = scalar_lea.vmem [#allocation8], 32
  %1629 = vst.msk [vmem:[%s1628] sm:$0xff] %vm162, %v1626
  %1631 = vrot.lane.b32.xlu0 %v1623, 64
  %v1632 = vpop.permute.xlu0 %1631
  %s1634 = scalar_lea.vmem [#allocation9], 24
  %1635 = vst.msk [vmem:[%s1634] sm:$0xff] %vm162, %v1632
  %s1636 = smul.addr %s1195, 8
  %s1637 = scalar_lea.vmem [#allocation2], %s1636
  %v1638 = vld [vmem:[%s1637] sm:$0xff]
  %v1639 = vld [vmem:[%s1637 + $0x8] sm:$0xff]
  %v1640 = vpack.c.bf16 %v1601, %v1601
  %1642 = vrot.lane.b32.xlu0 %v1640, 64
  %v1643 = vpop.permute.xlu0 %1642
  %v1645 = vsel %vm162, %v1643, 0
  %1647 = vmatprep.subr.bf16.mxu0 %v758
  %1648 = vmatpush1.bf16.msra.mxu0 %v757
  %1649 = vmatprep.subr.bf16.mxu0 %v760
  %1650 = vmatpush1.bf16.msra.mxu0 %v759
  %1651 = vmatprep.subr.bf16.mxu0 %v762
  %1652 = vmatpush1.bf16.msra.mxu0 %v761
  %1653 = vmatprep.subr.bf16.mxu0 %v764
  %1654 = vmatpush1.bf16.msra.mxu0 %v763
  %1655 = vmatprep.subr.bf16.mxu0 0
  %1656 = vmatpush1.bf16.msra.mxu0 0
  %1657 = vmatprep.subr.bf16.mxu0 0
  %1658 = vmatpush1.bf16.msra.mxu0 0
  %1659 = vmatprep.subr.bf16.mxu0 0
  %1660 = vmatpush1.bf16.msra.mxu0 0
  %1661 = vmatprep.subr.bf16.mxu0 0
  %1662 = vmatpush1.bf16.msra.mxu0 0
  %1663 = vmatprep.subr.bf16.mxu0 0
  %1664 = vmatpush1.bf16.msra.mxu0 0
  %1665 = vmatprep.subr.bf16.mxu0 0
  %1666 = vmatpush1.bf16.msra.mxu0 0
  %1667 = vmatprep.subr.bf16.mxu0 0
  %1668 = vmatpush1.bf16.msra.mxu0 0
  %1669 = vmatprep.subr.bf16.mxu0 0
  %1670 = vmatpush1.bf16.msra.mxu0 0
  %1671 = vmatprep.subr.bf16.mxu0 0
  %1672 = vmatpush1.bf16.msra.mxu0 0
  %1673 = vmatprep.subr.bf16.mxu0 0
  %1674 = vmatpush1.bf16.msra.mxu0 0
  %1675 = vmatprep.subr.bf16.mxu0 0
  %1676 = vmatpush1.bf16.msra.mxu0 0
  %1677 = vmatprep.subr.bf16.mxu0 0
  %1678 = vmatpush1.bf16.msra.mxu0 0
  %1679 = vmatprep.mubr.bf16.mxu0 0
  %1680 = vmatmul.mubr.bf16.gmra.mrb[0].mxu0 %v1645
  %v1681 = vpop.f32.mrb[0].mxu0
  %v1682 = vadd.f32 0.0, %v1681
  %v1683 = vpop.f32.mrb[0].mxu0
  %v1684 = vadd.f32 0.0, %v1683
  %v1685 = vpop.f32.mrb[0].mxu0
  %v1686 = vpop.f32.mrb[0].mxu0
  %1687 = vdwg.mxu0
  %v1688 = vadd.f32 %v1638, %v1682
  %v1689 = vadd.f32 %v1639, %v1684
  %s1690 = smul.addr %s1140, 8
  %s1691 = scalar_lea.vmem [#allocation3], %s1690
  %v1692 = vld [vmem:[%s1691] sm:$0xff]
  %v1693 = vld [vmem:[%s1691 + $0x8] sm:$0xff]
  %v1694 = vpack.c.bf16 %v1623, %v1623
  %1696 = vrot.lane.b32.xlu0 %v1694, 64
  %v1697 = vpop.permute.xlu0 %1696
  %v1699 = vsel %vm162, %v1697, 0
  %1701 = vmatprep.subr.bf16.mxu0 %v850
  %1702 = vmatpush1.bf16.msra.mxu0 %v849
  %1703 = vmatprep.subr.bf16.mxu0 %v852
  %1704 = vmatpush1.bf16.msra.mxu0 %v851
  %1705 = vmatprep.subr.bf16.mxu0 %v854
  %1706 = vmatpush1.bf16.msra.mxu0 %v853
  %1707 = vmatprep.subr.bf16.mxu0 %v856
  %1708 = vmatpush1.bf16.msra.mxu0 %v855
  %1709 = vmatprep.subr.bf16.mxu0 0
  %1710 = vmatpush1.bf16.msra.mxu0 0
  %1711 = vmatprep.subr.bf16.mxu0 0
  %1712 = vmatpush1.bf16.msra.mxu0 0
  %1713 = vmatprep.subr.bf16.mxu0 0
  %1714 = vmatpush1.bf16.msra.mxu0 0
  %1715 = vmatprep.subr.bf16.mxu0 0
  %1716 = vmatpush1.bf16.msra.mxu0 0
  %1717 = vmatprep.subr.bf16.mxu0 0
  %1718 = vmatpush1.bf16.msra.mxu0 0
  %1719 = vmatprep.subr.bf16.mxu0 0
  %1720 = vmatpush1.bf16.msra.mxu0 0
  %1721 = vmatprep.subr.bf16.mxu0 0
  %1722 = vmatpush1.bf16.msra.mxu0 0
  %1723 = vmatprep.subr.bf16.mxu0 0
  %1724 = vmatpush1.bf16.msra.mxu0 0
  %1725 = vmatprep.subr.bf16.mxu0 0
  %1726 = vmatpush1.bf16.msra.mxu0 0
  %1727 = vmatprep.subr.bf16.mxu0 0
  %1728 = vmatpush1.bf16.msra.mxu0 0
  %1729 = vmatprep.subr.bf16.mxu0 0
  %1730 = vmatpush1.bf16.msra.mxu0 0
  %1731 = vmatprep.subr.bf16.mxu0 0
  %1732 = vmatpush1.bf16.msra.mxu0 0
  %1733 = vmatprep.mubr.bf16.mxu0 0
  %1734 = vmatmul.mubr.bf16.gmra.mrb[0].mxu0 %v1699
  %v1735 = vpop.f32.mrb[0].mxu0
  %v1736 = vadd.f32 0.0, %v1735
  %v1737 = vpop.f32.mrb[0].mxu0
  %v1738 = vadd.f32 0.0, %v1737
  %v1739 = vpop.f32.mrb[0].mxu0
  %v1740 = vpop.f32.mrb[0].mxu0
  %1741 = vdwg.mxu0
  %v1742 = vadd.f32 %v1692, %v1736
  %v1743 = vadd.f32 %v1693, %v1738
  %v1744 = vxor.u32 %v1688, 2147483648
  %v1745 = vxor.u32 %v1689, 2147483648
  %v1746 = vmul.f32 %v1744, 1.442695
  %v1747 = vpow.pop %v1746
  %v1748 = vmul.f32 %v1745, 1.442695
  %v1749 = vpow.pop %v1748
  %v1750 = vadd.f32 %v1747, 1.0
  %v1751 = vadd.f32 %v1749, 1.0
  %v1752 = vrcp.pop %v1750
  %v1753 = vmul.f32 1.0, %v1752
  %v1754 = vrcp.pop %v1751
  %v1755 = vmul.f32 1.0, %v1754
  %v1756 = vtanh.pop %v1689
  %v1757 = vmul.f32 %v1753, %v1599
  %v1758 = vmul.f32 %v1753, %v1756
  %1760 = vrot.lane.b32.xlu0 %v1758, 64
  %v1761 = vpop.permute.xlu0 %1760
  %v1763 = vadd.f32 %v1757, %v1761
  %v1764 = vtanh.pop %v1763
  %v1765 = vmul.f32 %v1755, %v1764
  %v1766 = vxor.u32 %v1742, 2147483648
  %v1767 = vxor.u32 %v1743, 2147483648
  %v1768 = vmul.f32 %v1766, 1.442695
  %v1769 = vpow.pop %v1768
  %v1770 = vmul.f32 %v1767, 1.442695
  %v1771 = vpow.pop %v1770
  %v1772 = vadd.f32 %v1769, 1.0
  %v1773 = vadd.f32 %v1771, 1.0
  %v1774 = vrcp.pop %v1772
  %v1775 = vmul.f32 1.0, %v1774
  %v1776 = vrcp.pop %v1773
  %v1777 = vmul.f32 1.0, %v1776
  %v1778 = vtanh.pop %v1743
  %v1779 = vmul.f32 %v1775, %v1621
  %v1780 = vmul.f32 %v1775, %v1778
  %1782 = vrot.lane.b32.xlu0 %v1780, 64
  %v1783 = vpop.permute.xlu0 %1782
  %v1785 = vadd.f32 %v1779, %v1783
  %v1786 = vtanh.pop %v1785
  %v1787 = vmul.f32 %v1777, %v1786
  %1789 = vrot.lane.b32.xlu0 %v1765, 64
  %v1790 = vpop.permute.xlu0 %1789
  %s1792 = scalar_lea.vmem [#allocation8], 40
  %1793 = vst.msk [vmem:[%s1792] sm:$0xff] %vm162, %v1790
  %1795 = vrot.lane.b32.xlu0 %v1787, 64
  %v1796 = vpop.permute.xlu0 %1795
  %s1798 = scalar_lea.vmem [#allocation9], 16
  %1799 = vst.msk [vmem:[%s1798] sm:$0xff] %vm162, %v1796
  %s1800 = smul.addr %s1029, 8
  %s1801 = scalar_lea.vmem [#allocation2], %s1800
  %v1802 = vld [vmem:[%s1801] sm:$0xff]
  %v1803 = vld [vmem:[%s1801 + $0x8] sm:$0xff]
  %v1804 = vpack.c.bf16 %v1765, %v1765
  %1806 = vrot.lane.b32.xlu0 %v1804, 64
  %v1807 = vpop.permute.xlu0 %1806
  %v1809 = vsel %vm162, %v1807, 0
  %1811 = vmatprep.subr.bf16.mxu0 %v758
  %1812 = vmatpush1.bf16.msra.mxu0 %v757
  %1813 = vmatprep.subr.bf16.mxu0 %v760
  %1814 = vmatpush1.bf16.msra.mxu0 %v759
  %1815 = vmatprep.subr.bf16.mxu0 %v762
  %1816 = vmatpush1.bf16.msra.mxu0 %v761
  %1817 = vmatprep.subr.bf16.mxu0 %v764
  %1818 = vmatpush1.bf16.msra.mxu0 %v763
  %1819 = vmatprep.subr.bf16.mxu0 0
  %1820 = vmatpush1.bf16.msra.mxu0 0
  %1821 = vmatprep.subr.bf16.mxu0 0
  %1822 = vmatpush1.bf16.msra.mxu0 0
  %1823 = vmatprep.subr.bf16.mxu0 0
  %1824 = vmatpush1.bf16.msra.mxu0 0
  %1825 = vmatprep.subr.bf16.mxu0 0
  %1826 = vmatpush1.bf16.msra.mxu0 0
  %1827 = vmatprep.subr.bf16.mxu0 0
  %1828 = vmatpush1.bf16.msra.mxu0 0
  %1829 = vmatprep.subr.bf16.mxu0 0
  %1830 = vmatpush1.bf16.msra.mxu0 0
  %1831 = vmatprep.subr.bf16.mxu0 0
  %1832 = vmatpush1.bf16.msra.mxu0 0
  %1833 = vmatprep.subr.bf16.mxu0 0
  %1834 = vmatpush1.bf16.msra.mxu0 0
  %1835 = vmatprep.subr.bf16.mxu0 0
  %1836 = vmatpush1.bf16.msra.mxu0 0
  %1837 = vmatprep.subr.bf16.mxu0 0
  %1838 = vmatpush1.bf16.msra.mxu0 0
  %1839 = vmatprep.subr.bf16.mxu0 0
  %1840 = vmatpush1.bf16.msra.mxu0 0
  %1841 = vmatprep.subr.bf16.mxu0 0
  %1842 = vmatpush1.bf16.msra.mxu0 0
  %1843 = vmatprep.mubr.bf16.mxu0 0
  %1844 = vmatmul.mubr.bf16.gmra.mrb[0].mxu0 %v1809
  %v1845 = vpop.f32.mrb[0].mxu0
  %v1846 = vadd.f32 0.0, %v1845
  %v1847 = vpop.f32.mrb[0].mxu0
  %v1848 = vadd.f32 0.0, %v1847
  %v1849 = vpop.f32.mrb[0].mxu0
  %v1850 = vpop.f32.mrb[0].mxu0
  %1851 = vdwg.mxu0
  %v1852 = vadd.f32 %v1802, %v1846
  %v1853 = vadd.f32 %v1803, %v1848
  %s1854 = smul.addr %s974, 8
  %s1855 = scalar_lea.vmem [#allocation3], %s1854
  %v1856 = vld [vmem:[%s1855] sm:$0xff]
  %v1857 = vld [vmem:[%s1855 + $0x8] sm:$0xff]
  %v1858 = vpack.c.bf16 %v1787, %v1787
  %1860 = vrot.lane.b32.xlu0 %v1858, 64
  %v1861 = vpop.permute.xlu0 %1860
  %v1863 = vsel %vm162, %v1861, 0
  %1865 = vmatprep.subr.bf16.mxu0 %v850
  %1866 = vmatpush1.bf16.msra.mxu0 %v849
  %1867 = vmatprep.subr.bf16.mxu0 %v852
  %1868 = vmatpush1.bf16.msra.mxu0 %v851
  %1869 = vmatprep.subr.bf16.mxu0 %v854
  %1870 = vmatpush1.bf16.msra.mxu0 %v853
  %1871 = vmatprep.subr.bf16.mxu0 %v856
  %1872 = vmatpush1.bf16.msra.mxu0 %v855
  %1873 = vmatprep.subr.bf16.mxu0 0
  %1874 = vmatpush1.bf16.msra.mxu0 0
  %1875 = vmatprep.subr.bf16.mxu0 0
  %1876 = vmatpush1.bf16.msra.mxu0 0
  %1877 = vmatprep.subr.bf16.mxu0 0
  %1878 = vmatpush1.bf16.msra.mxu0 0
  %1879 = vmatprep.subr.bf16.mxu0 0
  %1880 = vmatpush1.bf16.msra.mxu0 0
  %1881 = vmatprep.subr.bf16.mxu0 0
  %1882 = vmatpush1.bf16.msra.mxu0 0
  %1883 = vmatprep.subr.bf16.mxu0 0
  %1884 = vmatpush1.bf16.msra.mxu0 0
  %1885 = vmatprep.subr.bf16.mxu0 0
  %1886 = vmatpush1.bf16.msra.mxu0 0
  %1887 = vmatprep.subr.bf16.mxu0 0
  %1888 = vmatpush1.bf16.msra.mxu0 0
  %1889 = vmatprep.subr.bf16.mxu0 0
  %1890 = vmatpush1.bf16.msra.mxu0 0
  %1891 = vmatprep.subr.bf16.mxu0 0
  %1892 = vmatpush1.bf16.msra.mxu0 0
  %1893 = vmatprep.subr.bf16.mxu0 0
  %1894 = vmatpush1.bf16.msra.mxu0 0
  %1895 = vmatprep.subr.bf16.mxu0 0
  %1896 = vmatpush1.bf16.msra.mxu0 0
  %1897 = vmatprep.mubr.bf16.mxu0 0
  %1898 = vmatmul.mubr.bf16.gmra.mrb[0].mxu0 %v1863
  %v1899 = vpop.f32.mrb[0].mxu0
  %v1900 = vadd.f32 0.0, %v1899
  %v1901 = vpop.f32.mrb[0].mxu0
  %v1902 = vadd.f32 0.0, %v1901
  %v1903 = vpop.f32.mrb[0].mxu0
  %v1904 = vpop.f32.mrb[0].mxu0
  %1905 = vdwg.mxu0
  %v1906 = vadd.f32 %v1856, %v1900
  %v1907 = vadd.f32 %v1857, %v1902
  %v1908 = vxor.u32 %v1852, 2147483648
  %v1909 = vxor.u32 %v1853, 2147483648
  %v1910 = vmul.f32 %v1908, 1.442695
  %v1911 = vpow.pop %v1910
  %v1912 = vmul.f32 %v1909, 1.442695
  %v1913 = vpow.pop %v1912
  %v1914 = vadd.f32 %v1911, 1.0
  %v1915 = vadd.f32 %v1913, 1.0
  %v1916 = vrcp.pop %v1914
  %v1917 = vmul.f32 1.0, %v1916
  %v1918 = vrcp.pop %v1915
  %v1919 = vmul.f32 1.0, %v1918
  %v1920 = vtanh.pop %v1853
  %v1921 = vmul.f32 %v1917, %v1763
  %v1922 = vmul.f32 %v1917, %v1920
  %1924 = vrot.lane.b32.xlu0 %v1922, 64
  %v1925 = vpop.permute.xlu0 %1924
  %v1927 = vadd.f32 %v1921, %v1925
  %v1928 = vtanh.pop %v1927
  %v1929 = vmul.f32 %v1919, %v1928
  %v1930 = vxor.u32 %v1906, 2147483648
  %v1931 = vxor.u32 %v1907, 2147483648
  %v1932 = vmul.f32 %v1930, 1.442695
  %v1933 = vpow.pop %v1932
  %v1934 = vmul.f32 %v1931, 1.442695
  %v1935 = vpow.pop %v1934
  %v1936 = vadd.f32 %v1933, 1.0
  %v1937 = vadd.f32 %v1935, 1.0
  %v1938 = vrcp.pop %v1936
  %v1939 = vmul.f32 1.0, %v1938
  %v1940 = vrcp.pop %v1937
  %v1941 = vmul.f32 1.0, %v1940
  %v1942 = vtanh.pop %v1907
  %v1943 = vmul.f32 %v1939, %v1785
  %v1944 = vmul.f32 %v1939, %v1942
  %1946 = vrot.lane.b32.xlu0 %v1944, 64
  %v1947 = vpop.permute.xlu0 %1946
  %v1949 = vadd.f32 %v1943, %v1947
  %v1950 = vtanh.pop %v1949
  %v1951 = vmul.f32 %v1941, %v1950
  %1953 = vrot.lane.b32.xlu0 %v1929, 64
  %v1954 = vpop.permute.xlu0 %1953
  %s1956 = scalar_lea.vmem [#allocation8], 48
  %1957 = vst.msk [vmem:[%s1956] sm:$0xff] %vm162, %v1954
  %1959 = vrot.lane.b32.xlu0 %v1951, 64
  %v1960 = vpop.permute.xlu0 %1959
  %s1962 = scalar_lea.vmem [#allocation9], 8
  %1963 = vst.msk [vmem:[%s1962] sm:$0xff] %vm162, %v1960
  %s1964 = smul.addr %s819, 8
  %s1965 = scalar_lea.vmem [#allocation2], %s1964
  %v1966 = vld [vmem:[%s1965] sm:$0xff]
  %v1967 = vld [vmem:[%s1965 + $0x8] sm:$0xff]
  %v1968 = vpack.c.bf16 %v1929, %v1929
  %1970 = vrot.lane.b32.xlu0 %v1968, 64
  %v1971 = vpop.permute.xlu0 %1970
  %v1973 = vsel %vm162, %v1971, 0
  %1975 = vmatprep.subr.bf16.mxu0 %v758
  %1976 = vmatpush1.bf16.msra.mxu0 %v757
  %1977 = vmatprep.subr.bf16.mxu0 %v760
  %1978 = vmatpush1.bf16.msra.mxu0 %v759
  %1979 = vmatprep.subr.bf16.mxu0 %v762
  %1980 = vmatpush1.bf16.msra.mxu0 %v761
  %1981 = vmatprep.subr.bf16.mxu0 %v764
  %1982 = vmatpush1.bf16.msra.mxu0 %v763
  %1983 = vmatprep.subr.bf16.mxu0 0
  %1984 = vmatpush1.bf16.msra.mxu0 0
  %1985 = vmatprep.subr.bf16.mxu0 0
  %1986 = vmatpush1.bf16.msra.mxu0 0
  %1987 = vmatprep.subr.bf16.mxu0 0
  %1988 = vmatpush1.bf16.msra.mxu0 0
  %1989 = vmatprep.subr.bf16.mxu0 0
  %1990 = vmatpush1.bf16.msra.mxu0 0
  %1991 = vmatprep.subr.bf16.mxu0 0
  %1992 = vmatpush1.bf16.msra.mxu0 0
  %1993 = vmatprep.subr.bf16.mxu0 0
  %1994 = vmatpush1.bf16.msra.mxu0 0
  %1995 = vmatprep.subr.bf16.mxu0 0
  %1996 = vmatpush1.bf16.msra.mxu0 0
  %1997 = vmatprep.subr.bf16.mxu0 0
  %1998 = vmatpush1.bf16.msra.mxu0 0
  %1999 = vmatprep.subr.bf16.mxu0 0
  %2000 = vmatpush1.bf16.msra.mxu0 0
  %2001 = vmatprep.subr.bf16.mxu0 0
  %2002 = vmatpush1.bf16.msra.mxu0 0
  %2003 = vmatprep.subr.bf16.mxu0 0
  %2004 = vmatpush1.bf16.msra.mxu0 0
  %2005 = vmatprep.subr.bf16.mxu0 0
  %2006 = vmatpush1.bf16.msra.mxu0 0
  %2007 = vmatprep.mubr.bf16.mxu0 0
  %2008 = vmatmul.mubr.bf16.gmra.mrb[0].mxu0 %v1973
  %v2009 = vpop.f32.mrb[0].mxu0
  %v2010 = vadd.f32 0.0, %v2009
  %v2011 = vpop.f32.mrb[0].mxu0
  %v2012 = vadd.f32 0.0, %v2011
  %v2013 = vpop.f32.mrb[0].mxu0
  %v2014 = vpop.f32.mrb[0].mxu0
  %2015 = vdwg.mxu0
  %v2016 = vadd.f32 %v1966, %v2010
  %v2017 = vadd.f32 %v1967, %v2012
  %s2018 = smul.addr %s727, 8
  %s2019 = scalar_lea.vmem [#allocation3], %s2018
  %v2020 = vld [vmem:[%s2019] sm:$0xff]
  %v2021 = vld [vmem:[%s2019 + $0x8] sm:$0xff]
  %v2022 = vpack.c.bf16 %v1951, %v1951
  %2024 = vrot.lane.b32.xlu0 %v2022, 64
  %v2025 = vpop.permute.xlu0 %2024
  %v2027 = vsel %vm162, %v2025, 0
  %2029 = vmatprep.subr.bf16.mxu0 %v850
  %2030 = vmatpush1.bf16.msra.mxu0 %v849
  %2031 = vmatprep.subr.bf16.mxu0 %v852
  %2032 = vmatpush1.bf16.msra.mxu0 %v851
  %2033 = vmatprep.subr.bf16.mxu0 %v854
  %2034 = vmatpush1.bf16.msra.mxu0 %v853
  %2035 = vmatprep.subr.bf16.mxu0 %v856
  %2036 = vmatpush1.bf16.msra.mxu0 %v855
  %2037 = vmatprep.subr.bf16.mxu0 0
  %2038 = vmatpush1.bf16.msra.mxu0 0
  %2039 = vmatprep.subr.bf16.mxu0 0
  %2040 = vmatpush1.bf16.msra.mxu0 0
  %2041 = vmatprep.subr.bf16.mxu0 0
  %2042 = vmatpush1.bf16.msra.mxu0 0
  %2043 = vmatprep.subr.bf16.mxu0 0
  %2044 = vmatpush1.bf16.msra.mxu0 0
  %2045 = vmatprep.subr.bf16.mxu0 0
  %2046 = vmatpush1.bf16.msra.mxu0 0
  %2047 = vmatprep.subr.bf16.mxu0 0
  %2048 = vmatpush1.bf16.msra.mxu0 0
  %2049 = vmatprep.subr.bf16.mxu0 0
  %2050 = vmatpush1.bf16.msra.mxu0 0
  %2051 = vmatprep.subr.bf16.mxu0 0
  %2052 = vmatpush1.bf16.msra.mxu0 0
  %2053 = vmatprep.subr.bf16.mxu0 0
  %2054 = vmatpush1.bf16.msra.mxu0 0
  %2055 = vmatprep.subr.bf16.mxu0 0
  %2056 = vmatpush1.bf16.msra.mxu0 0
  %2057 = vmatprep.subr.bf16.mxu0 0
  %2058 = vmatpush1.bf16.msra.mxu0 0
  %2059 = vmatprep.subr.bf16.mxu0 0
  %2060 = vmatpush1.bf16.msra.mxu0 0
  %2061 = vmatprep.mubr.bf16.mxu0 0
  %2062 = vmatmul.mubr.bf16.gmra.mrb[0].mxu0 %v2027
  %v2063 = vpop.f32.mrb[0].mxu0
  %v2064 = vadd.f32 0.0, %v2063
  %v2065 = vpop.f32.mrb[0].mxu0
  %v2066 = vadd.f32 0.0, %v2065
  %v2067 = vpop.f32.mrb[0].mxu0
  %v2068 = vpop.f32.mrb[0].mxu0
  %2069 = vdwg.mxu0
  %v2070 = vadd.f32 %v2020, %v2064
  %v2071 = vadd.f32 %v2021, %v2066
  %v2072 = vxor.u32 %v2016, 2147483648
  %v2073 = vxor.u32 %v2017, 2147483648
  %v2074 = vmul.f32 %v2072, 1.442695
  %v2075 = vpow.pop %v2074
  %v2076 = vmul.f32 %v2073, 1.442695
  %v2077 = vpow.pop %v2076
  %v2078 = vadd.f32 %v2075, 1.0
  %v2079 = vadd.f32 %v2077, 1.0
  %v2080 = vrcp.pop %v2078
  %v2081 = vmul.f32 1.0, %v2080
  %v2082 = vrcp.pop %v2079
  %v2083 = vmul.f32 1.0, %v2082
  %v2084 = vtanh.pop %v2017
  %v2085 = vmul.f32 %v2081, %v1927
  %v2086 = vmul.f32 %v2081, %v2084
  %2088 = vrot.lane.b32.xlu0 %v2086, 64
  %v2089 = vpop.permute.xlu0 %2088
  %v2091 = vadd.f32 %v2085, %v2089
  %v2092 = vtanh.pop %v2091
  %v2093 = vmul.f32 %v2083, %v2092
  %v2094 = vxor.u32 %v2070, 2147483648
  %v2095 = vxor.u32 %v2071, 2147483648
  %v2096 = vmul.f32 %v2094, 1.442695
  %v2097 = vpow.pop %v2096
  %v2098 = vmul.f32 %v2095, 1.442695
  %v2099 = vpow.pop %v2098
  %v2100 = vadd.f32 %v2097, 1.0
  %v2101 = vadd.f32 %v2099, 1.0
  %v2102 = vrcp.pop %v2100
  %v2103 = vmul.f32 1.0, %v2102
  %v2104 = vrcp.pop %v2101
  %v2105 = vmul.f32 1.0, %v2104
  %v2106 = vtanh.pop %v2071
  %v2107 = vmul.f32 %v2103, %v1949
  %v2108 = vmul.f32 %v2103, %v2106
  %2110 = vrot.lane.b32.xlu0 %v2108, 64
  %v2111 = vpop.permute.xlu0 %2110
  %v2113 = vadd.f32 %v2107, %v2111
  %v2114 = vtanh.pop %v2113
  %v2115 = vmul.f32 %v2105, %v2114
  %2117 = vrot.lane.b32.xlu0 %v2093, 64
  %v2118 = vpop.permute.xlu0 %2117
  %s2120 = scalar_lea.vmem [#allocation8], 56
  %2121 = vst.msk [vmem:[%s2120] sm:$0xff] %vm162, %v2118
  %2123 = vrot.lane.b32.xlu0 %v2115, 64
  %v2124 = vpop.permute.xlu0 %2123
  %2126 = vst.msk [vmem:[#allocation9] sm:$0xff] %vm162, %v2124
  %2127 = vst.msk [vmem:[#allocation4] sm:$0xff] %vm162, %v2118
  %2129 = vrot.lane.b32.xlu0 %v2091, 64
  %v2130 = vpop.permute.xlu0 %2129
  %2132 = vst.msk [vmem:[#allocation5] sm:$0xff] %vm162, %v2130
  %2133 = vst.msk [vmem:[#allocation6] sm:$0xff] %vm162, %v2124
  %2135 = vrot.lane.b32.xlu0 %v2113, 64
  %v2136 = vpop.permute.xlu0 %2135
  %2138 = vst.msk [vmem:[#allocation7] sm:$0xff] %vm162, %v2136
  %v2139 = vld [vmem:[#allocation8] sm:$0xff]
  %v2140 = vld [vmem:[#allocation8 + $0x8] sm:$0xff]
  %v2141 = vld [vmem:[#allocation8 + $0x10] sm:$0xff]
  %v2142 = vld [vmem:[#allocation8 + $0x18] sm:$0xff]
  %v2143 = vld [vmem:[#allocation8 + $0x20] sm:$0xff]
  %v2144 = vld [vmem:[#allocation8 + $0x28] sm:$0xff]
  %v2145 = vld [vmem:[#allocation8 + $0x30] sm:$0xff]
  %v2146 = vld [vmem:[#allocation8 + $0x38] sm:$0xff]
  %v2147 = vpack.c.bf16 %v2140, %v2139
  %v2148 = vpack.c.bf16 %v2142, %v2141
  %v2149 = vpack.c.bf16 %v2144, %v2143
  %v2150 = vpack.c.bf16 %v2146, %v2145
  %v2151 = vld [vmem:[#allocation9] sm:$0xff]
  %v2152 = vld [vmem:[#allocation9 + $0x8] sm:$0xff]
  %v2153 = vld [vmem:[#allocation9 + $0x10] sm:$0xff]
  %v2154 = vld [vmem:[#allocation9 + $0x18] sm:$0xff]
  %v2155 = vld [vmem:[#allocation9 + $0x20] sm:$0xff]
  %v2156 = vld [vmem:[#allocation9 + $0x28] sm:$0xff]
  %v2157 = vld [vmem:[#allocation9 + $0x30] sm:$0xff]
  %v2158 = vld [vmem:[#allocation9 + $0x38] sm:$0xff]
  %v2159 = vpack.c.bf16 %v2152, %v2151
  %v2160 = vpack.c.bf16 %v2154, %v2153
  %v2161 = vpack.c.bf16 %v2156, %v2155
  %v2162 = vpack.c.bf16 %v2158, %v2157
  %v2163 = vld [vmem:[%s10] sm:$0xf]
  %v2164 = vld [vmem:[%s10 + $0x4] sm:$0xf]
  %v2165 = vld [vmem:[%s10 + $0x8] sm:$0xf]
  %v2166 = vld [vmem:[%s10 + $0xc] sm:$0xf]
  %v2167 = vld [vmem:[%s10 + $0x10] sm:$0xf]
  %v2168 = vld [vmem:[%s10 + $0x14] sm:$0xf]
  %v2169 = vld [vmem:[%s10 + $0x18] sm:$0xf]
  %v2170 = vld [vmem:[%s10 + $0x1c] sm:$0xf]
  %v2171 = vld [vmem:[%s11] sm:$0xf]
  %v2172 = vld [vmem:[%s11 + $0x4] sm:$0xf]
  %v2173 = vld [vmem:[%s11 + $0x8] sm:$0xf]
  %v2174 = vld [vmem:[%s11 + $0xc] sm:$0xf]
  %v2175 = vld [vmem:[%s11 + $0x10] sm:$0xf]
  %v2176 = vld [vmem:[%s11 + $0x14] sm:$0xf]
  %v2177 = vld [vmem:[%s11 + $0x18] sm:$0xf]
  %v2178 = vld [vmem:[%s11 + $0x1c] sm:$0xf]
  %v2187 = vunpack.c.l.b16 %v2171
  %v2188 = vunpack.c.l.b16 %v2172
  %v2189 = vunpack.c.l.b16 %v2173
  %v2190 = vunpack.c.l.b16 %v2174
  %v2191 = vunpack.c.l.b16 %v2175
  %v2192 = vunpack.c.l.b16 %v2176
  %v2193 = vunpack.c.l.b16 %v2177
  %v2194 = vunpack.c.l.b16 %v2178
  %v2195 = vpack.c.b16 %v2188, %v2187
  %v2196 = vpack.c.b16 %v2190, %v2189
  %v2197 = vpack.c.b16 %v2192, %v2191
  %v2198 = vpack.c.b16 %v2194, %v2193
  %v2204 = vsel %vm162, %v2159, 0
  %v2207 = vsel %vm162, %v2160, 0
  %v2210 = vsel %vm162, %v2161, 0
  %v2213 = vsel %vm162, %v2162, 0
  %2215 = vmatprep.subr.bf16.mxu0 0
  %2216 = vmatpush1.bf16.msra.mxu0 %v2195
  %2217 = vmatprep.subr.bf16.mxu0 0
  %2218 = vmatpush1.bf16.msra.mxu0 %v2196
  %2219 = vmatprep.subr.bf16.mxu0 0
  %2220 = vmatpush1.bf16.msra.mxu0 %v2197
  %2221 = vmatprep.subr.bf16.mxu0 0
  %2222 = vmatpush1.bf16.msra.mxu0 %v2198
  %2223 = vmatprep.subr.bf16.mxu0 0
  %2224 = vmatpush1.bf16.msra.mxu0 0
  %2225 = vmatprep.subr.bf16.mxu0 0
  %2226 = vmatpush1.bf16.msra.mxu0 0
  %2227 = vmatprep.subr.bf16.mxu0 0
  %2228 = vmatpush1.bf16.msra.mxu0 0
  %2229 = vmatprep.subr.bf16.mxu0 0
  %2230 = vmatpush1.bf16.msra.mxu0 0
  %2231 = vmatprep.subr.bf16.mxu0 0
  %2232 = vmatpush1.bf16.msra.mxu0 0
  %2233 = vmatprep.subr.bf16.mxu0 0
  %2234 = vmatpush1.bf16.msra.mxu0 0
  %2235 = vmatprep.subr.bf16.mxu0 0
  %2236 = vmatpush1.bf16.msra.mxu0 0
  %2237 = vmatprep.subr.bf16.mxu0 0
  %2238 = vmatpush1.bf16.msra.mxu0 0
  %2239 = vmatprep.subr.bf16.mxu0 0
  %2240 = vmatpush1.bf16.msra.mxu0 0
  %2241 = vmatprep.subr.bf16.mxu0 0
  %2242 = vmatpush1.bf16.msra.mxu0 0
  %2243 = vmatprep.subr.bf16.mxu0 0
  %2244 = vmatpush1.bf16.msra.mxu0 0
  %2245 = vmatprep.subr.bf16.mxu0 0
  %2246 = vmatpush1.bf16.msra.mxu0 0
  %2247 = vmatprep.mubr.bf16.mxu0 0
  %2248 = vmatmul.mubr.bf16.gmra.mrb[0].mxu0 %v2204
  %v2249 = vpop.f32.mrb[0].mxu0
  %v2250 = vadd.f32 0.0, %v2249
  %v2251 = vpop.f32.mrb[0].mxu0
  %v2252 = vpop.f32.mrb[0].mxu0
  %v2253 = vadd.f32 0.0, %v2252
  %v2254 = vpop.f32.mrb[0].mxu0
  %2255 = vmatprep.mubr.bf16.mxu0 0
  %2256 = vmatmul.mubr.bf16.gmra.mrb[0].mxu0 %v2207
  %v2257 = vpop.f32.mrb[0].mxu0
  %v2258 = vadd.f32 0.0, %v2257
  %v2259 = vpop.f32.mrb[0].mxu0
  %v2260 = vpop.f32.mrb[0].mxu0
  %v2261 = vadd.f32 0.0, %v2260
  %v2262 = vpop.f32.mrb[0].mxu0
  %2263 = vmatprep.mubr.bf16.mxu0 0
  %2264 = vmatmul.mubr.bf16.gmra.mrb[0].mxu0 %v2210
  %v2265 = vpop.f32.mrb[0].mxu0
  %v2266 = vadd.f32 0.0, %v2265
  %v2267 = vpop.f32.mrb[0].mxu0
  %v2268 = vpop.f32.mrb[0].mxu0
  %v2269 = vadd.f32 0.0, %v2268
  %v2270 = vpop.f32.mrb[0].mxu0
  %2271 = vmatprep.mubr.bf16.mxu0 0
  %2272 = vmatmul.mubr.bf16.gmra.mrb[0].mxu0 %v2213
  %v2273 = vpop.f32.mrb[0].mxu0
  %v2274 = vadd.f32 0.0, %v2273
  %v2275 = vpop.f32.mrb[0].mxu0
  %v2276 = vpop.f32.mrb[0].mxu0
  %v2277 = vadd.f32 0.0, %v2276
  %v2278 = vpop.f32.mrb[0].mxu0
  %2279 = vdwg.mxu0
  %v2288 = vunpack.c.l.b16 %v2163
  %v2289 = vunpack.c.l.b16 %v2164
  %v2290 = vunpack.c.l.b16 %v2165
  %v2291 = vunpack.c.l.b16 %v2166
  %v2292 = vunpack.c.l.b16 %v2167
  %v2293 = vunpack.c.l.b16 %v2168
  %v2294 = vunpack.c.l.b16 %v2169
  %v2295 = vunpack.c.l.b16 %v2170
  %v2296 = vpack.c.b16 %v2289, %v2288
  %v2297 = vpack.c.b16 %v2291, %v2290
  %v2298 = vpack.c.b16 %v2293, %v2292
  %v2299 = vpack.c.b16 %v2295, %v2294
  %v2305 = vsel %vm162, %v2147, 0
  %v2308 = vsel %vm162, %v2148, 0
  %v2311 = vsel %vm162, %v2149, 0
  %v2314 = vsel %vm162, %v2150, 0
  %2316 = vmatprep.subr.bf16.mxu0 0
  %2317 = vmatpush1.bf16.msra.mxu0 %v2296
  %2318 = vmatprep.subr.bf16.mxu0 0
  %2319 = vmatpush1.bf16.msra.mxu0 %v2297
  %2320 = vmatprep.subr.bf16.mxu0 0
  %2321 = vmatpush1.bf16.msra.mxu0 %v2298
  %2322 = vmatprep.subr.bf16.mxu0 0
  %2323 = vmatpush1.bf16.msra.mxu0 %v2299
  %2324 = vmatprep.subr.bf16.mxu0 0
  %2325 = vmatpush1.bf16.msra.mxu0 0
  %2326 = vmatprep.subr.bf16.mxu0 0
  %2327 = vmatpush1.bf16.msra.mxu0 0
  %2328 = vmatprep.subr.bf16.mxu0 0
  %2329 = vmatpush1.bf16.msra.mxu0 0
  %2330 = vmatprep.subr.bf16.mxu0 0
  %2331 = vmatpush1.bf16.msra.mxu0 0
  %2332 = vmatprep.subr.bf16.mxu0 0
  %2333 = vmatpush1.bf16.msra.mxu0 0
  %2334 = vmatprep.subr.bf16.mxu0 0
  %2335 = vmatpush1.bf16.msra.mxu0 0
  %2336 = vmatprep.subr.bf16.mxu0 0
  %2337 = vmatpush1.bf16.msra.mxu0 0
  %2338 = vmatprep.subr.bf16.mxu0 0
  %2339 = vmatpush1.bf16.msra.mxu0 0
  %2340 = vmatprep.subr.bf16.mxu0 0
  %2341 = vmatpush1.bf16.msra.mxu0 0
  %2342 = vmatprep.subr.bf16.mxu0 0
  %2343 = vmatpush1.bf16.msra.mxu0 0
  %2344 = vmatprep.subr.bf16.mxu0 0
  %2345 = vmatpush1.bf16.msra.mxu0 0
  %2346 = vmatprep.subr.bf16.mxu0 0
  %2347 = vmatpush1.bf16.msra.mxu0 0
  %2348 = vmatprep.mubr.bf16.mxu0 0
  %2349 = vmatmul.mubr.bf16.gmra.mrb[0].mxu0 %v2305
  %v2350 = vpop.f32.mrb[0].mxu0
  %v2351 = vadd.f32 %v2250, %v2350
  %v2352 = vpop.f32.mrb[0].mxu0
  %v2353 = vpop.f32.mrb[0].mxu0
  %v2354 = vadd.f32 %v2253, %v2353
  %v2355 = vpop.f32.mrb[0].mxu0
  %2356 = vmatprep.mubr.bf16.mxu0 0
  %2357 = vmatmul.mubr.bf16.gmra.mrb[0].mxu0 %v2308
  %v2358 = vpop.f32.mrb[0].mxu0
  %v2359 = vadd.f32 %v2258, %v2358
  %v2360 = vpop.f32.mrb[0].mxu0
  %v2361 = vpop.f32.mrb[0].mxu0
  %v2362 = vadd.f32 %v2261, %v2361
  %v2363 = vpop.f32.mrb[0].mxu0
  %2364 = vmatprep.mubr.bf16.mxu0 0
  %2365 = vmatmul.mubr.bf16.gmra.mrb[0].mxu0 %v2311
  %v2366 = vpop.f32.mrb[0].mxu0
  %v2367 = vadd.f32 %v2266, %v2366
  %v2368 = vpop.f32.mrb[0].mxu0
  %v2369 = vpop.f32.mrb[0].mxu0
  %v2370 = vadd.f32 %v2269, %v2369
  %v2371 = vpop.f32.mrb[0].mxu0
  %2372 = vmatprep.mubr.bf16.mxu0 0
  %2373 = vmatmul.mubr.bf16.gmra.mrb[0].mxu0 %v2314
  %v2374 = vpop.f32.mrb[0].mxu0
  %v2375 = vadd.f32 %v2274, %v2374
  %v2376 = vpop.f32.mrb[0].mxu0
  %v2377 = vpop.f32.mrb[0].mxu0
  %v2378 = vadd.f32 %v2277, %v2377
  %v2379 = vpop.f32.mrb[0].mxu0
  %2380 = vdwg.mxu0
  %v2381 = vld [vmem:[%s12] sm:$0x1]
  %v2383 = vlaneseq
  %v2384 = vshrl.u32 %v2383, 7
  %v2385 = vsub.s32 0, %v2384
  %v2386 = vrot.slane %v2381, %v2385
  %v2388 = vadd.f32 %v2351, %v2386
  %v2389 = vadd.f32 %v2354, %v2386
  %v2390 = vadd.f32 %v2359, %v2386
  %v2391 = vadd.f32 %v2362, %v2386
  %v2392 = vadd.f32 %v2367, %v2386
  %v2393 = vadd.f32 %v2370, %v2386
  %v2394 = vadd.f32 %v2375, %v2386
  %v2395 = vadd.f32 %v2378, %v2386
  %2396 = vst [vmem:[%s13] sm:$0xff] %v2388
  %2397 = vst [vmem:[%s13 + $0x8] sm:$0xff] %v2389
  %2398 = vst [vmem:[%s13 + $0x10] sm:$0xff] %v2390
  %2399 = vst [vmem:[%s13 + $0x18] sm:$0xff] %v2391
  %2400 = vst [vmem:[%s13 + $0x20] sm:$0xff] %v2392
  %2401 = vst [vmem:[%s13 + $0x28] sm:$0xff] %v2393
  %2402 = vst [vmem:[%s13 + $0x30] sm:$0xff] %v2394
  %2403 = vst [vmem:[%s13 + $0x38] sm:$0xff] %v2395
  // Predicated region
  $region58: #{video_regression_forward.3} parent=0 // pred_check
    _
  $region59: #{video_regression_forward.3} parent=0 // pred_check_branch
    %2405 = sbr.rel (0) target = $region61
  $region60: #{video_regression_forward.3} parent=0 // pred_region
    _
  $region61: #{video_regression_forward.3} parent=0 // pred_fallthru
    _
  // Predicated region
  $region62: #{video_regression_forward.3} parent=0 // pred_check
    _
  $region63: #{video_regression_forward.3} parent=0 // pred_check_branch
    %2407 = sbr.rel (0) target = $region65
  $region64: #{video_regression_forward.3} parent=0 // pred_region
    _
  $region65: #{video_regression_forward.3} parent=0 // pred_fallthru
    _

</llo_original>
